<compile_context>
chip_gen: v7x
topology: tpu7x:2x2x1
jax: 0.10.0
libtpu: 0.0.40
codegen_flags: <defaults>
</compile_context>

<pallas_src>
import math

import jax
import jax.numpy as jnp
from jax.experimental import pallas as pl
from jax.experimental.pallas import tpu as pltpu


# ---------------------------------------------------------------------------
# Kernel: fused Linear+ReLU -> Linear+ReLU -> Linear, bf16 MXU / f32 accumulate
# ---------------------------------------------------------------------------
def mlp_kernel(x_ref, w1_ref, b1_ref, w2_ref, b2_ref, w3_ref, b3_ref, o_ref):
    cdt = w1_ref.dtype                      # compute dtype (bfloat16)
    x = x_ref[...].astype(cdt)              # f32 HBM tile -> bf16 in-register
    h1 = jnp.dot(x, w1_ref[...], preferred_element_type=jnp.float32) + b1_ref[...]
    h1 = jnp.maximum(h1, 0.0).astype(cdt)
    h2 = jnp.dot(h1, w2_ref[...], preferred_element_type=jnp.float32) + b2_ref[...]
    h2 = jnp.maximum(h2, 0.0).astype(cdt)
    out = jnp.dot(h2, w3_ref[...], preferred_element_type=jnp.float32) + b3_ref[...]
    o_ref[...] = out.astype(o_ref.dtype)


# ---------------------------------------------------------------------------
# Host-side helpers
# ---------------------------------------------------------------------------
def _round_up(x, m):
    return (x + m - 1) // m * m


def _tpu_generation(default=6):
    """Coarse TPU generation from device_kind (5 = v5e/v5p/v4-class, 6 = v6e, 7 = v7x)."""
    try:
        kind = jax.devices()[0].device_kind.lower()
    except Exception:
        return default
    if "v7" in kind or "7x" in kind:
        return 7
    if "v6" in kind or "6e" in kind:
        return 6
    if "v5" in kind:
        return 5
    if "v4" in kind or "v3" in kind or "v2" in kind:
        return 5
    return default


def choose_pack_factor(input_size, output_size, *, generation):
    """Row-packing factor G so output stores are 128-lane dense (G*output_size % 128 == 0).

    Disabled on 128-wide-MXU parts (v5e and older) where the block-diagonal
    layout inflates the hidden-layer N dims and costs ~40% extra MXU passes.
    """
    if generation < 6:
        return 1
    g = 128 // math.gcd(128, output_size)
    # Keep the resident block-diagonal bf16 weights small (< ~4 MiB).
    packed_bytes = 2 * g * g * (input_size * 64 + 64 * 32 + 32 * output_size)
    return g if packed_bytes <= 4 * 1024 * 1024 else 1


def pack_params(params, pack_factor, compute_dtype=jnp.bfloat16):
    """One-time weight preparation (hoisted out of the per-forward path).

    Builds block-diagonal (kron) weights for lane-dense row packing and casts
    them to the MXU compute dtype.  Biases stay f32 (added post-matmul).
    """
    G = pack_factor
    if G == 1:
        w1, w2, w3 = params["w1"], params["w2"], params["w3"]
        b1, b2, b3 = params["b1"], params["b2"], params["b3"]
    else:
        eye = jnp.eye(G, dtype=jnp.float32)
        w1 = jnp.kron(eye, params["w1"])
        w2 = jnp.kron(eye, params["w2"])
        w3 = jnp.kron(eye, params["w3"])
        b1 = jnp.tile(params["b1"], (1, G))
        b2 = jnp.tile(params["b2"], (1, G))
        b3 = jnp.tile(params["b3"], (1, G))
    return {
        "w1": w1.astype(compute_dtype), "b1": b1.astype(jnp.float32),
        "w2": w2.astype(compute_dtype), "b2": b2.astype(jnp.float32),
        "w3": w3.astype(compute_dtype), "b3": b3.astype(jnp.float32),
        "pack_factor": G,
        "d_in": int(params["w1"].shape[0]),
        "d_out": int(params["w3"].shape[1]),
    }


def mlp_forward(x, packed, *, tb_rows=None):
    """x: (B, input_size) f32.  packed: output of pack_params()."""
    B, D_in = x.shape
    G = packed["pack_factor"]
    D_out = packed["d_out"]
    assert D_in == packed["d_in"]
    w1, b1 = packed["w1"], packed["b1"]
    w2, b2 = packed["w2"], packed["b2"]
    w3, b3 = packed["w3"], packed["b3"]
    GD_in, GH1 = w1.shape
    GH2 = w2.shape[1]
    GD_out = w3.shape[1]

    gen = _tpu_generation()
    if tb_rows is None:
        # v7x: 64 MiB VMEM / 2 TCs -> smaller tiles, more grid steps.
        # v5e/v6e: 128 MiB VMEM -> large tiles to amortize ~0.35us/step overhead.
        tb_rows = 8192 if gen >= 7 else 32768
    vmem_limit = (48 if gen >= 7 else 64) * 1024 * 1024

    # Batch tile (in original rows): multiple of 8*G.
    row_align = 8 * G
    if gen >= 7:
        # Keep >= ~4 grid steps so both TensorCores get work and DMA pipelines.
        target = _round_up(max(1, -(-B // 4)), row_align)
        tb = max(row_align, min(tb_rows, target))
    else:
        tb = max(row_align, min(tb_rows, _round_up(B, row_align)))

    # Pad only to the 8*G row alignment (not to tb); the last grid block may be
    # partial (Pallas masks out-of-bounds reads/writes; extra rows are dropped).
    Bp = _round_up(B, row_align)
    if Bp != B:
        x = jnp.pad(x, ((0, Bp - B), (0, 0)))

    # Free row-major regroup in HBM: (Bp, D_in) -> (Bp/G, G*D_in).
    xk = x.reshape(Bp // G, GD_in)
    R = tb // G                       # kernel tile rows (multiple of 8)
    rows = Bp // G
    grid = (pl.cdiv(rows, R),)

    def _const(shape):                # whole array, same block each step (fetched once)
        return pl.BlockSpec(shape, lambda i: (0, 0))

    out_packed = pl.pallas_call(
        mlp_kernel,
        out_shape=jax.ShapeDtypeStruct((rows, GD_out), jnp.float32),
        grid_spec=pltpu.PrefetchScalarGridSpec(
            num_scalar_prefetch=0,
            grid=grid,
            in_specs=[
                pl.BlockSpec((R, GD_in), lambda i: (i, 0)),   # x tile over batch
                _const((GD_in, GH1)),                         # w1 (block-diag, bf16)
                _const((1, GH1)),                             # b1 (f32)
                _const((GH1, GH2)),                           # w2
                _const((1, GH2)),                             # b2
                _const((GH2, GD_out)),                        # w3
                _const((1, GD_out)),                          # b3
            ],
            out_specs=pl.BlockSpec((R, GD_out), lambda i: (i, 0)),
        ),
        compiler_params=pltpu.CompilerParams(
            dimension_semantics=("parallel",),    # batch tiles are independent
            vmem_limit_bytes=vmem_limit,
        ),
    )(xk, w1, b1, w2, b2, w3, b3)

    out = out_packed.reshape(Bp, D_out)           # free row-major view back
    return out[:B] if Bp != B else out


# ---------------------------------------------------------------------------
# Init / references
# ---------------------------------------------------------------------------
def init_params(key, input_size, output_size):
    """Deterministic synthetic init (PyTorch-like uniform fan-in scaling)."""
    ks = jax.random.split(key, 6)

    def linear(kw, kb, fan_in, fan_out):
        bound = 1.0 / math.sqrt(fan_in)
        w = jax.random.uniform(kw, (fan_in, fan_out), jnp.float32, -bound, bound)
        b = jax.random.uniform(kb, (1, fan_out), jnp.float32, -bound, bound)
        return w, b

    w1, b1 = linear(ks[0], ks[1], input_size, 64)
    w2, b2 = linear(ks[2], ks[3], 64, 32)
    w3, b3 = linear(ks[4], ks[5], 32, output_size)
    return {"w1": w1, "b1": b1, "w2": w2, "b2": b2, "w3": w3, "b3": b3}


def mlp_reference(x, p, compute_dtype=jnp.float32):
    def lin(a, w, b):
        return jnp.dot(a.astype(compute_dtype), w.astype(compute_dtype),
                       preferred_element_type=jnp.float32) + b
    h1 = jnp.maximum(lin(x, p["w1"], p["b1"]), 0.0)
    h2 = jnp.maximum(lin(h1, p["w2"], p["b2"]), 0.0)
    return lin(h2, p["w3"], p["b3"])


if __name__ == "__main__":
    key = jax.random.PRNGKey(0)
    k_x, k_x2, k_p = jax.random.split(key, 3)

    batch, input_size, output_size = 8, 32, 8
    x = jax.random.normal(k_x, (batch, input_size), dtype=jnp.float32)
    params = init_params(k_p, input_size, output_size)

    gen = _tpu_generation()
    G = choose_pack_factor(input_size, output_size, generation=gen)
    packed = pack_params(params, G)               # one-time weight prep (hoisted)

    out = jax.block_until_ready(mlp_forward(x, packed))
    assert out.shape == (batch, output_size)

    # Tight check vs a JAX reference with the same bf16-input / f32-accumulate
    # numerics as the kernel, plus a looser semantic check vs the pure-f32
    # PyTorch-equivalent forward (bf16 MXU path is intentional per perf review).
    ref_bf16 = mlp_reference(x, params, compute_dtype=jnp.bfloat16)
    ref_f32 = mlp_reference(x, params)
    assert jnp.allclose(out, ref_bf16, atol=2e-3, rtol=2e-3), "mismatch vs bf16 reference"
    assert jnp.allclose(out, ref_f32, atol=1e-1, rtol=1e-1), "mismatch vs f32 reference"

    # Secondary check: non-aligned batch, padding, partial last block, multi-step grid.
    x2 = jax.random.normal(k_x2, (500, input_size), dtype=jnp.float32)
    out2 = jax.block_until_ready(mlp_forward(x2, packed, tb_rows=128))
    assert out2.shape == (500, output_size)
    ref2_bf16 = mlp_reference(x2, params, compute_dtype=jnp.bfloat16)
    ref2_f32 = mlp_reference(x2, params)
    assert jnp.allclose(out2, ref2_bf16, atol=2e-3, rtol=2e-3), "mismatch (tiled, bf16 ref)"
    assert jnp.allclose(out2, ref2_f32, atol=1e-1, rtol=1e-1), "mismatch (tiled, f32 ref)"

    print("KERNEL_OK")
</pallas_src>

<mosaic_0001>
module attributes {stable_mosaic.version = 11 : i64} {
  func.func @mlp_kernel(%arg0: i32, %arg1: memref<8x512xf32, #tpu.memory_space<vmem>>, %arg2: memref<512x1024xbf16, #tpu.memory_space<vmem>>, %arg3: memref<1x1024xf32, #tpu.memory_space<vmem>>, %arg4: memref<1024x512xbf16, #tpu.memory_space<vmem>>, %arg5: memref<1x512xf32, #tpu.memory_space<vmem>>, %arg6: memref<512x128xbf16, #tpu.memory_space<vmem>>, %arg7: memref<1x128xf32, #tpu.memory_space<vmem>>, %arg8: memref<8x128xf32, #tpu.memory_space<vmem>>) attributes {dimension_semantics = [#tpu.dimension_semantics<parallel>], iteration_bounds = array<i64: 1>, scalar_prefetch = 0 : i64, scratch_operands = 0 : i64, tpu.core_type = #tpu.core_type<tc>, window_params = [{transform_indices = @transform_0, window_bounds = array<i64: 8, 512>}, {pipeline_mode = #tpu.pipeline_mode<synchronous>, transform_indices = @transform_1, window_bounds = array<i64: 512, 1024>}, {pipeline_mode = #tpu.pipeline_mode<synchronous>, transform_indices = @transform_2, window_bounds = array<i64: 1, 1024>}, {pipeline_mode = #tpu.pipeline_mode<synchronous>, transform_indices = @transform_3, window_bounds = array<i64: 1024, 512>}, {pipeline_mode = #tpu.pipeline_mode<synchronous>, transform_indices = @transform_4, window_bounds = array<i64: 1, 512>}, {pipeline_mode = #tpu.pipeline_mode<synchronous>, transform_indices = @transform_5, window_bounds = array<i64: 512, 128>}, {pipeline_mode = #tpu.pipeline_mode<synchronous>, transform_indices = @transform_6, window_bounds = array<i64: 1, 128>}, {transform_indices = @transform_7, window_bounds = array<i64: 8, 128>}]} {
    %c0 = arith.constant 0 : index
    %c0_0 = arith.constant 0 : index
    %0 = vector.load %arg1[%c0, %c0_0] : memref<8x512xf32, #tpu.memory_space<vmem>>, vector<8x512xf32>
    %1 = arith.truncf %0 : vector<8x512xf32> to vector<8x512xbf16>
    %c0_1 = arith.constant 0 : index
    %c0_2 = arith.constant 0 : index
    %2 = vector.load %arg2[%c0_1, %c0_2] : memref<512x1024xbf16, #tpu.memory_space<vmem>>, vector<512x1024xbf16>
    %cst = arith.constant dense<0.000000e+00> : vector<8x1024xf32>
    %3 = tpu.matmul %1, %2, %cst {dimension_numbers = #tpu.dot_dimension_numbers<[1], [0], [0], [1], [0, 0, 1, 1], [], []>} : vector<8x512xbf16>, vector<512x1024xbf16>, vector<8x1024xf32> -> vector<8x1024xf32>
    %c0_3 = arith.constant 0 : index
    %c0_4 = arith.constant 0 : index
    %4 = vector.load %arg3[%c0_3, %c0_4] : memref<1x1024xf32, #tpu.memory_space<vmem>>, vector<1x1024xf32>
    %5 = vector.broadcast %4 : vector<1x1024xf32> to vector<8x1024xf32>
    %6 = arith.addf %3, %5 : vector<8x1024xf32>
    %cst_5 = arith.constant 0.000000e+00 : f32
    %7 = vector.broadcast %cst_5 : f32 to vector<8x1024xf32>
    %8 = arith.maximumf %6, %7 : vector<8x1024xf32>
    %9 = arith.truncf %8 : vector<8x1024xf32> to vector<8x1024xbf16>
    %c0_6 = arith.constant 0 : index
    %c0_7 = arith.constant 0 : index
    %10 = vector.load %arg4[%c0_6, %c0_7] : memref<1024x512xbf16, #tpu.memory_space<vmem>>, vector<1024x512xbf16>
    %cst_8 = arith.constant dense<0.000000e+00> : vector<8x512xf32>
    %11 = tpu.matmul %9, %10, %cst_8 {dimension_numbers = #tpu.dot_dimension_numbers<[1], [0], [0], [1], [0, 0, 1, 1], [], []>} : vector<8x1024xbf16>, vector<1024x512xbf16>, vector<8x512xf32> -> vector<8x512xf32>
    %c0_9 = arith.constant 0 : index
    %c0_10 = arith.constant 0 : index
    %12 = vector.load %arg5[%c0_9, %c0_10] : memref<1x512xf32, #tpu.memory_space<vmem>>, vector<1x512xf32>
    %13 = vector.broadcast %12 : vector<1x512xf32> to vector<8x512xf32>
    %14 = arith.addf %11, %13 : vector<8x512xf32>
    %cst_11 = arith.constant 0.000000e+00 : f32
    %15 = vector.broadcast %cst_11 : f32 to vector<8x512xf32>
    %16 = arith.maximumf %14, %15 : vector<8x512xf32>
    %17 = arith.truncf %16 : vector<8x512xf32> to vector<8x512xbf16>
    %c0_12 = arith.constant 0 : index
    %c0_13 = arith.constant 0 : index
    %18 = vector.load %arg6[%c0_12, %c0_13] : memref<512x128xbf16, #tpu.memory_space<vmem>>, vector<512x128xbf16>
    %cst_14 = arith.constant dense<0.000000e+00> : vector<8x128xf32>
    %19 = tpu.matmul %17, %18, %cst_14 {dimension_numbers = #tpu.dot_dimension_numbers<[1], [0], [0], [1], [0, 0, 1, 1], [], []>} : vector<8x512xbf16>, vector<512x128xbf16>, vector<8x128xf32> -> vector<8x128xf32>
    %c0_15 = arith.constant 0 : index
    %c0_16 = arith.constant 0 : index
    %20 = vector.load %arg7[%c0_15, %c0_16] : memref<1x128xf32, #tpu.memory_space<vmem>>, vector<1x128xf32>
    %21 = vector.broadcast %20 : vector<1x128xf32> to vector<8x128xf32>
    %22 = arith.addf %19, %21 : vector<8x128xf32>
    %c0_17 = arith.constant 0 : index
    %c0_18 = arith.constant 0 : index
    %23 = vector.load %arg8[%c0_17, %c0_18] : memref<8x128xf32, #tpu.memory_space<vmem>>, vector<8x128xf32>
    tpu.vector_store %arg8[%c0_17, %c0_18], %22 {strides = array<i32>} : memref<8x128xf32, #tpu.memory_space<vmem>>, vector<8x128xf32>,
    return
  }
  func.func @transform_0(%arg0: i32) -> (i32, i32) {
    %c0_i32 = arith.constant 0 : i32
    %c0_i32_0 = arith.constant 0 : i32
    return %arg0, %c0_i32 : i32, i32
  }
  func.func @transform_1(%arg0: i32) -> (i32, i32) {
    %c0_i32 = arith.constant 0 : i32
    %c0_i32_0 = arith.constant 0 : i32
    %c0_i32_1 = arith.constant 0 : i32
    return %c0_i32, %c0_i32_0 : i32, i32
  }
  func.func @transform_2(%arg0: i32) -> (i32, i32) {
    %c0_i32 = arith.constant 0 : i32
    %c0_i32_0 = arith.constant 0 : i32
    %c0_i32_1 = arith.constant 0 : i32
    return %c0_i32, %c0_i32_0 : i32, i32
  }
  func.func @transform_3(%arg0: i32) -> (i32, i32) {
    %c0_i32 = arith.constant 0 : i32
    %c0_i32_0 = arith.constant 0 : i32
    %c0_i32_1 = arith.constant 0 : i32
    return %c0_i32, %c0_i32_0 : i32, i32
  }
  func.func @transform_4(%arg0: i32) -> (i32, i32) {
    %c0_i32 = arith.constant 0 : i32
    %c0_i32_0 = arith.constant 0 : i32
    %c0_i32_1 = arith.constant 0 : i32
    return %c0_i32, %c0_i32_0 : i32, i32
  }
  func.func @transform_5(%arg0: i32) -> (i32, i32) {
    %c0_i32 = arith.constant 0 : i32
    %c0_i32_0 = arith.constant 0 : i32
    %c0_i32_1 = arith.constant 0 : i32
    return %c0_i32, %c0_i32_0 : i32, i32
  }
  func.func @transform_6(%arg0: i32) -> (i32, i32) {
    %c0_i32 = arith.constant 0 : i32
    %c0_i32_0 = arith.constant 0 : i32
    %c0_i32_1 = arith.constant 0 : i32
    return %c0_i32, %c0_i32_0 : i32, i32
  }
  func.func @transform_7(%arg0: i32) -> (i32, i32) {
    %c0_i32 = arith.constant 0 : i32
    %c0_i32_0 = arith.constant 0 : i32
    return %arg0, %c0_i32 : i32, i32
  }
}

</mosaic_0001>

<llo_original>
// kernel: tpu_custom_call.1
$region0: #{tpu_custom_call.1}
  #allocation0 [shape = 'u32[]', space=smem, size = 0x4, offset = 0x4, fixed_abs, tag = 'smem constant byte address 0x4 - core index']
  #allocation1 [shape = 'u32[144,128]{1,0:T(1,128)}', space=vmem, size = 0x12000, scoped, tag = 'internal scratch']
  %s0 = inlined_call_operand.hbm [shape: f32[8,512], index: 0, kind: input, shape index: {}]
  %s1 = inlined_call_operand.hbm [shape: bf16[512,1024], index: 1, kind: input, shape index: {}]
  %s2 = inlined_call_operand.hbm [shape: f32[1,1024], index: 2, kind: input, shape index: {}]
  %s3 = inlined_call_operand.hbm [shape: bf16[1024,512], index: 3, kind: input, shape index: {}]
  %s4 = inlined_call_operand.hbm [shape: f32[1,512], index: 4, kind: input, shape index: {}]
  %s5 = inlined_call_operand.hbm [shape: bf16[512,128], index: 5, kind: input, shape index: {}]
  %s6 = inlined_call_operand.hbm [shape: f32[1,128], index: 6, kind: input, shape index: {}]
  %s7 = inlined_call_operand.hbm [shape: f32[8,128], index: 7, kind: output, shape index: {}]
  %s8 = sld [smem:[#allocation0]]
  $region66: #{tpu_custom_call.1} parent=0
    _
  %s10 = ssub.s32 1, %s8
  %s11 = scalar_select 0, %s10, %s8
  $region1: #{tpu_custom_call.1} parent=0
    #allocation2 [shape = 'u8[16384]{0}', space=vmem, size = 0x4000, scoped, tag = 'input window, operand 0, single buffered']
    #allocation3 [shape = 's32[1]{0}', space=sflag, size = 0x4, scoped, tag = 'scoped memory for tpu_custom_call.1']
    #allocation4 [shape = 's32[1]{0}', space=sflag, size = 0x4, scoped, tag = 'scoped memory for tpu_custom_call.1']
    #allocation5 [shape = 'u8[1048576]{0}', space=vmem, size = 0x100000, scoped, tag = 'input window, operand 1, single buffered']
    #allocation6 [shape = 's32[1]{0}', space=sflag, size = 0x4, scoped, tag = 'scoped memory for tpu_custom_call.1']
    #allocation7 [shape = 'u8[4096]{0}', space=vmem, size = 0x1000, scoped, tag = 'input window, operand 2, single buffered']
    #allocation8 [shape = 'u8[1048576]{0}', space=vmem, size = 0x100000, scoped, tag = 'input window, operand 3, single buffered']
    #allocation9 [shape = 's32[1]{0}', space=sflag, size = 0x4, scoped, tag = 'scoped memory for tpu_custom_call.1']
    #allocation10 [shape = 'u8[2048]{0}', space=vmem, size = 0x800, scoped, tag = 'input window, operand 4, single buffered']
    #allocation11 [shape = 'u8[131072]{0}', space=vmem, size = 0x20000, scoped, tag = 'input window, operand 5, single buffered']
    #allocation12 [shape = 's32[1]{0}', space=sflag, size = 0x4, scoped, tag = 'scoped memory for tpu_custom_call.1']
    #allocation13 [shape = 'u8[512]{0}', space=vmem, size = 0x400, scoped, tag = 'input window, operand 6, single buffered']
    #allocation14 [shape = 'u8[4096]{0}', space=vmem, size = 0x1000, scoped, tag = 'output window, operand 0, single buffered']
    %12 = vsyncpa [#allocation3], 0
    %13 = vsyncpa [#allocation6], 0
    %14 = vsyncpa [#allocation9], 0
    %15 = vsyncpa [#allocation12], 0
    %16 = vsyncpa [#allocation4], 0
    // Predicated region
    $region2: #{tpu_custom_call.1} parent=1 // pred_check
      _
    $region3: #{tpu_custom_call.1} parent=1 // pred_check_branch
      %18 = sbr.rel (0) target = $region5
    $region4: #{tpu_custom_call.1} parent=1 // pred_region
      %s20 = ssub.s32 512, 512
      %21 = vsyncadd [#allocation3], %s20
      %s23 = sshll.u32 [#allocation2], 4
      %s24 = int_to_ptr.vmem [resolvable:$true] %s23
      %26 = dma.hbm_to_vmem [thread:$0]  %s0, 512, %s24, [#allocation3]
    $region5: #{tpu_custom_call.1} parent=1 // pred_fallthru
      _
    // Predicated region
    $region6: #{tpu_custom_call.1} parent=1 // pred_check
      _
    $region7: #{tpu_custom_call.1} parent=1 // pred_check_branch
      %28 = sbr.rel (0) target = $region9
    $region8: #{tpu_custom_call.1} parent=1 // pred_region
      %s30 = ssub.s32 32768, 32768
      %31 = vsyncadd [#allocation6], %s30
      %s32 = sshll.u32 [#allocation5], 4
      %s33 = int_to_ptr.vmem [resolvable:$true] %s32
      %38 = dma.hbm_to_vmem [thread:$0]  %s1, 32768, %s33, [#allocation6], 512, 512, 32
    $region9: #{tpu_custom_call.1} parent=1 // pred_fallthru
      _
    // Predicated region
    $region10: #{tpu_custom_call.1} parent=1 // pred_check
      _
    $region11: #{tpu_custom_call.1} parent=1 // pred_check_branch
      %40 = sbr.rel (0) target = $region13
    $region12: #{tpu_custom_call.1} parent=1 // pred_region
      %s42 = ssub.s32 128, 128
      %43 = vsyncadd [#allocation6], %s42
      %s45 = sshll.u32 [#allocation7], 4
      %s46 = int_to_ptr.vmem [resolvable:$true] %s45
      %48 = dma.hbm_to_vmem [thread:$0]  %s2, 128, %s46, [#allocation6]
    $region13: #{tpu_custom_call.1} parent=1 // pred_fallthru
      _
    // Predicated region
    $region14: #{tpu_custom_call.1} parent=1 // pred_check
      _
    $region15: #{tpu_custom_call.1} parent=1 // pred_check_branch
      %50 = sbr.rel (0) target = $region17
    $region16: #{tpu_custom_call.1} parent=1 // pred_region
      %s52 = ssub.s32 32768, 32768
      %53 = vsyncadd [#allocation9], %s52
      %s54 = sshll.u32 [#allocation8], 4
      %s55 = int_to_ptr.vmem [resolvable:$true] %s54
      %60 = dma.hbm_to_vmem [thread:$0]  %s3, 32768, %s55, [#allocation9], 256, 256, 16
    $region17: #{tpu_custom_call.1} parent=1 // pred_fallthru
      _
    // Predicated region
    $region18: #{tpu_custom_call.1} parent=1 // pred_check
      _
    $region19: #{tpu_custom_call.1} parent=1 // pred_check_branch
      %62 = sbr.rel (0) target = $region21
    $region20: #{tpu_custom_call.1} parent=1 // pred_region
      %s64 = ssub.s32 64, 64
      %65 = vsyncadd [#allocation9], %s64
      %s67 = sshll.u32 [#allocation10], 4
      %s68 = int_to_ptr.vmem [resolvable:$true] %s67
      %70 = dma.hbm_to_vmem [thread:$0]  %s4, 64, %s68, [#allocation9]
    $region21: #{tpu_custom_call.1} parent=1 // pred_fallthru
      _
    // Predicated region
    $region22: #{tpu_custom_call.1} parent=1 // pred_check
      _
    $region23: #{tpu_custom_call.1} parent=1 // pred_check_branch
      %72 = sbr.rel (0) target = $region25
    $region24: #{tpu_custom_call.1} parent=1 // pred_region
      %s74 = ssub.s32 4096, 4096
      %75 = vsyncadd [#allocation12], %s74
      %s76 = sshll.u32 [#allocation11], 4
      %s77 = int_to_ptr.vmem [resolvable:$true] %s76
      %82 = dma.hbm_to_vmem [thread:$0]  %s5, 4096, %s77, [#allocation12], 64, 64, 4
    $region25: #{tpu_custom_call.1} parent=1 // pred_fallthru
      _
    // Predicated region
    $region26: #{tpu_custom_call.1} parent=1 // pred_check
      _
    $region27: #{tpu_custom_call.1} parent=1 // pred_check_branch
      %84 = sbr.rel (0) target = $region29
    $region28: #{tpu_custom_call.1} parent=1 // pred_region
      %s86 = ssub.s32 16, 16
      %87 = vsyncadd [#allocation12], %s86
      %s89 = sshll.u32 [#allocation13], 4
      %s90 = int_to_ptr.vmem [resolvable:$true] %s89
      %92 = dma.hbm_to_vmem [thread:$0]  %s6, 16, %s90, [#allocation12]
    $region29: #{tpu_custom_call.1} parent=1 // pred_fallthru
      _
    // Predicated region
    $region30: #{tpu_custom_call.1} parent=1 // pred_check
      _
    $region31: #{tpu_custom_call.1} parent=1 // pred_check_branch
      %94 = sbr.rel (0) target = $region33
    $region32: #{tpu_custom_call.1} parent=1 // pred_region
      %95 = dma.done [#allocation3], 512
    $region33: #{tpu_custom_call.1} parent=1 // pred_fallthru
      _
    // Predicated region
    $region34: #{tpu_custom_call.1} parent=1 // pred_check
      _
    $region35: #{tpu_custom_call.1} parent=1 // pred_check_branch
      %97 = sbr.rel (0) target = $region37
    $region36: #{tpu_custom_call.1} parent=1 // pred_region
      %98 = dma.done [#allocation6], 32768
    $region37: #{tpu_custom_call.1} parent=1 // pred_fallthru
      _
    // Predicated region
    $region38: #{tpu_custom_call.1} parent=1 // pred_check
      _
    $region39: #{tpu_custom_call.1} parent=1 // pred_check_branch
      %100 = sbr.rel (0) target = $region41
    $region40: #{tpu_custom_call.1} parent=1 // pred_region
      %101 = dma.done [#allocation6], 128
    $region41: #{tpu_custom_call.1} parent=1 // pred_fallthru
      _
    // Predicated region
    $region42: #{tpu_custom_call.1} parent=1 // pred_check
      _
    $region43: #{tpu_custom_call.1} parent=1 // pred_check_branch
      %103 = sbr.rel (0) target = $region45
    $region44: #{tpu_custom_call.1} parent=1 // pred_region
      %104 = dma.done [#allocation9], 32768
    $region45: #{tpu_custom_call.1} parent=1 // pred_fallthru
      _
    // Predicated region
    $region46: #{tpu_custom_call.1} parent=1 // pred_check
      _
    $region47: #{tpu_custom_call.1} parent=1 // pred_check_branch
      %106 = sbr.rel (0) target = $region49
    $region48: #{tpu_custom_call.1} parent=1 // pred_region
      %107 = dma.done [#allocation9], 64
    $region49: #{tpu_custom_call.1} parent=1 // pred_fallthru
      _
    // Predicated region
    $region50: #{tpu_custom_call.1} parent=1 // pred_check
      _
    $region51: #{tpu_custom_call.1} parent=1 // pred_check_branch
      %109 = sbr.rel (0) target = $region53
    $region52: #{tpu_custom_call.1} parent=1 // pred_region
      %110 = dma.done [#allocation12], 4096
    $region53: #{tpu_custom_call.1} parent=1 // pred_fallthru
      _
    // Predicated region
    $region54: #{tpu_custom_call.1} parent=1 // pred_check
      _
    $region55: #{tpu_custom_call.1} parent=1 // pred_check_branch
      %112 = sbr.rel (0) target = $region57
    $region56: #{tpu_custom_call.1} parent=1 // pred_region
      %113 = dma.done [#allocation12], 16
    $region57: #{tpu_custom_call.1} parent=1 // pred_fallthru
      _
    %v115 = vld [vmem:[#allocation2] sm:$0xff]
    %v116 = vld [vmem:[#allocation2 + $0x8] sm:$0xff]
    %v117 = vld [vmem:[#allocation2 + $0x10] sm:$0xff]
    %v118 = vld [vmem:[#allocation2 + $0x18] sm:$0xff]
    %v119 = vpack.c.bf16 %v115, %v115
    %v120 = vpack.c.bf16 %v116, %v116
    %v121 = vpack.c.bf16 %v117, %v117
    %v122 = vpack.c.bf16 %v118, %v118
    %v123 = vld [vmem:[#allocation5] sm:$0xff]
    %v124 = vld [vmem:[#allocation5 + $0x8] sm:$0xff]
    %v125 = vld [vmem:[#allocation5 + $0x10] sm:$0xff]
    %v126 = vld [vmem:[#allocation5 + $0x18] sm:$0xff]
    %v127 = vld [vmem:[#allocation5 + $0x20] sm:$0xff]
    %v128 = vld [vmem:[#allocation5 + $0x28] sm:$0xff]
    %v129 = vld [vmem:[#allocation5 + $0x30] sm:$0xff]
    %v130 = vld [vmem:[#allocation5 + $0x38] sm:$0xff]
    %v131 = vld [vmem:[#allocation5 + $0x40] sm:$0xff]
    %v132 = vld [vmem:[#allocation5 + $0x48] sm:$0xff]
    %v133 = vld [vmem:[#allocation5 + $0x50] sm:$0xff]
    %v134 = vld [vmem:[#allocation5 + $0x58] sm:$0xff]
    %v135 = vld [vmem:[#allocation5 + $0x60] sm:$0xff]
    %v136 = vld [vmem:[#allocation5 + $0x68] sm:$0xff]
    %v137 = vld [vmem:[#allocation5 + $0x70] sm:$0xff]
    %v138 = vld [vmem:[#allocation5 + $0x78] sm:$0xff]
    %v139 = vld [vmem:[#allocation5 + $0x80] sm:$0xff]
    %v140 = vld [vmem:[#allocation5 + $0x88] sm:$0xff]
    %v141 = vld [vmem:[#allocation5 + $0x90] sm:$0xff]
    %v142 = vld [vmem:[#allocation5 + $0x98] sm:$0xff]
    %v143 = vld [vmem:[#allocation5 + $0xa0] sm:$0xff]
    %v144 = vld [vmem:[#allocation5 + $0xa8] sm:$0xff]
    %v145 = vld [vmem:[#allocation5 + $0xb0] sm:$0xff]
    %v146 = vld [vmem:[#allocation5 + $0xb8] sm:$0xff]
    %v147 = vld [vmem:[#allocation5 + $0xc0] sm:$0xff]
    %v148 = vld [vmem:[#allocation5 + $0xc8] sm:$0xff]
    %v149 = vld [vmem:[#allocation5 + $0xd0] sm:$0xff]
    %v150 = vld [vmem:[#allocation5 + $0xd8] sm:$0xff]
    %v151 = vld [vmem:[#allocation5 + $0xe0] sm:$0xff]
    %v152 = vld [vmem:[#allocation5 + $0xe8] sm:$0xff]
    %v153 = vld [vmem:[#allocation5 + $0xf0] sm:$0xff]
    %v154 = vld [vmem:[#allocation5 + $0xf8] sm:$0xff]
    %v155 = vld [vmem:[#allocation5 + $0x100] sm:$0xff]
    %v156 = vld [vmem:[#allocation5 + $0x108] sm:$0xff]
    %v157 = vld [vmem:[#allocation5 + $0x110] sm:$0xff]
    %v158 = vld [vmem:[#allocation5 + $0x118] sm:$0xff]
    %v159 = vld [vmem:[#allocation5 + $0x120] sm:$0xff]
    %v160 = vld [vmem:[#allocation5 + $0x128] sm:$0xff]
    %v161 = vld [vmem:[#allocation5 + $0x130] sm:$0xff]
    %v162 = vld [vmem:[#allocation5 + $0x138] sm:$0xff]
    %v163 = vld [vmem:[#allocation5 + $0x140] sm:$0xff]
    %v164 = vld [vmem:[#allocation5 + $0x148] sm:$0xff]
    %v165 = vld [vmem:[#allocation5 + $0x150] sm:$0xff]
    %v166 = vld [vmem:[#allocation5 + $0x158] sm:$0xff]
    %v167 = vld [vmem:[#allocation5 + $0x160] sm:$0xff]
    %v168 = vld [vmem:[#allocation5 + $0x168] sm:$0xff]
    %v169 = vld [vmem:[#allocation5 + $0x170] sm:$0xff]
    %v170 = vld [vmem:[#allocation5 + $0x178] sm:$0xff]
    %v171 = vld [vmem:[#allocation5 + $0x180] sm:$0xff]
    %v172 = vld [vmem:[#allocation5 + $0x188] sm:$0xff]
    %v173 = vld [vmem:[#allocation5 + $0x190] sm:$0xff]
    %v174 = vld [vmem:[#allocation5 + $0x198] sm:$0xff]
    %v175 = vld [vmem:[#allocation5 + $0x1a0] sm:$0xff]
    %v176 = vld [vmem:[#allocation5 + $0x1a8] sm:$0xff]
    %v177 = vld [vmem:[#allocation5 + $0x1b0] sm:$0xff]
    %v178 = vld [vmem:[#allocation5 + $0x1b8] sm:$0xff]
    %v179 = vld [vmem:[#allocation5 + $0x1c0] sm:$0xff]
    %v180 = vld [vmem:[#allocation5 + $0x1c8] sm:$0xff]
    %v181 = vld [vmem:[#allocation5 + $0x1d0] sm:$0xff]
    %v182 = vld [vmem:[#allocation5 + $0x1d8] sm:$0xff]
    %v183 = vld [vmem:[#allocation5 + $0x1e0] sm:$0xff]
    %v184 = vld [vmem:[#allocation5 + $0x1e8] sm:$0xff]
    %v185 = vld [vmem:[#allocation5 + $0x1f0] sm:$0xff]
    %v186 = vld [vmem:[#allocation5 + $0x1f8] sm:$0xff]
    %v187 = vld [vmem:[#allocation5 + $0x200] sm:$0xff]
    %v188 = vld [vmem:[#allocation5 + $0x208] sm:$0xff]
    %v189 = vld [vmem:[#allocation5 + $0x210] sm:$0xff]
    %v190 = vld [vmem:[#allocation5 + $0x218] sm:$0xff]
    %v191 = vld [vmem:[#allocation5 + $0x220] sm:$0xff]
    %v192 = vld [vmem:[#allocation5 + $0x228] sm:$0xff]
    %v193 = vld [vmem:[#allocation5 + $0x230] sm:$0xff]
    %v194 = vld [vmem:[#allocation5 + $0x238] sm:$0xff]
    %v195 = vld [vmem:[#allocation5 + $0x240] sm:$0xff]
    %v196 = vld [vmem:[#allocation5 + $0x248] sm:$0xff]
    %v197 = vld [vmem:[#allocation5 + $0x250] sm:$0xff]
    %v198 = vld [vmem:[#allocation5 + $0x258] sm:$0xff]
    %v199 = vld [vmem:[#allocation5 + $0x260] sm:$0xff]
    %v200 = vld [vmem:[#allocation5 + $0x268] sm:$0xff]
    %v201 = vld [vmem:[#allocation5 + $0x270] sm:$0xff]
    %v202 = vld [vmem:[#allocation5 + $0x278] sm:$0xff]
    %v203 = vld [vmem:[#allocation5 + $0x280] sm:$0xff]
    %v204 = vld [vmem:[#allocation5 + $0x288] sm:$0xff]
    %v205 = vld [vmem:[#allocation5 + $0x290] sm:$0xff]
    %v206 = vld [vmem:[#allocation5 + $0x298] sm:$0xff]
    %v207 = vld [vmem:[#allocation5 + $0x2a0] sm:$0xff]
    %v208 = vld [vmem:[#allocation5 + $0x2a8] sm:$0xff]
    %v209 = vld [vmem:[#allocation5 + $0x2b0] sm:$0xff]
    %v210 = vld [vmem:[#allocation5 + $0x2b8] sm:$0xff]
    %v211 = vld [vmem:[#allocation5 + $0x2c0] sm:$0xff]
    %v212 = vld [vmem:[#allocation5 + $0x2c8] sm:$0xff]
    %v213 = vld [vmem:[#allocation5 + $0x2d0] sm:$0xff]
    %v214 = vld [vmem:[#allocation5 + $0x2d8] sm:$0xff]
    %v215 = vld [vmem:[#allocation5 + $0x2e0] sm:$0xff]
    %v216 = vld [vmem:[#allocation5 + $0x2e8] sm:$0xff]
    %v217 = vld [vmem:[#allocation5 + $0x2f0] sm:$0xff]
    %v218 = vld [vmem:[#allocation5 + $0x2f8] sm:$0xff]
    %v219 = vld [vmem:[#allocation5 + $0x300] sm:$0xff]
    %v220 = vld [vmem:[#allocation5 + $0x308] sm:$0xff]
    %v221 = vld [vmem:[#allocation5 + $0x310] sm:$0xff]
    %v222 = vld [vmem:[#allocation5 + $0x318] sm:$0xff]
    %v223 = vld [vmem:[#allocation5 + $0x320] sm:$0xff]
    %v224 = vld [vmem:[#allocation5 + $0x328] sm:$0xff]
    %v225 = vld [vmem:[#allocation5 + $0x330] sm:$0xff]
    %v226 = vld [vmem:[#allocation5 + $0x338] sm:$0xff]
    %v227 = vld [vmem:[#allocation5 + $0x340] sm:$0xff]
    %v228 = vld [vmem:[#allocation5 + $0x348] sm:$0xff]
    %v229 = vld [vmem:[#allocation5 + $0x350] sm:$0xff]
    %v230 = vld [vmem:[#allocation5 + $0x358] sm:$0xff]
    %v231 = vld [vmem:[#allocation5 + $0x360] sm:$0xff]
    %v232 = vld [vmem:[#allocation5 + $0x368] sm:$0xff]
    %v233 = vld [vmem:[#allocation5 + $0x370] sm:$0xff]
    %v234 = vld [vmem:[#allocation5 + $0x378] sm:$0xff]
    %v235 = vld [vmem:[#allocation5 + $0x380] sm:$0xff]
    %v236 = vld [vmem:[#allocation5 + $0x388] sm:$0xff]
    %v237 = vld [vmem:[#allocation5 + $0x390] sm:$0xff]
    %v238 = vld [vmem:[#allocation5 + $0x398] sm:$0xff]
    %v239 = vld [vmem:[#allocation5 + $0x3a0] sm:$0xff]
    %v240 = vld [vmem:[#allocation5 + $0x3a8] sm:$0xff]
    %v241 = vld [vmem:[#allocation5 + $0x3b0] sm:$0xff]
    %v242 = vld [vmem:[#allocation5 + $0x3b8] sm:$0xff]
    %v243 = vld [vmem:[#allocation5 + $0x3c0] sm:$0xff]
    %v244 = vld [vmem:[#allocation5 + $0x3c8] sm:$0xff]
    %v245 = vld [vmem:[#allocation5 + $0x3d0] sm:$0xff]
    %v246 = vld [vmem:[#allocation5 + $0x3d8] sm:$0xff]
    %v247 = vld [vmem:[#allocation5 + $0x3e0] sm:$0xff]
    %v248 = vld [vmem:[#allocation5 + $0x3e8] sm:$0xff]
    %v249 = vld [vmem:[#allocation5 + $0x3f0] sm:$0xff]
    %v250 = vld [vmem:[#allocation5 + $0x3f8] sm:$0xff]
    %v251 = vld [vmem:[#allocation5 + $0x400] sm:$0xff]
    %v252 = vld [vmem:[#allocation5 + $0x408] sm:$0xff]
    %v253 = vld [vmem:[#allocation5 + $0x410] sm:$0xff]
    %v254 = vld [vmem:[#allocation5 + $0x418] sm:$0xff]
    %v255 = vld [vmem:[#allocation5 + $0x420] sm:$0xff]
    %v256 = vld [vmem:[#allocation5 + $0x428] sm:$0xff]
    %v257 = vld [vmem:[#allocation5 + $0x430] sm:$0xff]
    %v258 = vld [vmem:[#allocation5 + $0x438] sm:$0xff]
    %v259 = vld [vmem:[#allocation5 + $0x440] sm:$0xff]
    %v260 = vld [vmem:[#allocation5 + $0x448] sm:$0xff]
    %v261 = vld [vmem:[#allocation5 + $0x450] sm:$0xff]
    %v262 = vld [vmem:[#allocation5 + $0x458] sm:$0xff]
    %v263 = vld [vmem:[#allocation5 + $0x460] sm:$0xff]
    %v264 = vld [vmem:[#allocation5 + $0x468] sm:$0xff]
    %v265 = vld [vmem:[#allocation5 + $0x470] sm:$0xff]
    %v266 = vld [vmem:[#allocation5 + $0x478] sm:$0xff]
    %v267 = vld [vmem:[#allocation5 + $0x480] sm:$0xff]
    %v268 = vld [vmem:[#allocation5 + $0x488] sm:$0xff]
    %v269 = vld [vmem:[#allocation5 + $0x490] sm:$0xff]
    %v270 = vld [vmem:[#allocation5 + $0x498] sm:$0xff]
    %v271 = vld [vmem:[#allocation5 + $0x4a0] sm:$0xff]
    %v272 = vld [vmem:[#allocation5 + $0x4a8] sm:$0xff]
    %v273 = vld [vmem:[#allocation5 + $0x4b0] sm:$0xff]
    %v274 = vld [vmem:[#allocation5 + $0x4b8] sm:$0xff]
    %v275 = vld [vmem:[#allocation5 + $0x4c0] sm:$0xff]
    %v276 = vld [vmem:[#allocation5 + $0x4c8] sm:$0xff]
    %v277 = vld [vmem:[#allocation5 + $0x4d0] sm:$0xff]
    %v278 = vld [vmem:[#allocation5 + $0x4d8] sm:$0xff]
    %v279 = vld [vmem:[#allocation5 + $0x4e0] sm:$0xff]
    %v280 = vld [vmem:[#allocation5 + $0x4e8] sm:$0xff]
    %v281 = vld [vmem:[#allocation5 + $0x4f0] sm:$0xff]
    %v282 = vld [vmem:[#allocation5 + $0x4f8] sm:$0xff]
    %v283 = vld [vmem:[#allocation5 + $0x500] sm:$0xff]
    %v284 = vld [vmem:[#allocation5 + $0x508] sm:$0xff]
    %v285 = vld [vmem:[#allocation5 + $0x510] sm:$0xff]
    %v286 = vld [vmem:[#allocation5 + $0x518] sm:$0xff]
    %v287 = vld [vmem:[#allocation5 + $0x520] sm:$0xff]
    %v288 = vld [vmem:[#allocation5 + $0x528] sm:$0xff]
    %v289 = vld [vmem:[#allocation5 + $0x530] sm:$0xff]
    %v290 = vld [vmem:[#allocation5 + $0x538] sm:$0xff]
    %v291 = vld [vmem:[#allocation5 + $0x540] sm:$0xff]
    %v292 = vld [vmem:[#allocation5 + $0x548] sm:$0xff]
    %v293 = vld [vmem:[#allocation5 + $0x550] sm:$0xff]
    %v294 = vld [vmem:[#allocation5 + $0x558] sm:$0xff]
    %v295 = vld [vmem:[#allocation5 + $0x560] sm:$0xff]
    %v296 = vld [vmem:[#allocation5 + $0x568] sm:$0xff]
    %v297 = vld [vmem:[#allocation5 + $0x570] sm:$0xff]
    %v298 = vld [vmem:[#allocation5 + $0x578] sm:$0xff]
    %v299 = vld [vmem:[#allocation5 + $0x580] sm:$0xff]
    %v300 = vld [vmem:[#allocation5 + $0x588] sm:$0xff]
    %v301 = vld [vmem:[#allocation5 + $0x590] sm:$0xff]
    %v302 = vld [vmem:[#allocation5 + $0x598] sm:$0xff]
    %v303 = vld [vmem:[#allocation5 + $0x5a0] sm:$0xff]
    %v304 = vld [vmem:[#allocation5 + $0x5a8] sm:$0xff]
    %v305 = vld [vmem:[#allocation5 + $0x5b0] sm:$0xff]
    %v306 = vld [vmem:[#allocation5 + $0x5b8] sm:$0xff]
    %v307 = vld [vmem:[#allocation5 + $0x5c0] sm:$0xff]
    %v308 = vld [vmem:[#allocation5 + $0x5c8] sm:$0xff]
    %v309 = vld [vmem:[#allocation5 + $0x5d0] sm:$0xff]
    %v310 = vld [vmem:[#allocation5 + $0x5d8] sm:$0xff]
    %v311 = vld [vmem:[#allocation5 + $0x5e0] sm:$0xff]
    %v312 = vld [vmem:[#allocation5 + $0x5e8] sm:$0xff]
    %v313 = vld [vmem:[#allocation5 + $0x5f0] sm:$0xff]
    %v314 = vld [vmem:[#allocation5 + $0x5f8] sm:$0xff]
    %v315 = vld [vmem:[#allocation5 + $0x600] sm:$0xff]
    %v316 = vld [vmem:[#allocation5 + $0x608] sm:$0xff]
    %v317 = vld [vmem:[#allocation5 + $0x610] sm:$0xff]
    %v318 = vld [vmem:[#allocation5 + $0x618] sm:$0xff]
    %v319 = vld [vmem:[#allocation5 + $0x620] sm:$0xff]
    %v320 = vld [vmem:[#allocation5 + $0x628] sm:$0xff]
    %v321 = vld [vmem:[#allocation5 + $0x630] sm:$0xff]
    %v322 = vld [vmem:[#allocation5 + $0x638] sm:$0xff]
    %v323 = vld [vmem:[#allocation5 + $0x640] sm:$0xff]
    %v324 = vld [vmem:[#allocation5 + $0x648] sm:$0xff]
    %v325 = vld [vmem:[#allocation5 + $0x650] sm:$0xff]
    %v326 = vld [vmem:[#allocation5 + $0x658] sm:$0xff]
    %v327 = vld [vmem:[#allocation5 + $0x660] sm:$0xff]
    %v328 = vld [vmem:[#allocation5 + $0x668] sm:$0xff]
    %v329 = vld [vmem:[#allocation5 + $0x670] sm:$0xff]
    %v330 = vld [vmem:[#allocation5 + $0x678] sm:$0xff]
    %v331 = vld [vmem:[#allocation5 + $0x680] sm:$0xff]
    %v332 = vld [vmem:[#allocation5 + $0x688] sm:$0xff]
    %v333 = vld [vmem:[#allocation5 + $0x690] sm:$0xff]
    %v334 = vld [vmem:[#allocation5 + $0x698] sm:$0xff]
    %v335 = vld [vmem:[#allocation5 + $0x6a0] sm:$0xff]
    %v336 = vld [vmem:[#allocation5 + $0x6a8] sm:$0xff]
    %v337 = vld [vmem:[#allocation5 + $0x6b0] sm:$0xff]
    %v338 = vld [vmem:[#allocation5 + $0x6b8] sm:$0xff]
    %v339 = vld [vmem:[#allocation5 + $0x6c0] sm:$0xff]
    %v340 = vld [vmem:[#allocation5 + $0x6c8] sm:$0xff]
    %v341 = vld [vmem:[#allocation5 + $0x6d0] sm:$0xff]
    %v342 = vld [vmem:[#allocation5 + $0x6d8] sm:$0xff]
    %v343 = vld [vmem:[#allocation5 + $0x6e0] sm:$0xff]
    %v344 = vld [vmem:[#allocation5 + $0x6e8] sm:$0xff]
    %v345 = vld [vmem:[#allocation5 + $0x6f0] sm:$0xff]
    %v346 = vld [vmem:[#allocation5 + $0x6f8] sm:$0xff]
    %v347 = vld [vmem:[#allocation5 + $0x700] sm:$0xff]
    %v348 = vld [vmem:[#allocation5 + $0x708] sm:$0xff]
    %v349 = vld [vmem:[#allocation5 + $0x710] sm:$0xff]
    %v350 = vld [vmem:[#allocation5 + $0x718] sm:$0xff]
    %v351 = vld [vmem:[#allocation5 + $0x720] sm:$0xff]
    %v352 = vld [vmem:[#allocation5 + $0x728] sm:$0xff]
    %v353 = vld [vmem:[#allocation5 + $0x730] sm:$0xff]
    %v354 = vld [vmem:[#allocation5 + $0x738] sm:$0xff]
    %v355 = vld [vmem:[#allocation5 + $0x740] sm:$0xff]
    %v356 = vld [vmem:[#allocation5 + $0x748] sm:$0xff]
    %v357 = vld [vmem:[#allocation5 + $0x750] sm:$0xff]
    %v358 = vld [vmem:[#allocation5 + $0x758] sm:$0xff]
    %v359 = vld [vmem:[#allocation5 + $0x760] sm:$0xff]
    %v360 = vld [vmem:[#allocation5 + $0x768] sm:$0xff]
    %v361 = vld [vmem:[#allocation5 + $0x770] sm:$0xff]
    %v362 = vld [vmem:[#allocation5 + $0x778] sm:$0xff]
    %v363 = vld [vmem:[#allocation5 + $0x780] sm:$0xff]
    %v364 = vld [vmem:[#allocation5 + $0x788] sm:$0xff]
    %v365 = vld [vmem:[#allocation5 + $0x790] sm:$0xff]
    %v366 = vld [vmem:[#allocation5 + $0x798] sm:$0xff]
    %v367 = vld [vmem:[#allocation5 + $0x7a0] sm:$0xff]
    %v368 = vld [vmem:[#allocation5 + $0x7a8] sm:$0xff]
    %v369 = vld [vmem:[#allocation5 + $0x7b0] sm:$0xff]
    %v370 = vld [vmem:[#allocation5 + $0x7b8] sm:$0xff]
    %v371 = vld [vmem:[#allocation5 + $0x7c0] sm:$0xff]
    %v372 = vld [vmem:[#allocation5 + $0x7c8] sm:$0xff]
    %v373 = vld [vmem:[#allocation5 + $0x7d0] sm:$0xff]
    %v374 = vld [vmem:[#allocation5 + $0x7d8] sm:$0xff]
    %v375 = vld [vmem:[#allocation5 + $0x7e0] sm:$0xff]
    %v376 = vld [vmem:[#allocation5 + $0x7e8] sm:$0xff]
    %v377 = vld [vmem:[#allocation5 + $0x7f0] sm:$0xff]
    %v378 = vld [vmem:[#allocation5 + $0x7f8] sm:$0xff]
    %v379 = vld [vmem:[#allocation7] sm:$0xff]
    %v381 = vlaneseq
    %v382 = vshrl.u32 %v381, 7
    %v383 = vsub.s32 0, %v382
    %v384 = vrot.slane %v379, %v383
    %v385 = vlaneseq
    %v386 = vshrl.u32 %v385, 7
    %v387 = vsub.s32 1, %v386
    %v388 = vrot.slane %v379, %v387
    %v389 = vlaneseq
    %v390 = vshrl.u32 %v389, 7
    %v391 = vsub.s32 2, %v390
    %v392 = vrot.slane %v379, %v391
    %v393 = vlaneseq
    %v394 = vshrl.u32 %v393, 7
    %v395 = vsub.s32 3, %v394
    %v396 = vrot.slane %v379, %v395
    %v397 = vlaneseq
    %v398 = vshrl.u32 %v397, 7
    %v399 = vsub.s32 4, %v398
    %v400 = vrot.slane %v379, %v399
    %v401 = vlaneseq
    %v402 = vshrl.u32 %v401, 7
    %v403 = vsub.s32 5, %v402
    %v404 = vrot.slane %v379, %v403
    %v405 = vlaneseq
    %v406 = vshrl.u32 %v405, 7
    %v407 = vsub.s32 6, %v406
    %v408 = vrot.slane %v379, %v407
    %v409 = vlaneseq
    %v410 = vshrl.u32 %v409, 7
    %v411 = vsub.s32 7, %v410
    %v412 = vrot.slane %v379, %v411
    %v677 = vunpack.c.l.b16 %v123
    %v678 = vunpack.c.h.b16 %v123
    %v679 = vunpack.c.l.b16 %v124
    %v680 = vunpack.c.h.b16 %v124
    %v681 = vunpack.c.l.b16 %v125
    %v682 = vunpack.c.h.b16 %v125
    %v683 = vunpack.c.l.b16 %v126
    %v684 = vunpack.c.h.b16 %v126
    %v685 = vunpack.c.l.b16 %v127
    %v686 = vunpack.c.h.b16 %v127
    %v687 = vunpack.c.l.b16 %v128
    %v688 = vunpack.c.h.b16 %v128
    %v689 = vunpack.c.l.b16 %v129
    %v690 = vunpack.c.h.b16 %v129
    %v691 = vunpack.c.l.b16 %v130
    %v692 = vunpack.c.h.b16 %v130
    %v693 = vunpack.c.l.b16 %v131
    %v694 = vunpack.c.h.b16 %v131
    %v695 = vunpack.c.l.b16 %v132
    %v696 = vunpack.c.h.b16 %v132
    %v697 = vunpack.c.l.b16 %v133
    %v698 = vunpack.c.h.b16 %v133
    %v699 = vunpack.c.l.b16 %v134
    %v700 = vunpack.c.h.b16 %v134
    %v701 = vunpack.c.l.b16 %v135
    %v702 = vunpack.c.h.b16 %v135
    %v703 = vunpack.c.l.b16 %v136
    %v704 = vunpack.c.h.b16 %v136
    %v705 = vunpack.c.l.b16 %v137
    %v706 = vunpack.c.h.b16 %v137
    %v707 = vunpack.c.l.b16 %v138
    %v708 = vunpack.c.h.b16 %v138
    %v709 = vunpack.c.l.b16 %v139
    %v710 = vunpack.c.h.b16 %v139
    %v711 = vunpack.c.l.b16 %v140
    %v712 = vunpack.c.h.b16 %v140
    %v713 = vunpack.c.l.b16 %v141
    %v714 = vunpack.c.h.b16 %v141
    %v715 = vunpack.c.l.b16 %v142
    %v716 = vunpack.c.h.b16 %v142
    %v717 = vunpack.c.l.b16 %v143
    %v718 = vunpack.c.h.b16 %v143
    %v719 = vunpack.c.l.b16 %v144
    %v720 = vunpack.c.h.b16 %v144
    %v721 = vunpack.c.l.b16 %v145
    %v722 = vunpack.c.h.b16 %v145
    %v723 = vunpack.c.l.b16 %v146
    %v724 = vunpack.c.h.b16 %v146
    %v725 = vunpack.c.l.b16 %v147
    %v726 = vunpack.c.h.b16 %v147
    %v727 = vunpack.c.l.b16 %v148
    %v728 = vunpack.c.h.b16 %v148
    %v729 = vunpack.c.l.b16 %v149
    %v730 = vunpack.c.h.b16 %v149
    %v731 = vunpack.c.l.b16 %v150
    %v732 = vunpack.c.h.b16 %v150
    %v733 = vunpack.c.l.b16 %v151
    %v734 = vunpack.c.h.b16 %v151
    %v735 = vunpack.c.l.b16 %v152
    %v736 = vunpack.c.h.b16 %v152
    %v737 = vunpack.c.l.b16 %v153
    %v738 = vunpack.c.h.b16 %v153
    %v739 = vunpack.c.l.b16 %v154
    %v740 = vunpack.c.h.b16 %v154
    %v741 = vunpack.c.l.b16 %v155
    %v742 = vunpack.c.h.b16 %v155
    %v743 = vunpack.c.l.b16 %v156
    %v744 = vunpack.c.h.b16 %v156
    %v745 = vunpack.c.l.b16 %v157
    %v746 = vunpack.c.h.b16 %v157
    %v747 = vunpack.c.l.b16 %v158
    %v748 = vunpack.c.h.b16 %v158
    %v749 = vunpack.c.l.b16 %v159
    %v750 = vunpack.c.h.b16 %v159
    %v751 = vunpack.c.l.b16 %v160
    %v752 = vunpack.c.h.b16 %v160
    %v753 = vunpack.c.l.b16 %v161
    %v754 = vunpack.c.h.b16 %v161
    %v755 = vunpack.c.l.b16 %v162
    %v756 = vunpack.c.h.b16 %v162
    %v757 = vunpack.c.l.b16 %v163
    %v758 = vunpack.c.h.b16 %v163
    %v759 = vunpack.c.l.b16 %v164
    %v760 = vunpack.c.h.b16 %v164
    %v761 = vunpack.c.l.b16 %v165
    %v762 = vunpack.c.h.b16 %v165
    %v763 = vunpack.c.l.b16 %v166
    %v764 = vunpack.c.h.b16 %v166
    %v765 = vunpack.c.l.b16 %v167
    %v766 = vunpack.c.h.b16 %v167
    %v767 = vunpack.c.l.b16 %v168
    %v768 = vunpack.c.h.b16 %v168
    %v769 = vunpack.c.l.b16 %v169
    %v770 = vunpack.c.h.b16 %v169
    %v771 = vunpack.c.l.b16 %v170
    %v772 = vunpack.c.h.b16 %v170
    %v773 = vunpack.c.l.b16 %v171
    %v774 = vunpack.c.h.b16 %v171
    %v775 = vunpack.c.l.b16 %v172
    %v776 = vunpack.c.h.b16 %v172
    %v777 = vunpack.c.l.b16 %v173
    %v778 = vunpack.c.h.b16 %v173
    %v779 = vunpack.c.l.b16 %v174
    %v780 = vunpack.c.h.b16 %v174
    %v781 = vunpack.c.l.b16 %v175
    %v782 = vunpack.c.h.b16 %v175
    %v783 = vunpack.c.l.b16 %v176
    %v784 = vunpack.c.h.b16 %v176
    %v785 = vunpack.c.l.b16 %v177
    %v786 = vunpack.c.h.b16 %v177
    %v787 = vunpack.c.l.b16 %v178
    %v788 = vunpack.c.h.b16 %v178
    %v789 = vunpack.c.l.b16 %v179
    %v790 = vunpack.c.h.b16 %v179
    %v791 = vunpack.c.l.b16 %v180
    %v792 = vunpack.c.h.b16 %v180
    %v793 = vunpack.c.l.b16 %v181
    %v794 = vunpack.c.h.b16 %v181
    %v795 = vunpack.c.l.b16 %v182
    %v796 = vunpack.c.h.b16 %v182
    %v797 = vunpack.c.l.b16 %v183
    %v798 = vunpack.c.h.b16 %v183
    %v799 = vunpack.c.l.b16 %v184
    %v800 = vunpack.c.h.b16 %v184
    %v801 = vunpack.c.l.b16 %v185
    %v802 = vunpack.c.h.b16 %v185
    %v803 = vunpack.c.l.b16 %v186
    %v804 = vunpack.c.h.b16 %v186
    %v805 = vunpack.c.l.b16 %v187
    %v806 = vunpack.c.h.b16 %v187
    %v807 = vunpack.c.l.b16 %v188
    %v808 = vunpack.c.h.b16 %v188
    %v809 = vunpack.c.l.b16 %v189
    %v810 = vunpack.c.h.b16 %v189
    %v811 = vunpack.c.l.b16 %v190
    %v812 = vunpack.c.h.b16 %v190
    %v813 = vunpack.c.l.b16 %v191
    %v814 = vunpack.c.h.b16 %v191
    %v815 = vunpack.c.l.b16 %v192
    %v816 = vunpack.c.h.b16 %v192
    %v817 = vunpack.c.l.b16 %v193
    %v818 = vunpack.c.h.b16 %v193
    %v819 = vunpack.c.l.b16 %v194
    %v820 = vunpack.c.h.b16 %v194
    %v821 = vunpack.c.l.b16 %v195
    %v822 = vunpack.c.h.b16 %v195
    %v823 = vunpack.c.l.b16 %v196
    %v824 = vunpack.c.h.b16 %v196
    %v825 = vunpack.c.l.b16 %v197
    %v826 = vunpack.c.h.b16 %v197
    %v827 = vunpack.c.l.b16 %v198
    %v828 = vunpack.c.h.b16 %v198
    %v829 = vunpack.c.l.b16 %v199
    %v830 = vunpack.c.h.b16 %v199
    %v831 = vunpack.c.l.b16 %v200
    %v832 = vunpack.c.h.b16 %v200
    %v833 = vunpack.c.l.b16 %v201
    %v834 = vunpack.c.h.b16 %v201
    %v835 = vunpack.c.l.b16 %v202
    %v836 = vunpack.c.h.b16 %v202
    %v837 = vunpack.c.l.b16 %v203
    %v838 = vunpack.c.h.b16 %v203
    %v839 = vunpack.c.l.b16 %v204
    %v840 = vunpack.c.h.b16 %v204
    %v841 = vunpack.c.l.b16 %v205
    %v842 = vunpack.c.h.b16 %v205
    %v843 = vunpack.c.l.b16 %v206
    %v844 = vunpack.c.h.b16 %v206
    %v845 = vunpack.c.l.b16 %v207
    %v846 = vunpack.c.h.b16 %v207
    %v847 = vunpack.c.l.b16 %v208
    %v848 = vunpack.c.h.b16 %v208
    %v849 = vunpack.c.l.b16 %v209
    %v850 = vunpack.c.h.b16 %v209
    %v851 = vunpack.c.l.b16 %v210
    %v852 = vunpack.c.h.b16 %v210
    %v853 = vunpack.c.l.b16 %v211
    %v854 = vunpack.c.h.b16 %v211
    %v855 = vunpack.c.l.b16 %v212
    %v856 = vunpack.c.h.b16 %v212
    %v857 = vunpack.c.l.b16 %v213
    %v858 = vunpack.c.h.b16 %v213
    %v859 = vunpack.c.l.b16 %v214
    %v860 = vunpack.c.h.b16 %v214
    %v861 = vunpack.c.l.b16 %v215
    %v862 = vunpack.c.h.b16 %v215
    %v863 = vunpack.c.l.b16 %v216
    %v864 = vunpack.c.h.b16 %v216
    %v865 = vunpack.c.l.b16 %v217
    %v866 = vunpack.c.h.b16 %v217
    %v867 = vunpack.c.l.b16 %v218
    %v868 = vunpack.c.h.b16 %v218
    %v869 = vunpack.c.l.b16 %v219
    %v870 = vunpack.c.h.b16 %v219
    %v871 = vunpack.c.l.b16 %v220
    %v872 = vunpack.c.h.b16 %v220
    %v873 = vunpack.c.l.b16 %v221
    %v874 = vunpack.c.h.b16 %v221
    %v875 = vunpack.c.l.b16 %v222
    %v876 = vunpack.c.h.b16 %v222
    %v877 = vunpack.c.l.b16 %v223
    %v878 = vunpack.c.h.b16 %v223
    %v879 = vunpack.c.l.b16 %v224
    %v880 = vunpack.c.h.b16 %v224
    %v881 = vunpack.c.l.b16 %v225
    %v882 = vunpack.c.h.b16 %v225
    %v883 = vunpack.c.l.b16 %v226
    %v884 = vunpack.c.h.b16 %v226
    %v885 = vunpack.c.l.b16 %v227
    %v886 = vunpack.c.h.b16 %v227
    %v887 = vunpack.c.l.b16 %v228
    %v888 = vunpack.c.h.b16 %v228
    %v889 = vunpack.c.l.b16 %v229
    %v890 = vunpack.c.h.b16 %v229
    %v891 = vunpack.c.l.b16 %v230
    %v892 = vunpack.c.h.b16 %v230
    %v893 = vunpack.c.l.b16 %v231
    %v894 = vunpack.c.h.b16 %v231
    %v895 = vunpack.c.l.b16 %v232
    %v896 = vunpack.c.h.b16 %v232
    %v897 = vunpack.c.l.b16 %v233
    %v898 = vunpack.c.h.b16 %v233
    %v899 = vunpack.c.l.b16 %v234
    %v900 = vunpack.c.h.b16 %v234
    %v901 = vunpack.c.l.b16 %v235
    %v902 = vunpack.c.h.b16 %v235
    %v903 = vunpack.c.l.b16 %v236
    %v904 = vunpack.c.h.b16 %v236
    %v905 = vunpack.c.l.b16 %v237
    %v906 = vunpack.c.h.b16 %v237
    %v907 = vunpack.c.l.b16 %v238
    %v908 = vunpack.c.h.b16 %v238
    %v909 = vunpack.c.l.b16 %v239
    %v910 = vunpack.c.h.b16 %v239
    %v911 = vunpack.c.l.b16 %v240
    %v912 = vunpack.c.h.b16 %v240
    %v913 = vunpack.c.l.b16 %v241
    %v914 = vunpack.c.h.b16 %v241
    %v915 = vunpack.c.l.b16 %v242
    %v916 = vunpack.c.h.b16 %v242
    %v917 = vunpack.c.l.b16 %v243
    %v918 = vunpack.c.h.b16 %v243
    %v919 = vunpack.c.l.b16 %v244
    %v920 = vunpack.c.h.b16 %v244
    %v921 = vunpack.c.l.b16 %v245
    %v922 = vunpack.c.h.b16 %v245
    %v923 = vunpack.c.l.b16 %v246
    %v924 = vunpack.c.h.b16 %v246
    %v925 = vunpack.c.l.b16 %v247
    %v926 = vunpack.c.h.b16 %v247
    %v927 = vunpack.c.l.b16 %v248
    %v928 = vunpack.c.h.b16 %v248
    %v929 = vunpack.c.l.b16 %v249
    %v930 = vunpack.c.h.b16 %v249
    %v931 = vunpack.c.l.b16 %v250
    %v932 = vunpack.c.h.b16 %v250
    %v933 = vunpack.c.l.b16 %v251
    %v934 = vunpack.c.h.b16 %v251
    %v935 = vunpack.c.l.b16 %v252
    %v936 = vunpack.c.h.b16 %v252
    %v937 = vunpack.c.l.b16 %v253
    %v938 = vunpack.c.h.b16 %v253
    %v939 = vunpack.c.l.b16 %v254
    %v940 = vunpack.c.h.b16 %v254
    %v941 = vunpack.c.l.b16 %v255
    %v942 = vunpack.c.h.b16 %v255
    %v943 = vunpack.c.l.b16 %v256
    %v944 = vunpack.c.h.b16 %v256
    %v945 = vunpack.c.l.b16 %v257
    %v946 = vunpack.c.h.b16 %v257
    %v947 = vunpack.c.l.b16 %v258
    %v948 = vunpack.c.h.b16 %v258
    %v949 = vunpack.c.l.b16 %v259
    %v950 = vunpack.c.h.b16 %v259
    %v951 = vunpack.c.l.b16 %v260
    %v952 = vunpack.c.h.b16 %v260
    %v953 = vunpack.c.l.b16 %v261
    %v954 = vunpack.c.h.b16 %v261
    %v955 = vunpack.c.l.b16 %v262
    %v956 = vunpack.c.h.b16 %v262
    %v957 = vunpack.c.l.b16 %v263
    %v958 = vunpack.c.h.b16 %v263
    %v959 = vunpack.c.l.b16 %v264
    %v960 = vunpack.c.h.b16 %v264
    %v961 = vunpack.c.l.b16 %v265
    %v962 = vunpack.c.h.b16 %v265
    %v963 = vunpack.c.l.b16 %v266
    %v964 = vunpack.c.h.b16 %v266
    %v965 = vunpack.c.l.b16 %v267
    %v966 = vunpack.c.h.b16 %v267
    %v967 = vunpack.c.l.b16 %v268
    %v968 = vunpack.c.h.b16 %v268
    %v969 = vunpack.c.l.b16 %v269
    %v970 = vunpack.c.h.b16 %v269
    %v971 = vunpack.c.l.b16 %v270
    %v972 = vunpack.c.h.b16 %v270
    %v973 = vunpack.c.l.b16 %v271
    %v974 = vunpack.c.h.b16 %v271
    %v975 = vunpack.c.l.b16 %v272
    %v976 = vunpack.c.h.b16 %v272
    %v977 = vunpack.c.l.b16 %v273
    %v978 = vunpack.c.h.b16 %v273
    %v979 = vunpack.c.l.b16 %v274
    %v980 = vunpack.c.h.b16 %v274
    %v981 = vunpack.c.l.b16 %v275
    %v982 = vunpack.c.h.b16 %v275
    %v983 = vunpack.c.l.b16 %v276
    %v984 = vunpack.c.h.b16 %v276
    %v985 = vunpack.c.l.b16 %v277
    %v986 = vunpack.c.h.b16 %v277
    %v987 = vunpack.c.l.b16 %v278
    %v988 = vunpack.c.h.b16 %v278
    %v989 = vunpack.c.l.b16 %v279
    %v990 = vunpack.c.h.b16 %v279
    %v991 = vunpack.c.l.b16 %v280
    %v992 = vunpack.c.h.b16 %v280
    %v993 = vunpack.c.l.b16 %v281
    %v994 = vunpack.c.h.b16 %v281
    %v995 = vunpack.c.l.b16 %v282
    %v996 = vunpack.c.h.b16 %v282
    %v997 = vunpack.c.l.b16 %v283
    %v998 = vunpack.c.h.b16 %v283
    %v999 = vunpack.c.l.b16 %v284
    %v1000 = vunpack.c.h.b16 %v284
    %v1001 = vunpack.c.l.b16 %v285
    %v1002 = vunpack.c.h.b16 %v285
    %v1003 = vunpack.c.l.b16 %v286
    %v1004 = vunpack.c.h.b16 %v286
    %v1005 = vunpack.c.l.b16 %v287
    %v1006 = vunpack.c.h.b16 %v287
    %v1007 = vunpack.c.l.b16 %v288
    %v1008 = vunpack.c.h.b16 %v288
    %v1009 = vunpack.c.l.b16 %v289
    %v1010 = vunpack.c.h.b16 %v289
    %v1011 = vunpack.c.l.b16 %v290
    %v1012 = vunpack.c.h.b16 %v290
    %v1013 = vunpack.c.l.b16 %v291
    %v1014 = vunpack.c.h.b16 %v291
    %v1015 = vunpack.c.l.b16 %v292
    %v1016 = vunpack.c.h.b16 %v292
    %v1017 = vunpack.c.l.b16 %v293
    %v1018 = vunpack.c.h.b16 %v293
    %v1019 = vunpack.c.l.b16 %v294
    %v1020 = vunpack.c.h.b16 %v294
    %v1021 = vunpack.c.l.b16 %v295
    %v1022 = vunpack.c.h.b16 %v295
    %v1023 = vunpack.c.l.b16 %v296
    %v1024 = vunpack.c.h.b16 %v296
    %v1025 = vunpack.c.l.b16 %v297
    %v1026 = vunpack.c.h.b16 %v297
    %v1027 = vunpack.c.l.b16 %v298
    %v1028 = vunpack.c.h.b16 %v298
    %v1029 = vunpack.c.l.b16 %v299
    %v1030 = vunpack.c.h.b16 %v299
    %v1031 = vunpack.c.l.b16 %v300
    %v1032 = vunpack.c.h.b16 %v300
    %v1033 = vunpack.c.l.b16 %v301
    %v1034 = vunpack.c.h.b16 %v301
    %v1035 = vunpack.c.l.b16 %v302
    %v1036 = vunpack.c.h.b16 %v302
    %v1037 = vunpack.c.l.b16 %v303
    %v1038 = vunpack.c.h.b16 %v303
    %v1039 = vunpack.c.l.b16 %v304
    %v1040 = vunpack.c.h.b16 %v304
    %v1041 = vunpack.c.l.b16 %v305
    %v1042 = vunpack.c.h.b16 %v305
    %v1043 = vunpack.c.l.b16 %v306
    %v1044 = vunpack.c.h.b16 %v306
    %v1045 = vunpack.c.l.b16 %v307
    %v1046 = vunpack.c.h.b16 %v307
    %v1047 = vunpack.c.l.b16 %v308
    %v1048 = vunpack.c.h.b16 %v308
    %v1049 = vunpack.c.l.b16 %v309
    %v1050 = vunpack.c.h.b16 %v309
    %v1051 = vunpack.c.l.b16 %v310
    %v1052 = vunpack.c.h.b16 %v310
    %v1053 = vunpack.c.l.b16 %v311
    %v1054 = vunpack.c.h.b16 %v311
    %v1055 = vunpack.c.l.b16 %v312
    %v1056 = vunpack.c.h.b16 %v312
    %v1057 = vunpack.c.l.b16 %v313
    %v1058 = vunpack.c.h.b16 %v313
    %v1059 = vunpack.c.l.b16 %v314
    %v1060 = vunpack.c.h.b16 %v314
    %v1061 = vunpack.c.l.b16 %v315
    %v1062 = vunpack.c.h.b16 %v315
    %v1063 = vunpack.c.l.b16 %v316
    %v1064 = vunpack.c.h.b16 %v316
    %v1065 = vunpack.c.l.b16 %v317
    %v1066 = vunpack.c.h.b16 %v317
    %v1067 = vunpack.c.l.b16 %v318
    %v1068 = vunpack.c.h.b16 %v318
    %v1069 = vunpack.c.l.b16 %v319
    %v1070 = vunpack.c.h.b16 %v319
    %v1071 = vunpack.c.l.b16 %v320
    %v1072 = vunpack.c.h.b16 %v320
    %v1073 = vunpack.c.l.b16 %v321
    %v1074 = vunpack.c.h.b16 %v321
    %v1075 = vunpack.c.l.b16 %v322
    %v1076 = vunpack.c.h.b16 %v322
    %v1077 = vunpack.c.l.b16 %v323
    %v1078 = vunpack.c.h.b16 %v323
    %v1079 = vunpack.c.l.b16 %v324
    %v1080 = vunpack.c.h.b16 %v324
    %v1081 = vunpack.c.l.b16 %v325
    %v1082 = vunpack.c.h.b16 %v325
    %v1083 = vunpack.c.l.b16 %v326
    %v1084 = vunpack.c.h.b16 %v326
    %v1085 = vunpack.c.l.b16 %v327
    %v1086 = vunpack.c.h.b16 %v327
    %v1087 = vunpack.c.l.b16 %v328
    %v1088 = vunpack.c.h.b16 %v328
    %v1089 = vunpack.c.l.b16 %v329
    %v1090 = vunpack.c.h.b16 %v329
    %v1091 = vunpack.c.l.b16 %v330
    %v1092 = vunpack.c.h.b16 %v330
    %v1093 = vunpack.c.l.b16 %v331
    %v1094 = vunpack.c.h.b16 %v331
    %v1095 = vunpack.c.l.b16 %v332
    %v1096 = vunpack.c.h.b16 %v332
    %v1097 = vunpack.c.l.b16 %v333
    %v1098 = vunpack.c.h.b16 %v333
    %v1099 = vunpack.c.l.b16 %v334
    %v1100 = vunpack.c.h.b16 %v334
    %v1101 = vunpack.c.l.b16 %v335
    %v1102 = vunpack.c.h.b16 %v335
    %v1103 = vunpack.c.l.b16 %v336
    %v1104 = vunpack.c.h.b16 %v336
    %v1105 = vunpack.c.l.b16 %v337
    %v1106 = vunpack.c.h.b16 %v337
    %v1107 = vunpack.c.l.b16 %v338
    %v1108 = vunpack.c.h.b16 %v338
    %v1109 = vunpack.c.l.b16 %v339
    %v1110 = vunpack.c.h.b16 %v339
    %v1111 = vunpack.c.l.b16 %v340
    %v1112 = vunpack.c.h.b16 %v340
    %v1113 = vunpack.c.l.b16 %v341
    %v1114 = vunpack.c.h.b16 %v341
    %v1115 = vunpack.c.l.b16 %v342
    %v1116 = vunpack.c.h.b16 %v342
    %v1117 = vunpack.c.l.b16 %v343
    %v1118 = vunpack.c.h.b16 %v343
    %v1119 = vunpack.c.l.b16 %v344
    %v1120 = vunpack.c.h.b16 %v344
    %v1121 = vunpack.c.l.b16 %v345
    %v1122 = vunpack.c.h.b16 %v345
    %v1123 = vunpack.c.l.b16 %v346
    %v1124 = vunpack.c.h.b16 %v346
    %v1125 = vunpack.c.l.b16 %v347
    %v1126 = vunpack.c.h.b16 %v347
    %v1127 = vunpack.c.l.b16 %v348
    %v1128 = vunpack.c.h.b16 %v348
    %v1129 = vunpack.c.l.b16 %v349
    %v1130 = vunpack.c.h.b16 %v349
    %v1131 = vunpack.c.l.b16 %v350
    %v1132 = vunpack.c.h.b16 %v350
    %v1133 = vunpack.c.l.b16 %v351
    %v1134 = vunpack.c.h.b16 %v351
    %v1135 = vunpack.c.l.b16 %v352
    %v1136 = vunpack.c.h.b16 %v352
    %v1137 = vunpack.c.l.b16 %v353
    %v1138 = vunpack.c.h.b16 %v353
    %v1139 = vunpack.c.l.b16 %v354
    %v1140 = vunpack.c.h.b16 %v354
    %v1141 = vunpack.c.l.b16 %v355
    %v1142 = vunpack.c.h.b16 %v355
    %v1143 = vunpack.c.l.b16 %v356
    %v1144 = vunpack.c.h.b16 %v356
    %v1145 = vunpack.c.l.b16 %v357
    %v1146 = vunpack.c.h.b16 %v357
    %v1147 = vunpack.c.l.b16 %v358
    %v1148 = vunpack.c.h.b16 %v358
    %v1149 = vunpack.c.l.b16 %v359
    %v1150 = vunpack.c.h.b16 %v359
    %v1151 = vunpack.c.l.b16 %v360
    %v1152 = vunpack.c.h.b16 %v360
    %v1153 = vunpack.c.l.b16 %v361
    %v1154 = vunpack.c.h.b16 %v361
    %v1155 = vunpack.c.l.b16 %v362
    %v1156 = vunpack.c.h.b16 %v362
    %v1157 = vunpack.c.l.b16 %v363
    %v1158 = vunpack.c.h.b16 %v363
    %v1159 = vunpack.c.l.b16 %v364
    %v1160 = vunpack.c.h.b16 %v364
    %v1161 = vunpack.c.l.b16 %v365
    %v1162 = vunpack.c.h.b16 %v365
    %v1163 = vunpack.c.l.b16 %v366
    %v1164 = vunpack.c.h.b16 %v366
    %v1165 = vunpack.c.l.b16 %v367
    %v1166 = vunpack.c.h.b16 %v367
    %v1167 = vunpack.c.l.b16 %v368
    %v1168 = vunpack.c.h.b16 %v368
    %v1169 = vunpack.c.l.b16 %v369
    %v1170 = vunpack.c.h.b16 %v369
    %v1171 = vunpack.c.l.b16 %v370
    %v1172 = vunpack.c.h.b16 %v370
    %v1173 = vunpack.c.l.b16 %v371
    %v1174 = vunpack.c.h.b16 %v371
    %v1175 = vunpack.c.l.b16 %v372
    %v1176 = vunpack.c.h.b16 %v372
    %v1177 = vunpack.c.l.b16 %v373
    %v1178 = vunpack.c.h.b16 %v373
    %v1179 = vunpack.c.l.b16 %v374
    %v1180 = vunpack.c.h.b16 %v374
    %v1181 = vunpack.c.l.b16 %v375
    %v1182 = vunpack.c.h.b16 %v375
    %v1183 = vunpack.c.l.b16 %v376
    %v1184 = vunpack.c.h.b16 %v376
    %v1185 = vunpack.c.l.b16 %v377
    %v1186 = vunpack.c.h.b16 %v377
    %v1187 = vunpack.c.l.b16 %v378
    %v1188 = vunpack.c.h.b16 %v378
    %v1189 = vpack.c.b16 %v685, %v677
    %v1190 = vpack.c.b16 %v686, %v678
    %v1191 = vpack.c.b16 %v687, %v679
    %v1192 = vpack.c.b16 %v688, %v680
    %v1193 = vpack.c.b16 %v689, %v681
    %v1194 = vpack.c.b16 %v690, %v682
    %v1195 = vpack.c.b16 %v691, %v683
    %v1196 = vpack.c.b16 %v692, %v684
    %v1197 = vpack.c.b16 %v701, %v693
    %v1198 = vpack.c.b16 %v702, %v694
    %v1199 = vpack.c.b16 %v703, %v695
    %v1200 = vpack.c.b16 %v704, %v696
    %v1201 = vpack.c.b16 %v705, %v697
    %v1202 = vpack.c.b16 %v706, %v698
    %v1203 = vpack.c.b16 %v707, %v699
    %v1204 = vpack.c.b16 %v708, %v700
    %v1205 = vpack.c.b16 %v717, %v709
    %v1206 = vpack.c.b16 %v718, %v710
    %v1207 = vpack.c.b16 %v719, %v711
    %v1208 = vpack.c.b16 %v720, %v712
    %v1209 = vpack.c.b16 %v721, %v713
    %v1210 = vpack.c.b16 %v722, %v714
    %v1211 = vpack.c.b16 %v723, %v715
    %v1212 = vpack.c.b16 %v724, %v716
    %v1213 = vpack.c.b16 %v733, %v725
    %v1214 = vpack.c.b16 %v734, %v726
    %v1215 = vpack.c.b16 %v735, %v727
    %v1216 = vpack.c.b16 %v736, %v728
    %v1217 = vpack.c.b16 %v737, %v729
    %v1218 = vpack.c.b16 %v738, %v730
    %v1219 = vpack.c.b16 %v739, %v731
    %v1220 = vpack.c.b16 %v740, %v732
    %v1221 = vpack.c.b16 %v749, %v741
    %v1222 = vpack.c.b16 %v750, %v742
    %v1223 = vpack.c.b16 %v751, %v743
    %v1224 = vpack.c.b16 %v752, %v744
    %v1225 = vpack.c.b16 %v753, %v745
    %v1226 = vpack.c.b16 %v754, %v746
    %v1227 = vpack.c.b16 %v755, %v747
    %v1228 = vpack.c.b16 %v756, %v748
    %v1229 = vpack.c.b16 %v765, %v757
    %v1230 = vpack.c.b16 %v766, %v758
    %v1231 = vpack.c.b16 %v767, %v759
    %v1232 = vpack.c.b16 %v768, %v760
    %v1233 = vpack.c.b16 %v769, %v761
    %v1234 = vpack.c.b16 %v770, %v762
    %v1235 = vpack.c.b16 %v771, %v763
    %v1236 = vpack.c.b16 %v772, %v764
    %v1237 = vpack.c.b16 %v781, %v773
    %v1238 = vpack.c.b16 %v782, %v774
    %v1239 = vpack.c.b16 %v783, %v775
    %v1240 = vpack.c.b16 %v784, %v776
    %v1241 = vpack.c.b16 %v785, %v777
    %v1242 = vpack.c.b16 %v786, %v778
    %v1243 = vpack.c.b16 %v787, %v779
    %v1244 = vpack.c.b16 %v788, %v780
    %v1245 = vpack.c.b16 %v797, %v789
    %v1246 = vpack.c.b16 %v798, %v790
    %v1247 = vpack.c.b16 %v799, %v791
    %v1248 = vpack.c.b16 %v800, %v792
    %v1249 = vpack.c.b16 %v801, %v793
    %v1250 = vpack.c.b16 %v802, %v794
    %v1251 = vpack.c.b16 %v803, %v795
    %v1252 = vpack.c.b16 %v804, %v796
    %v1253 = vpack.c.b16 %v813, %v805
    %v1254 = vpack.c.b16 %v814, %v806
    %v1255 = vpack.c.b16 %v815, %v807
    %v1256 = vpack.c.b16 %v816, %v808
    %v1257 = vpack.c.b16 %v817, %v809
    %v1258 = vpack.c.b16 %v818, %v810
    %v1259 = vpack.c.b16 %v819, %v811
    %v1260 = vpack.c.b16 %v820, %v812
    %v1261 = vpack.c.b16 %v829, %v821
    %v1262 = vpack.c.b16 %v830, %v822
    %v1263 = vpack.c.b16 %v831, %v823
    %v1264 = vpack.c.b16 %v832, %v824
    %v1265 = vpack.c.b16 %v833, %v825
    %v1266 = vpack.c.b16 %v834, %v826
    %v1267 = vpack.c.b16 %v835, %v827
    %v1268 = vpack.c.b16 %v836, %v828
    %v1269 = vpack.c.b16 %v845, %v837
    %v1270 = vpack.c.b16 %v846, %v838
    %v1271 = vpack.c.b16 %v847, %v839
    %v1272 = vpack.c.b16 %v848, %v840
    %v1273 = vpack.c.b16 %v849, %v841
    %v1274 = vpack.c.b16 %v850, %v842
    %v1275 = vpack.c.b16 %v851, %v843
    %v1276 = vpack.c.b16 %v852, %v844
    %v1277 = vpack.c.b16 %v861, %v853
    %v1278 = vpack.c.b16 %v862, %v854
    %v1279 = vpack.c.b16 %v863, %v855
    %v1280 = vpack.c.b16 %v864, %v856
    %v1281 = vpack.c.b16 %v865, %v857
    %v1282 = vpack.c.b16 %v866, %v858
    %v1283 = vpack.c.b16 %v867, %v859
    %v1284 = vpack.c.b16 %v868, %v860
    %v1285 = vpack.c.b16 %v877, %v869
    %v1286 = vpack.c.b16 %v878, %v870
    %v1287 = vpack.c.b16 %v879, %v871
    %v1288 = vpack.c.b16 %v880, %v872
    %v1289 = vpack.c.b16 %v881, %v873
    %v1290 = vpack.c.b16 %v882, %v874
    %v1291 = vpack.c.b16 %v883, %v875
    %v1292 = vpack.c.b16 %v884, %v876
    %v1293 = vpack.c.b16 %v893, %v885
    %v1294 = vpack.c.b16 %v894, %v886
    %v1295 = vpack.c.b16 %v895, %v887
    %v1296 = vpack.c.b16 %v896, %v888
    %v1297 = vpack.c.b16 %v897, %v889
    %v1298 = vpack.c.b16 %v898, %v890
    %v1299 = vpack.c.b16 %v899, %v891
    %v1300 = vpack.c.b16 %v900, %v892
    %v1301 = vpack.c.b16 %v909, %v901
    %v1302 = vpack.c.b16 %v910, %v902
    %v1303 = vpack.c.b16 %v911, %v903
    %v1304 = vpack.c.b16 %v912, %v904
    %v1305 = vpack.c.b16 %v913, %v905
    %v1306 = vpack.c.b16 %v914, %v906
    %v1307 = vpack.c.b16 %v915, %v907
    %v1308 = vpack.c.b16 %v916, %v908
    %v1309 = vpack.c.b16 %v925, %v917
    %v1310 = vpack.c.b16 %v926, %v918
    %v1311 = vpack.c.b16 %v927, %v919
    %v1312 = vpack.c.b16 %v928, %v920
    %v1313 = vpack.c.b16 %v929, %v921
    %v1314 = vpack.c.b16 %v930, %v922
    %v1315 = vpack.c.b16 %v931, %v923
    %v1316 = vpack.c.b16 %v932, %v924
    %v1317 = vpack.c.b16 %v941, %v933
    %v1318 = vpack.c.b16 %v942, %v934
    %v1319 = vpack.c.b16 %v943, %v935
    %v1320 = vpack.c.b16 %v944, %v936
    %v1321 = vpack.c.b16 %v945, %v937
    %v1322 = vpack.c.b16 %v946, %v938
    %v1323 = vpack.c.b16 %v947, %v939
    %v1324 = vpack.c.b16 %v948, %v940
    %v1325 = vpack.c.b16 %v957, %v949
    %v1326 = vpack.c.b16 %v958, %v950
    %v1327 = vpack.c.b16 %v959, %v951
    %v1328 = vpack.c.b16 %v960, %v952
    %v1329 = vpack.c.b16 %v961, %v953
    %v1330 = vpack.c.b16 %v962, %v954
    %v1331 = vpack.c.b16 %v963, %v955
    %v1332 = vpack.c.b16 %v964, %v956
    %v1333 = vpack.c.b16 %v973, %v965
    %v1334 = vpack.c.b16 %v974, %v966
    %v1335 = vpack.c.b16 %v975, %v967
    %v1336 = vpack.c.b16 %v976, %v968
    %v1337 = vpack.c.b16 %v977, %v969
    %v1338 = vpack.c.b16 %v978, %v970
    %v1339 = vpack.c.b16 %v979, %v971
    %v1340 = vpack.c.b16 %v980, %v972
    %v1341 = vpack.c.b16 %v989, %v981
    %v1342 = vpack.c.b16 %v990, %v982
    %v1343 = vpack.c.b16 %v991, %v983
    %v1344 = vpack.c.b16 %v992, %v984
    %v1345 = vpack.c.b16 %v993, %v985
    %v1346 = vpack.c.b16 %v994, %v986
    %v1347 = vpack.c.b16 %v995, %v987
    %v1348 = vpack.c.b16 %v996, %v988
    %v1349 = vpack.c.b16 %v1005, %v997
    %v1350 = vpack.c.b16 %v1006, %v998
    %v1351 = vpack.c.b16 %v1007, %v999
    %v1352 = vpack.c.b16 %v1008, %v1000
    %v1353 = vpack.c.b16 %v1009, %v1001
    %v1354 = vpack.c.b16 %v1010, %v1002
    %v1355 = vpack.c.b16 %v1011, %v1003
    %v1356 = vpack.c.b16 %v1012, %v1004
    %v1357 = vpack.c.b16 %v1021, %v1013
    %v1358 = vpack.c.b16 %v1022, %v1014
    %v1359 = vpack.c.b16 %v1023, %v1015
    %v1360 = vpack.c.b16 %v1024, %v1016
    %v1361 = vpack.c.b16 %v1025, %v1017
    %v1362 = vpack.c.b16 %v1026, %v1018
    %v1363 = vpack.c.b16 %v1027, %v1019
    %v1364 = vpack.c.b16 %v1028, %v1020
    %v1365 = vpack.c.b16 %v1037, %v1029
    %v1366 = vpack.c.b16 %v1038, %v1030
    %v1367 = vpack.c.b16 %v1039, %v1031
    %v1368 = vpack.c.b16 %v1040, %v1032
    %v1369 = vpack.c.b16 %v1041, %v1033
    %v1370 = vpack.c.b16 %v1042, %v1034
    %v1371 = vpack.c.b16 %v1043, %v1035
    %v1372 = vpack.c.b16 %v1044, %v1036
    %v1373 = vpack.c.b16 %v1053, %v1045
    %v1374 = vpack.c.b16 %v1054, %v1046
    %v1375 = vpack.c.b16 %v1055, %v1047
    %v1376 = vpack.c.b16 %v1056, %v1048
    %v1377 = vpack.c.b16 %v1057, %v1049
    %v1378 = vpack.c.b16 %v1058, %v1050
    %v1379 = vpack.c.b16 %v1059, %v1051
    %v1380 = vpack.c.b16 %v1060, %v1052
    %v1381 = vpack.c.b16 %v1069, %v1061
    %v1382 = vpack.c.b16 %v1070, %v1062
    %v1383 = vpack.c.b16 %v1071, %v1063
    %v1384 = vpack.c.b16 %v1072, %v1064
    %v1385 = vpack.c.b16 %v1073, %v1065
    %v1386 = vpack.c.b16 %v1074, %v1066
    %v1387 = vpack.c.b16 %v1075, %v1067
    %v1388 = vpack.c.b16 %v1076, %v1068
    %v1389 = vpack.c.b16 %v1085, %v1077
    %v1390 = vpack.c.b16 %v1086, %v1078
    %v1391 = vpack.c.b16 %v1087, %v1079
    %v1392 = vpack.c.b16 %v1088, %v1080
    %v1393 = vpack.c.b16 %v1089, %v1081
    %v1394 = vpack.c.b16 %v1090, %v1082
    %v1395 = vpack.c.b16 %v1091, %v1083
    %v1396 = vpack.c.b16 %v1092, %v1084
    %v1397 = vpack.c.b16 %v1101, %v1093
    %v1398 = vpack.c.b16 %v1102, %v1094
    %v1399 = vpack.c.b16 %v1103, %v1095
    %v1400 = vpack.c.b16 %v1104, %v1096
    %v1401 = vpack.c.b16 %v1105, %v1097
    %v1402 = vpack.c.b16 %v1106, %v1098
    %v1403 = vpack.c.b16 %v1107, %v1099
    %v1404 = vpack.c.b16 %v1108, %v1100
    %v1405 = vpack.c.b16 %v1117, %v1109
    %v1406 = vpack.c.b16 %v1118, %v1110
    %v1407 = vpack.c.b16 %v1119, %v1111
    %v1408 = vpack.c.b16 %v1120, %v1112
    %v1409 = vpack.c.b16 %v1121, %v1113
    %v1410 = vpack.c.b16 %v1122, %v1114
    %v1411 = vpack.c.b16 %v1123, %v1115
    %v1412 = vpack.c.b16 %v1124, %v1116
    %v1413 = vpack.c.b16 %v1133, %v1125
    %v1414 = vpack.c.b16 %v1134, %v1126
    %v1415 = vpack.c.b16 %v1135, %v1127
    %v1416 = vpack.c.b16 %v1136, %v1128
    %v1417 = vpack.c.b16 %v1137, %v1129
    %v1418 = vpack.c.b16 %v1138, %v1130
    %v1419 = vpack.c.b16 %v1139, %v1131
    %v1420 = vpack.c.b16 %v1140, %v1132
    %v1421 = vpack.c.b16 %v1149, %v1141
    %v1422 = vpack.c.b16 %v1150, %v1142
    %v1423 = vpack.c.b16 %v1151, %v1143
    %v1424 = vpack.c.b16 %v1152, %v1144
    %v1425 = vpack.c.b16 %v1153, %v1145
    %v1426 = vpack.c.b16 %v1154, %v1146
    %v1427 = vpack.c.b16 %v1155, %v1147
    %v1428 = vpack.c.b16 %v1156, %v1148
    %v1429 = vpack.c.b16 %v1165, %v1157
    %v1430 = vpack.c.b16 %v1166, %v1158
    %v1431 = vpack.c.b16 %v1167, %v1159
    %v1432 = vpack.c.b16 %v1168, %v1160
    %v1433 = vpack.c.b16 %v1169, %v1161
    %v1434 = vpack.c.b16 %v1170, %v1162
    %v1435 = vpack.c.b16 %v1171, %v1163
    %v1436 = vpack.c.b16 %v1172, %v1164
    %v1437 = vpack.c.b16 %v1181, %v1173
    %v1438 = vpack.c.b16 %v1182, %v1174
    %v1439 = vpack.c.b16 %v1183, %v1175
    %v1440 = vpack.c.b16 %v1184, %v1176
    %v1441 = vpack.c.b16 %v1185, %v1177
    %v1442 = vpack.c.b16 %v1186, %v1178
    %v1443 = vpack.c.b16 %v1187, %v1179
    %v1444 = vpack.c.b16 %v1188, %v1180
    %1701 = vmatprep.subr.bf16.mxu0 %v1190
    %1702 = vmatpush1.bf16.msra.mxu0 %v1189
    %1703 = vmatprep.subr.bf16.mxu0 %v1198
    %1704 = vmatpush1.bf16.msra.mxu0 %v1197
    %1705 = vmatprep.subr.bf16.mxu0 %v1206
    %1706 = vmatpush1.bf16.msra.mxu0 %v1205
    %1707 = vmatprep.subr.bf16.mxu0 %v1214
    %1708 = vmatpush1.bf16.msra.mxu0 %v1213
    %1709 = vmatprep.subr.bf16.mxu0 %v1222
    %1710 = vmatpush1.bf16.msra.mxu0 %v1221
    %1711 = vmatprep.subr.bf16.mxu0 %v1230
    %1712 = vmatpush1.bf16.msra.mxu0 %v1229
    %1713 = vmatprep.subr.bf16.mxu0 %v1238
    %1714 = vmatpush1.bf16.msra.mxu0 %v1237
    %1715 = vmatprep.subr.bf16.mxu0 %v1246
    %1716 = vmatpush1.bf16.msra.mxu0 %v1245
    %1717 = vmatprep.subr.bf16.mxu0 %v1254
    %1718 = vmatpush1.bf16.msra.mxu0 %v1253
    %1719 = vmatprep.subr.bf16.mxu0 %v1262
    %1720 = vmatpush1.bf16.msra.mxu0 %v1261
    %1721 = vmatprep.subr.bf16.mxu0 %v1270
    %1722 = vmatpush1.bf16.msra.mxu0 %v1269
    %1723 = vmatprep.subr.bf16.mxu0 %v1278
    %1724 = vmatpush1.bf16.msra.mxu0 %v1277
    %1725 = vmatprep.subr.bf16.mxu0 %v1286
    %1726 = vmatpush1.bf16.msra.mxu0 %v1285
    %1727 = vmatprep.subr.bf16.mxu0 %v1294
    %1728 = vmatpush1.bf16.msra.mxu0 %v1293
    %1729 = vmatprep.subr.bf16.mxu0 %v1302
    %1730 = vmatpush1.bf16.msra.mxu0 %v1301
    %1731 = vmatprep.subr.bf16.mxu0 %v1310
    %1732 = vmatpush1.bf16.msra.mxu0 %v1309
    %1733 = vmatprep.mubr.bf16.mxu0 %v120
    %1734 = vmatmul.mubr.bf16.gmra.mrb[0].mxu0 %v119
    %v1735 = vpop.f32.mrb[0].mxu0
    %v1736 = vadd.f32 %v384, %v1735
    %v1737 = vpop.f32.mrb[0].mxu0
    %v1738 = vadd.f32 %v388, %v1737
    %v1739 = vpop.f32.mrb[0].mxu0
    %v1740 = vpop.f32.mrb[0].mxu0
    %1741 = vdwg.mxu0
    %1742 = vmatprep.subr.bf16.mxu0 %v1318
    %1743 = vmatpush1.bf16.msra.mxu0 %v1317
    %1744 = vmatprep.subr.bf16.mxu0 %v1326
    %1745 = vmatpush1.bf16.msra.mxu0 %v1325
    %1746 = vmatprep.subr.bf16.mxu0 %v1334
    %1747 = vmatpush1.bf16.msra.mxu0 %v1333
    %1748 = vmatprep.subr.bf16.mxu0 %v1342
    %1749 = vmatpush1.bf16.msra.mxu0 %v1341
    %1750 = vmatprep.subr.bf16.mxu0 %v1350
    %1751 = vmatpush1.bf16.msra.mxu0 %v1349
    %1752 = vmatprep.subr.bf16.mxu0 %v1358
    %1753 = vmatpush1.bf16.msra.mxu0 %v1357
    %1754 = vmatprep.subr.bf16.mxu0 %v1366
    %1755 = vmatpush1.bf16.msra.mxu0 %v1365
    %1756 = vmatprep.subr.bf16.mxu0 %v1374
    %1757 = vmatpush1.bf16.msra.mxu0 %v1373
    %1758 = vmatprep.subr.bf16.mxu0 %v1382
    %1759 = vmatpush1.bf16.msra.mxu0 %v1381
    %1760 = vmatprep.subr.bf16.mxu0 %v1390
    %1761 = vmatpush1.bf16.msra.mxu0 %v1389
    %1762 = vmatprep.subr.bf16.mxu0 %v1398
    %1763 = vmatpush1.bf16.msra.mxu0 %v1397
    %1764 = vmatprep.subr.bf16.mxu0 %v1406
    %1765 = vmatpush1.bf16.msra.mxu0 %v1405
    %1766 = vmatprep.subr.bf16.mxu0 %v1414
    %1767 = vmatpush1.bf16.msra.mxu0 %v1413
    %1768 = vmatprep.subr.bf16.mxu0 %v1422
    %1769 = vmatpush1.bf16.msra.mxu0 %v1421
    %1770 = vmatprep.subr.bf16.mxu0 %v1430
    %1771 = vmatpush1.bf16.msra.mxu0 %v1429
    %1772 = vmatprep.subr.bf16.mxu0 %v1438
    %1773 = vmatpush1.bf16.msra.mxu0 %v1437
    %1774 = vmatprep.mubr.bf16.mxu0 %v122
    %1775 = vmatmul.mubr.bf16.gmra.mrb[0].mxu0 %v121
    %v1776 = vpop.f32.mrb[0].mxu0
    %v1777 = vadd.f32 %v1736, %v1776
    %v1778 = vpop.f32.mrb[0].mxu0
    %v1779 = vadd.f32 %v1738, %v1778
    %v1780 = vpop.f32.mrb[0].mxu0
    %v1781 = vpop.f32.mrb[0].mxu0
    %1782 = vdwg.mxu0
    %1783 = vmatprep.subr.bf16.mxu0 %v1192
    %1784 = vmatpush1.bf16.msra.mxu0 %v1191
    %1785 = vmatprep.subr.bf16.mxu0 %v1200
    %1786 = vmatpush1.bf16.msra.mxu0 %v1199
    %1787 = vmatprep.subr.bf16.mxu0 %v1208
    %1788 = vmatpush1.bf16.msra.mxu0 %v1207
    %1789 = vmatprep.subr.bf16.mxu0 %v1216
    %1790 = vmatpush1.bf16.msra.mxu0 %v1215
    %1791 = vmatprep.subr.bf16.mxu0 %v1224
    %1792 = vmatpush1.bf16.msra.mxu0 %v1223
    %1793 = vmatprep.subr.bf16.mxu0 %v1232
    %1794 = vmatpush1.bf16.msra.mxu0 %v1231
    %1795 = vmatprep.subr.bf16.mxu0 %v1240
    %1796 = vmatpush1.bf16.msra.mxu0 %v1239
    %1797 = vmatprep.subr.bf16.mxu0 %v1248
    %1798 = vmatpush1.bf16.msra.mxu0 %v1247
    %1799 = vmatprep.subr.bf16.mxu0 %v1256
    %1800 = vmatpush1.bf16.msra.mxu0 %v1255
    %1801 = vmatprep.subr.bf16.mxu0 %v1264
    %1802 = vmatpush1.bf16.msra.mxu0 %v1263
    %1803 = vmatprep.subr.bf16.mxu0 %v1272
    %1804 = vmatpush1.bf16.msra.mxu0 %v1271
    %1805 = vmatprep.subr.bf16.mxu0 %v1280
    %1806 = vmatpush1.bf16.msra.mxu0 %v1279
    %1807 = vmatprep.subr.bf16.mxu0 %v1288
    %1808 = vmatpush1.bf16.msra.mxu0 %v1287
    %1809 = vmatprep.subr.bf16.mxu0 %v1296
    %1810 = vmatpush1.bf16.msra.mxu0 %v1295
    %1811 = vmatprep.subr.bf16.mxu0 %v1304
    %1812 = vmatpush1.bf16.msra.mxu0 %v1303
    %1813 = vmatprep.subr.bf16.mxu0 %v1312
    %1814 = vmatpush1.bf16.msra.mxu0 %v1311
    %1815 = vmatprep.mubr.bf16.mxu0 %v120
    %1816 = vmatmul.mubr.bf16.gmra.mrb[0].mxu0 %v119
    %v1817 = vpop.f32.mrb[0].mxu0
    %v1818 = vadd.f32 %v392, %v1817
    %v1819 = vpop.f32.mrb[0].mxu0
    %v1820 = vadd.f32 %v396, %v1819
    %v1821 = vpop.f32.mrb[0].mxu0
    %v1822 = vpop.f32.mrb[0].mxu0
    %1823 = vdwg.mxu0
    %1824 = vmatprep.subr.bf16.mxu0 %v1320
    %1825 = vmatpush1.bf16.msra.mxu0 %v1319
    %1826 = vmatprep.subr.bf16.mxu0 %v1328
    %1827 = vmatpush1.bf16.msra.mxu0 %v1327
    %1828 = vmatprep.subr.bf16.mxu0 %v1336
    %1829 = vmatpush1.bf16.msra.mxu0 %v1335
    %1830 = vmatprep.subr.bf16.mxu0 %v1344
    %1831 = vmatpush1.bf16.msra.mxu0 %v1343
    %1832 = vmatprep.subr.bf16.mxu0 %v1352
    %1833 = vmatpush1.bf16.msra.mxu0 %v1351
    %1834 = vmatprep.subr.bf16.mxu0 %v1360
    %1835 = vmatpush1.bf16.msra.mxu0 %v1359
    %1836 = vmatprep.subr.bf16.mxu0 %v1368
    %1837 = vmatpush1.bf16.msra.mxu0 %v1367
    %1838 = vmatprep.subr.bf16.mxu0 %v1376
    %1839 = vmatpush1.bf16.msra.mxu0 %v1375
    %1840 = vmatprep.subr.bf16.mxu0 %v1384
    %1841 = vmatpush1.bf16.msra.mxu0 %v1383
    %1842 = vmatprep.subr.bf16.mxu0 %v1392
    %1843 = vmatpush1.bf16.msra.mxu0 %v1391
    %1844 = vmatprep.subr.bf16.mxu0 %v1400
    %1845 = vmatpush1.bf16.msra.mxu0 %v1399
    %1846 = vmatprep.subr.bf16.mxu0 %v1408
    %1847 = vmatpush1.bf16.msra.mxu0 %v1407
    %1848 = vmatprep.subr.bf16.mxu0 %v1416
    %1849 = vmatpush1.bf16.msra.mxu0 %v1415
    %1850 = vmatprep.subr.bf16.mxu0 %v1424
    %1851 = vmatpush1.bf16.msra.mxu0 %v1423
    %1852 = vmatprep.subr.bf16.mxu0 %v1432
    %1853 = vmatpush1.bf16.msra.mxu0 %v1431
    %1854 = vmatprep.subr.bf16.mxu0 %v1440
    %1855 = vmatpush1.bf16.msra.mxu0 %v1439
    %1856 = vmatprep.mubr.bf16.mxu0 %v122
    %1857 = vmatmul.mubr.bf16.gmra.mrb[0].mxu0 %v121
    %v1858 = vpop.f32.mrb[0].mxu0
    %v1859 = vadd.f32 %v1818, %v1858
    %v1860 = vpop.f32.mrb[0].mxu0
    %v1861 = vadd.f32 %v1820, %v1860
    %v1862 = vpop.f32.mrb[0].mxu0
    %v1863 = vpop.f32.mrb[0].mxu0
    %1864 = vdwg.mxu0
    %1865 = vmatprep.subr.bf16.mxu0 %v1194
    %1866 = vmatpush1.bf16.msra.mxu0 %v1193
    %1867 = vmatprep.subr.bf16.mxu0 %v1202
    %1868 = vmatpush1.bf16.msra.mxu0 %v1201
    %1869 = vmatprep.subr.bf16.mxu0 %v1210
    %1870 = vmatpush1.bf16.msra.mxu0 %v1209
    %1871 = vmatprep.subr.bf16.mxu0 %v1218
    %1872 = vmatpush1.bf16.msra.mxu0 %v1217
    %1873 = vmatprep.subr.bf16.mxu0 %v1226
    %1874 = vmatpush1.bf16.msra.mxu0 %v1225
    %1875 = vmatprep.subr.bf16.mxu0 %v1234
    %1876 = vmatpush1.bf16.msra.mxu0 %v1233
    %1877 = vmatprep.subr.bf16.mxu0 %v1242
    %1878 = vmatpush1.bf16.msra.mxu0 %v1241
    %1879 = vmatprep.subr.bf16.mxu0 %v1250
    %1880 = vmatpush1.bf16.msra.mxu0 %v1249
    %1881 = vmatprep.subr.bf16.mxu0 %v1258
    %1882 = vmatpush1.bf16.msra.mxu0 %v1257
    %1883 = vmatprep.subr.bf16.mxu0 %v1266
    %1884 = vmatpush1.bf16.msra.mxu0 %v1265
    %1885 = vmatprep.subr.bf16.mxu0 %v1274
    %1886 = vmatpush1.bf16.msra.mxu0 %v1273
    %1887 = vmatprep.subr.bf16.mxu0 %v1282
    %1888 = vmatpush1.bf16.msra.mxu0 %v1281
    %1889 = vmatprep.subr.bf16.mxu0 %v1290
    %1890 = vmatpush1.bf16.msra.mxu0 %v1289
    %1891 = vmatprep.subr.bf16.mxu0 %v1298
    %1892 = vmatpush1.bf16.msra.mxu0 %v1297
    %1893 = vmatprep.subr.bf16.mxu0 %v1306
    %1894 = vmatpush1.bf16.msra.mxu0 %v1305
    %1895 = vmatprep.subr.bf16.mxu0 %v1314
    %1896 = vmatpush1.bf16.msra.mxu0 %v1313
    %1897 = vmatprep.mubr.bf16.mxu0 %v120
    %1898 = vmatmul.mubr.bf16.gmra.mrb[0].mxu0 %v119
    %v1899 = vpop.f32.mrb[0].mxu0
    %v1900 = vadd.f32 %v400, %v1899
    %v1901 = vpop.f32.mrb[0].mxu0
    %v1902 = vadd.f32 %v404, %v1901
    %v1903 = vpop.f32.mrb[0].mxu0
    %v1904 = vpop.f32.mrb[0].mxu0
    %1905 = vdwg.mxu0
    %1906 = vmatprep.subr.bf16.mxu0 %v1322
    %1907 = vmatpush1.bf16.msra.mxu0 %v1321
    %1908 = vmatprep.subr.bf16.mxu0 %v1330
    %1909 = vmatpush1.bf16.msra.mxu0 %v1329
    %1910 = vmatprep.subr.bf16.mxu0 %v1338
    %1911 = vmatpush1.bf16.msra.mxu0 %v1337
    %1912 = vmatprep.subr.bf16.mxu0 %v1346
    %1913 = vmatpush1.bf16.msra.mxu0 %v1345
    %1914 = vmatprep.subr.bf16.mxu0 %v1354
    %1915 = vmatpush1.bf16.msra.mxu0 %v1353
    %1916 = vmatprep.subr.bf16.mxu0 %v1362
    %1917 = vmatpush1.bf16.msra.mxu0 %v1361
    %1918 = vmatprep.subr.bf16.mxu0 %v1370
    %1919 = vmatpush1.bf16.msra.mxu0 %v1369
    %1920 = vmatprep.subr.bf16.mxu0 %v1378
    %1921 = vmatpush1.bf16.msra.mxu0 %v1377
    %1922 = vmatprep.subr.bf16.mxu0 %v1386
    %1923 = vmatpush1.bf16.msra.mxu0 %v1385
    %1924 = vmatprep.subr.bf16.mxu0 %v1394
    %1925 = vmatpush1.bf16.msra.mxu0 %v1393
    %1926 = vmatprep.subr.bf16.mxu0 %v1402
    %1927 = vmatpush1.bf16.msra.mxu0 %v1401
    %1928 = vmatprep.subr.bf16.mxu0 %v1410
    %1929 = vmatpush1.bf16.msra.mxu0 %v1409
    %1930 = vmatprep.subr.bf16.mxu0 %v1418
    %1931 = vmatpush1.bf16.msra.mxu0 %v1417
    %1932 = vmatprep.subr.bf16.mxu0 %v1426
    %1933 = vmatpush1.bf16.msra.mxu0 %v1425
    %1934 = vmatprep.subr.bf16.mxu0 %v1434
    %1935 = vmatpush1.bf16.msra.mxu0 %v1433
    %1936 = vmatprep.subr.bf16.mxu0 %v1442
    %1937 = vmatpush1.bf16.msra.mxu0 %v1441
    %1938 = vmatprep.mubr.bf16.mxu0 %v122
    %1939 = vmatmul.mubr.bf16.gmra.mrb[0].mxu0 %v121
    %v1940 = vpop.f32.mrb[0].mxu0
    %v1941 = vadd.f32 %v1900, %v1940
    %v1942 = vpop.f32.mrb[0].mxu0
    %v1943 = vadd.f32 %v1902, %v1942
    %v1944 = vpop.f32.mrb[0].mxu0
    %v1945 = vpop.f32.mrb[0].mxu0
    %1946 = vdwg.mxu0
    %1947 = vmatprep.subr.bf16.mxu0 %v1196
    %1948 = vmatpush1.bf16.msra.mxu0 %v1195
    %1949 = vmatprep.subr.bf16.mxu0 %v1204
    %1950 = vmatpush1.bf16.msra.mxu0 %v1203
    %1951 = vmatprep.subr.bf16.mxu0 %v1212
    %1952 = vmatpush1.bf16.msra.mxu0 %v1211
    %1953 = vmatprep.subr.bf16.mxu0 %v1220
    %1954 = vmatpush1.bf16.msra.mxu0 %v1219
    %1955 = vmatprep.subr.bf16.mxu0 %v1228
    %1956 = vmatpush1.bf16.msra.mxu0 %v1227
    %1957 = vmatprep.subr.bf16.mxu0 %v1236
    %1958 = vmatpush1.bf16.msra.mxu0 %v1235
    %1959 = vmatprep.subr.bf16.mxu0 %v1244
    %1960 = vmatpush1.bf16.msra.mxu0 %v1243
    %1961 = vmatprep.subr.bf16.mxu0 %v1252
    %1962 = vmatpush1.bf16.msra.mxu0 %v1251
    %1963 = vmatprep.subr.bf16.mxu0 %v1260
    %1964 = vmatpush1.bf16.msra.mxu0 %v1259
    %1965 = vmatprep.subr.bf16.mxu0 %v1268
    %1966 = vmatpush1.bf16.msra.mxu0 %v1267
    %1967 = vmatprep.subr.bf16.mxu0 %v1276
    %1968 = vmatpush1.bf16.msra.mxu0 %v1275
    %1969 = vmatprep.subr.bf16.mxu0 %v1284
    %1970 = vmatpush1.bf16.msra.mxu0 %v1283
    %1971 = vmatprep.subr.bf16.mxu0 %v1292
    %1972 = vmatpush1.bf16.msra.mxu0 %v1291
    %1973 = vmatprep.subr.bf16.mxu0 %v1300
    %1974 = vmatpush1.bf16.msra.mxu0 %v1299
    %1975 = vmatprep.subr.bf16.mxu0 %v1308
    %1976 = vmatpush1.bf16.msra.mxu0 %v1307
    %1977 = vmatprep.subr.bf16.mxu0 %v1316
    %1978 = vmatpush1.bf16.msra.mxu0 %v1315
    %1979 = vmatprep.mubr.bf16.mxu0 %v120
    %1980 = vmatmul.mubr.bf16.gmra.mrb[0].mxu0 %v119
    %v1981 = vpop.f32.mrb[0].mxu0
    %v1982 = vadd.f32 %v408, %v1981
    %v1983 = vpop.f32.mrb[0].mxu0
    %v1984 = vadd.f32 %v412, %v1983
    %v1985 = vpop.f32.mrb[0].mxu0
    %v1986 = vpop.f32.mrb[0].mxu0
    %1987 = vdwg.mxu0
    %1988 = vmatprep.subr.bf16.mxu0 %v1324
    %1989 = vmatpush1.bf16.msra.mxu0 %v1323
    %1990 = vmatprep.subr.bf16.mxu0 %v1332
    %1991 = vmatpush1.bf16.msra.mxu0 %v1331
    %1992 = vmatprep.subr.bf16.mxu0 %v1340
    %1993 = vmatpush1.bf16.msra.mxu0 %v1339
    %1994 = vmatprep.subr.bf16.mxu0 %v1348
    %1995 = vmatpush1.bf16.msra.mxu0 %v1347
    %1996 = vmatprep.subr.bf16.mxu0 %v1356
    %1997 = vmatpush1.bf16.msra.mxu0 %v1355
    %1998 = vmatprep.subr.bf16.mxu0 %v1364
    %1999 = vmatpush1.bf16.msra.mxu0 %v1363
    %2000 = vmatprep.subr.bf16.mxu0 %v1372
    %2001 = vmatpush1.bf16.msra.mxu0 %v1371
    %2002 = vmatprep.subr.bf16.mxu0 %v1380
    %2003 = vmatpush1.bf16.msra.mxu0 %v1379
    %2004 = vmatprep.subr.bf16.mxu0 %v1388
    %2005 = vmatpush1.bf16.msra.mxu0 %v1387
    %2006 = vmatprep.subr.bf16.mxu0 %v1396
    %2007 = vmatpush1.bf16.msra.mxu0 %v1395
    %2008 = vmatprep.subr.bf16.mxu0 %v1404
    %2009 = vmatpush1.bf16.msra.mxu0 %v1403
    %2010 = vmatprep.subr.bf16.mxu0 %v1412
    %2011 = vmatpush1.bf16.msra.mxu0 %v1411
    %2012 = vmatprep.subr.bf16.mxu0 %v1420
    %2013 = vmatpush1.bf16.msra.mxu0 %v1419
    %2014 = vmatprep.subr.bf16.mxu0 %v1428
    %2015 = vmatpush1.bf16.msra.mxu0 %v1427
    %2016 = vmatprep.subr.bf16.mxu0 %v1436
    %2017 = vmatpush1.bf16.msra.mxu0 %v1435
    %2018 = vmatprep.subr.bf16.mxu0 %v1444
    %2019 = vmatpush1.bf16.msra.mxu0 %v1443
    %2020 = vmatprep.mubr.bf16.mxu0 %v122
    %2021 = vmatmul.mubr.bf16.gmra.mrb[0].mxu0 %v121
    %v2022 = vpop.f32.mrb[0].mxu0
    %v2023 = vadd.f32 %v1982, %v2022
    %v2024 = vpop.f32.mrb[0].mxu0
    %v2025 = vadd.f32 %v1984, %v2024
    %v2026 = vpop.f32.mrb[0].mxu0
    %v2027 = vpop.f32.mrb[0].mxu0
    %2028 = vdwg.mxu0
    %v2029 = vmax.f32 %v1777, 0.0
    %v2030 = vmax.f32 %v1779, 0.0
    %v2031 = vmax.f32 %v1859, 0.0
    %v2032 = vmax.f32 %v1861, 0.0
    %v2033 = vmax.f32 %v1941, 0.0
    %v2034 = vmax.f32 %v1943, 0.0
    %v2035 = vmax.f32 %v2023, 0.0
    %v2036 = vmax.f32 %v2025, 0.0
    %v2037 = vpack.c.bf16 %v2029, %v2029
    %v2038 = vpack.c.bf16 %v2030, %v2030
    %v2039 = vpack.c.bf16 %v2031, %v2031
    %v2040 = vpack.c.bf16 %v2032, %v2032
    %v2041 = vpack.c.bf16 %v2033, %v2033
    %v2042 = vpack.c.bf16 %v2034, %v2034
    %v2043 = vpack.c.bf16 %v2035, %v2035
    %v2044 = vpack.c.bf16 %v2036, %v2036
    %v2045 = vld [vmem:[#allocation8] sm:$0xff]
    %v2046 = vld [vmem:[#allocation8 + $0x8] sm:$0xff]
    %v2047 = vld [vmem:[#allocation8 + $0x10] sm:$0xff]
    %v2048 = vld [vmem:[#allocation8 + $0x18] sm:$0xff]
    %v2049 = vld [vmem:[#allocation8 + $0x20] sm:$0xff]
    %v2050 = vld [vmem:[#allocation8 + $0x28] sm:$0xff]
    %v2051 = vld [vmem:[#allocation8 + $0x30] sm:$0xff]
    %v2052 = vld [vmem:[#allocation8 + $0x38] sm:$0xff]
    %v2053 = vld [vmem:[#allocation8 + $0x40] sm:$0xff]
    %v2054 = vld [vmem:[#allocation8 + $0x48] sm:$0xff]
    %v2055 = vld [vmem:[#allocation8 + $0x50] sm:$0xff]
    %v2056 = vld [vmem:[#allocation8 + $0x58] sm:$0xff]
    %v2057 = vld [vmem:[#allocation8 + $0x60] sm:$0xff]
    %v2058 = vld [vmem:[#allocation8 + $0x68] sm:$0xff]
    %v2059 = vld [vmem:[#allocation8 + $0x70] sm:$0xff]
    %v2060 = vld [vmem:[#allocation8 + $0x78] sm:$0xff]
    %v2061 = vld [vmem:[#allocation8 + $0x80] sm:$0xff]
    %v2062 = vld [vmem:[#allocation8 + $0x88] sm:$0xff]
    %v2063 = vld [vmem:[#allocation8 + $0x90] sm:$0xff]
    %v2064 = vld [vmem:[#allocation8 + $0x98] sm:$0xff]
    %v2065 = vld [vmem:[#allocation8 + $0xa0] sm:$0xff]
    %v2066 = vld [vmem:[#allocation8 + $0xa8] sm:$0xff]
    %v2067 = vld [vmem:[#allocation8 + $0xb0] sm:$0xff]
    %v2068 = vld [vmem:[#allocation8 + $0xb8] sm:$0xff]
    %v2069 = vld [vmem:[#allocation8 + $0xc0] sm:$0xff]
    %v2070 = vld [vmem:[#allocation8 + $0xc8] sm:$0xff]
    %v2071 = vld [vmem:[#allocation8 + $0xd0] sm:$0xff]
    %v2072 = vld [vmem:[#allocation8 + $0xd8] sm:$0xff]
    %v2073 = vld [vmem:[#allocation8 + $0xe0] sm:$0xff]
    %v2074 = vld [vmem:[#allocation8 + $0xe8] sm:$0xff]
    %v2075 = vld [vmem:[#allocation8 + $0xf0] sm:$0xff]
    %v2076 = vld [vmem:[#allocation8 + $0xf8] sm:$0xff]
    %v2077 = vld [vmem:[#allocation8 + $0x100] sm:$0xff]
    %v2078 = vld [vmem:[#allocation8 + $0x108] sm:$0xff]
    %v2079 = vld [vmem:[#allocation8 + $0x110] sm:$0xff]
    %v2080 = vld [vmem:[#allocation8 + $0x118] sm:$0xff]
    %v2081 = vld [vmem:[#allocation8 + $0x120] sm:$0xff]
    %v2082 = vld [vmem:[#allocation8 + $0x128] sm:$0xff]
    %v2083 = vld [vmem:[#allocation8 + $0x130] sm:$0xff]
    %v2084 = vld [vmem:[#allocation8 + $0x138] sm:$0xff]
    %v2085 = vld [vmem:[#allocation8 + $0x140] sm:$0xff]
    %v2086 = vld [vmem:[#allocation8 + $0x148] sm:$0xff]
    %v2087 = vld [vmem:[#allocation8 + $0x150] sm:$0xff]
    %v2088 = vld [vmem:[#allocation8 + $0x158] sm:$0xff]
    %v2089 = vld [vmem:[#allocation8 + $0x160] sm:$0xff]
    %v2090 = vld [vmem:[#allocation8 + $0x168] sm:$0xff]
    %v2091 = vld [vmem:[#allocation8 + $0x170] sm:$0xff]
    %v2092 = vld [vmem:[#allocation8 + $0x178] sm:$0xff]
    %v2093 = vld [vmem:[#allocation8 + $0x180] sm:$0xff]
    %v2094 = vld [vmem:[#allocation8 + $0x188] sm:$0xff]
    %v2095 = vld [vmem:[#allocation8 + $0x190] sm:$0xff]
    %v2096 = vld [vmem:[#allocation8 + $0x198] sm:$0xff]
    %v2097 = vld [vmem:[#allocation8 + $0x1a0] sm:$0xff]
    %v2098 = vld [vmem:[#allocation8 + $0x1a8] sm:$0xff]
    %v2099 = vld [vmem:[#allocation8 + $0x1b0] sm:$0xff]
    %v2100 = vld [vmem:[#allocation8 + $0x1b8] sm:$0xff]
    %v2101 = vld [vmem:[#allocation8 + $0x1c0] sm:$0xff]
    %v2102 = vld [vmem:[#allocation8 + $0x1c8] sm:$0xff]
    %v2103 = vld [vmem:[#allocation8 + $0x1d0] sm:$0xff]
    %v2104 = vld [vmem:[#allocation8 + $0x1d8] sm:$0xff]
    %v2105 = vld [vmem:[#allocation8 + $0x1e0] sm:$0xff]
    %v2106 = vld [vmem:[#allocation8 + $0x1e8] sm:$0xff]
    %v2107 = vld [vmem:[#allocation8 + $0x1f0] sm:$0xff]
    %v2108 = vld [vmem:[#allocation8 + $0x1f8] sm:$0xff]
    %v2109 = vld [vmem:[#allocation8 + $0x200] sm:$0xff]
    %v2110 = vld [vmem:[#allocation8 + $0x208] sm:$0xff]
    %v2111 = vld [vmem:[#allocation8 + $0x210] sm:$0xff]
    %v2112 = vld [vmem:[#allocation8 + $0x218] sm:$0xff]
    %v2113 = vld [vmem:[#allocation8 + $0x220] sm:$0xff]
    %v2114 = vld [vmem:[#allocation8 + $0x228] sm:$0xff]
    %v2115 = vld [vmem:[#allocation8 + $0x230] sm:$0xff]
    %v2116 = vld [vmem:[#allocation8 + $0x238] sm:$0xff]
    %v2117 = vld [vmem:[#allocation8 + $0x240] sm:$0xff]
    %v2118 = vld [vmem:[#allocation8 + $0x248] sm:$0xff]
    %v2119 = vld [vmem:[#allocation8 + $0x250] sm:$0xff]
    %v2120 = vld [vmem:[#allocation8 + $0x258] sm:$0xff]
    %v2121 = vld [vmem:[#allocation8 + $0x260] sm:$0xff]
    %v2122 = vld [vmem:[#allocation8 + $0x268] sm:$0xff]
    %v2123 = vld [vmem:[#allocation8 + $0x270] sm:$0xff]
    %v2124 = vld [vmem:[#allocation8 + $0x278] sm:$0xff]
    %v2125 = vld [vmem:[#allocation8 + $0x280] sm:$0xff]
    %v2126 = vld [vmem:[#allocation8 + $0x288] sm:$0xff]
    %v2127 = vld [vmem:[#allocation8 + $0x290] sm:$0xff]
    %v2128 = vld [vmem:[#allocation8 + $0x298] sm:$0xff]
    %v2129 = vld [vmem:[#allocation8 + $0x2a0] sm:$0xff]
    %v2130 = vld [vmem:[#allocation8 + $0x2a8] sm:$0xff]
    %v2131 = vld [vmem:[#allocation8 + $0x2b0] sm:$0xff]
    %v2132 = vld [vmem:[#allocation8 + $0x2b8] sm:$0xff]
    %v2133 = vld [vmem:[#allocation8 + $0x2c0] sm:$0xff]
    %v2134 = vld [vmem:[#allocation8 + $0x2c8] sm:$0xff]
    %v2135 = vld [vmem:[#allocation8 + $0x2d0] sm:$0xff]
    %v2136 = vld [vmem:[#allocation8 + $0x2d8] sm:$0xff]
    %v2137 = vld [vmem:[#allocation8 + $0x2e0] sm:$0xff]
    %v2138 = vld [vmem:[#allocation8 + $0x2e8] sm:$0xff]
    %v2139 = vld [vmem:[#allocation8 + $0x2f0] sm:$0xff]
    %v2140 = vld [vmem:[#allocation8 + $0x2f8] sm:$0xff]
    %v2141 = vld [vmem:[#allocation8 + $0x300] sm:$0xff]
    %v2142 = vld [vmem:[#allocation8 + $0x308] sm:$0xff]
    %v2143 = vld [vmem:[#allocation8 + $0x310] sm:$0xff]
    %v2144 = vld [vmem:[#allocation8 + $0x318] sm:$0xff]
    %v2145 = vld [vmem:[#allocation8 + $0x320] sm:$0xff]
    %v2146 = vld [vmem:[#allocation8 + $0x328] sm:$0xff]
    %v2147 = vld [vmem:[#allocation8 + $0x330] sm:$0xff]
    %v2148 = vld [vmem:[#allocation8 + $0x338] sm:$0xff]
    %v2149 = vld [vmem:[#allocation8 + $0x340] sm:$0xff]
    %v2150 = vld [vmem:[#allocation8 + $0x348] sm:$0xff]
    %v2151 = vld [vmem:[#allocation8 + $0x350] sm:$0xff]
    %v2152 = vld [vmem:[#allocation8 + $0x358] sm:$0xff]
    %v2153 = vld [vmem:[#allocation8 + $0x360] sm:$0xff]
    %v2154 = vld [vmem:[#allocation8 + $0x368] sm:$0xff]
    %v2155 = vld [vmem:[#allocation8 + $0x370] sm:$0xff]
    %v2156 = vld [vmem:[#allocation8 + $0x378] sm:$0xff]
    %v2157 = vld [vmem:[#allocation8 + $0x380] sm:$0xff]
    %v2158 = vld [vmem:[#allocation8 + $0x388] sm:$0xff]
    %v2159 = vld [vmem:[#allocation8 + $0x390] sm:$0xff]
    %v2160 = vld [vmem:[#allocation8 + $0x398] sm:$0xff]
    %v2161 = vld [vmem:[#allocation8 + $0x3a0] sm:$0xff]
    %v2162 = vld [vmem:[#allocation8 + $0x3a8] sm:$0xff]
    %v2163 = vld [vmem:[#allocation8 + $0x3b0] sm:$0xff]
    %v2164 = vld [vmem:[#allocation8 + $0x3b8] sm:$0xff]
    %v2165 = vld [vmem:[#allocation8 + $0x3c0] sm:$0xff]
    %v2166 = vld [vmem:[#allocation8 + $0x3c8] sm:$0xff]
    %v2167 = vld [vmem:[#allocation8 + $0x3d0] sm:$0xff]
    %v2168 = vld [vmem:[#allocation8 + $0x3d8] sm:$0xff]
    %v2169 = vld [vmem:[#allocation8 + $0x3e0] sm:$0xff]
    %v2170 = vld [vmem:[#allocation8 + $0x3e8] sm:$0xff]
    %v2171 = vld [vmem:[#allocation8 + $0x3f0] sm:$0xff]
    %v2172 = vld [vmem:[#allocation8 + $0x3f8] sm:$0xff]
    %v2173 = vld [vmem:[#allocation8 + $0x400] sm:$0xff]
    %v2174 = vld [vmem:[#allocation8 + $0x408] sm:$0xff]
    %v2175 = vld [vmem:[#allocation8 + $0x410] sm:$0xff]
    %v2176 = vld [vmem:[#allocation8 + $0x418] sm:$0xff]
    %v2177 = vld [vmem:[#allocation8 + $0x420] sm:$0xff]
    %v2178 = vld [vmem:[#allocation8 + $0x428] sm:$0xff]
    %v2179 = vld [vmem:[#allocation8 + $0x430] sm:$0xff]
    %v2180 = vld [vmem:[#allocation8 + $0x438] sm:$0xff]
    %v2181 = vld [vmem:[#allocation8 + $0x440] sm:$0xff]
    %v2182 = vld [vmem:[#allocation8 + $0x448] sm:$0xff]
    %v2183 = vld [vmem:[#allocation8 + $0x450] sm:$0xff]
    %v2184 = vld [vmem:[#allocation8 + $0x458] sm:$0xff]
    %v2185 = vld [vmem:[#allocation8 + $0x460] sm:$0xff]
    %v2186 = vld [vmem:[#allocation8 + $0x468] sm:$0xff]
    %v2187 = vld [vmem:[#allocation8 + $0x470] sm:$0xff]
    %v2188 = vld [vmem:[#allocation8 + $0x478] sm:$0xff]
    %v2189 = vld [vmem:[#allocation8 + $0x480] sm:$0xff]
    %v2190 = vld [vmem:[#allocation8 + $0x488] sm:$0xff]
    %v2191 = vld [vmem:[#allocation8 + $0x490] sm:$0xff]
    %v2192 = vld [vmem:[#allocation8 + $0x498] sm:$0xff]
    %v2193 = vld [vmem:[#allocation8 + $0x4a0] sm:$0xff]
    %v2194 = vld [vmem:[#allocation8 + $0x4a8] sm:$0xff]
    %v2195 = vld [vmem:[#allocation8 + $0x4b0] sm:$0xff]
    %v2196 = vld [vmem:[#allocation8 + $0x4b8] sm:$0xff]
    %v2197 = vld [vmem:[#allocation8 + $0x4c0] sm:$0xff]
    %v2198 = vld [vmem:[#allocation8 + $0x4c8] sm:$0xff]
    %v2199 = vld [vmem:[#allocation8 + $0x4d0] sm:$0xff]
    %v2200 = vld [vmem:[#allocation8 + $0x4d8] sm:$0xff]
    %v2201 = vld [vmem:[#allocation8 + $0x4e0] sm:$0xff]
    %v2202 = vld [vmem:[#allocation8 + $0x4e8] sm:$0xff]
    %v2203 = vld [vmem:[#allocation8 + $0x4f0] sm:$0xff]
    %v2204 = vld [vmem:[#allocation8 + $0x4f8] sm:$0xff]
    %v2205 = vld [vmem:[#allocation8 + $0x500] sm:$0xff]
    %v2206 = vld [vmem:[#allocation8 + $0x508] sm:$0xff]
    %v2207 = vld [vmem:[#allocation8 + $0x510] sm:$0xff]
    %v2208 = vld [vmem:[#allocation8 + $0x518] sm:$0xff]
    %v2209 = vld [vmem:[#allocation8 + $0x520] sm:$0xff]
    %v2210 = vld [vmem:[#allocation8 + $0x528] sm:$0xff]
    %v2211 = vld [vmem:[#allocation8 + $0x530] sm:$0xff]
    %v2212 = vld [vmem:[#allocation8 + $0x538] sm:$0xff]
    %v2213 = vld [vmem:[#allocation8 + $0x540] sm:$0xff]
    %v2214 = vld [vmem:[#allocation8 + $0x548] sm:$0xff]
    %v2215 = vld [vmem:[#allocation8 + $0x550] sm:$0xff]
    %v2216 = vld [vmem:[#allocation8 + $0x558] sm:$0xff]
    %v2217 = vld [vmem:[#allocation8 + $0x560] sm:$0xff]
    %v2218 = vld [vmem:[#allocation8 + $0x568] sm:$0xff]
    %v2219 = vld [vmem:[#allocation8 + $0x570] sm:$0xff]
    %v2220 = vld [vmem:[#allocation8 + $0x578] sm:$0xff]
    %v2221 = vld [vmem:[#allocation8 + $0x580] sm:$0xff]
    %v2222 = vld [vmem:[#allocation8 + $0x588] sm:$0xff]
    %v2223 = vld [vmem:[#allocation8 + $0x590] sm:$0xff]
    %v2224 = vld [vmem:[#allocation8 + $0x598] sm:$0xff]
    %v2225 = vld [vmem:[#allocation8 + $0x5a0] sm:$0xff]
    %v2226 = vld [vmem:[#allocation8 + $0x5a8] sm:$0xff]
    %v2227 = vld [vmem:[#allocation8 + $0x5b0] sm:$0xff]
    %v2228 = vld [vmem:[#allocation8 + $0x5b8] sm:$0xff]
    %v2229 = vld [vmem:[#allocation8 + $0x5c0] sm:$0xff]
    %v2230 = vld [vmem:[#allocation8 + $0x5c8] sm:$0xff]
    %v2231 = vld [vmem:[#allocation8 + $0x5d0] sm:$0xff]
    %v2232 = vld [vmem:[#allocation8 + $0x5d8] sm:$0xff]
    %v2233 = vld [vmem:[#allocation8 + $0x5e0] sm:$0xff]
    %v2234 = vld [vmem:[#allocation8 + $0x5e8] sm:$0xff]
    %v2235 = vld [vmem:[#allocation8 + $0x5f0] sm:$0xff]
    %v2236 = vld [vmem:[#allocation8 + $0x5f8] sm:$0xff]
    %v2237 = vld [vmem:[#allocation8 + $0x600] sm:$0xff]
    %v2238 = vld [vmem:[#allocation8 + $0x608] sm:$0xff]
    %v2239 = vld [vmem:[#allocation8 + $0x610] sm:$0xff]
    %v2240 = vld [vmem:[#allocation8 + $0x618] sm:$0xff]
    %v2241 = vld [vmem:[#allocation8 + $0x620] sm:$0xff]
    %v2242 = vld [vmem:[#allocation8 + $0x628] sm:$0xff]
    %v2243 = vld [vmem:[#allocation8 + $0x630] sm:$0xff]
    %v2244 = vld [vmem:[#allocation8 + $0x638] sm:$0xff]
    %v2245 = vld [vmem:[#allocation8 + $0x640] sm:$0xff]
    %v2246 = vld [vmem:[#allocation8 + $0x648] sm:$0xff]
    %v2247 = vld [vmem:[#allocation8 + $0x650] sm:$0xff]
    %v2248 = vld [vmem:[#allocation8 + $0x658] sm:$0xff]
    %v2249 = vld [vmem:[#allocation8 + $0x660] sm:$0xff]
    %v2250 = vld [vmem:[#allocation8 + $0x668] sm:$0xff]
    %v2251 = vld [vmem:[#allocation8 + $0x670] sm:$0xff]
    %v2252 = vld [vmem:[#allocation8 + $0x678] sm:$0xff]
    %v2253 = vld [vmem:[#allocation8 + $0x680] sm:$0xff]
    %v2254 = vld [vmem:[#allocation8 + $0x688] sm:$0xff]
    %v2255 = vld [vmem:[#allocation8 + $0x690] sm:$0xff]
    %v2256 = vld [vmem:[#allocation8 + $0x698] sm:$0xff]
    %v2257 = vld [vmem:[#allocation8 + $0x6a0] sm:$0xff]
    %v2258 = vld [vmem:[#allocation8 + $0x6a8] sm:$0xff]
    %v2259 = vld [vmem:[#allocation8 + $0x6b0] sm:$0xff]
    %v2260 = vld [vmem:[#allocation8 + $0x6b8] sm:$0xff]
    %v2261 = vld [vmem:[#allocation8 + $0x6c0] sm:$0xff]
    %v2262 = vld [vmem:[#allocation8 + $0x6c8] sm:$0xff]
    %v2263 = vld [vmem:[#allocation8 + $0x6d0] sm:$0xff]
    %v2264 = vld [vmem:[#allocation8 + $0x6d8] sm:$0xff]
    %v2265 = vld [vmem:[#allocation8 + $0x6e0] sm:$0xff]
    %v2266 = vld [vmem:[#allocation8 + $0x6e8] sm:$0xff]
    %v2267 = vld [vmem:[#allocation8 + $0x6f0] sm:$0xff]
    %v2268 = vld [vmem:[#allocation8 + $0x6f8] sm:$0xff]
    %v2269 = vld [vmem:[#allocation8 + $0x700] sm:$0xff]
    %v2270 = vld [vmem:[#allocation8 + $0x708] sm:$0xff]
    %v2271 = vld [vmem:[#allocation8 + $0x710] sm:$0xff]
    %v2272 = vld [vmem:[#allocation8 + $0x718] sm:$0xff]
    %v2273 = vld [vmem:[#allocation8 + $0x720] sm:$0xff]
    %v2274 = vld [vmem:[#allocation8 + $0x728] sm:$0xff]
    %v2275 = vld [vmem:[#allocation8 + $0x730] sm:$0xff]
    %v2276 = vld [vmem:[#allocation8 + $0x738] sm:$0xff]
    %v2277 = vld [vmem:[#allocation8 + $0x740] sm:$0xff]
    %v2278 = vld [vmem:[#allocation8 + $0x748] sm:$0xff]
    %v2279 = vld [vmem:[#allocation8 + $0x750] sm:$0xff]
    %v2280 = vld [vmem:[#allocation8 + $0x758] sm:$0xff]
    %v2281 = vld [vmem:[#allocation8 + $0x760] sm:$0xff]
    %v2282 = vld [vmem:[#allocation8 + $0x768] sm:$0xff]
    %v2283 = vld [vmem:[#allocation8 + $0x770] sm:$0xff]
    %v2284 = vld [vmem:[#allocation8 + $0x778] sm:$0xff]
    %v2285 = vld [vmem:[#allocation8 + $0x780] sm:$0xff]
    %v2286 = vld [vmem:[#allocation8 + $0x788] sm:$0xff]
    %v2287 = vld [vmem:[#allocation8 + $0x790] sm:$0xff]
    %v2288 = vld [vmem:[#allocation8 + $0x798] sm:$0xff]
    %v2289 = vld [vmem:[#allocation8 + $0x7a0] sm:$0xff]
    %v2290 = vld [vmem:[#allocation8 + $0x7a8] sm:$0xff]
    %v2291 = vld [vmem:[#allocation8 + $0x7b0] sm:$0xff]
    %v2292 = vld [vmem:[#allocation8 + $0x7b8] sm:$0xff]
    %v2293 = vld [vmem:[#allocation8 + $0x7c0] sm:$0xff]
    %v2294 = vld [vmem:[#allocation8 + $0x7c8] sm:$0xff]
    %v2295 = vld [vmem:[#allocation8 + $0x7d0] sm:$0xff]
    %v2296 = vld [vmem:[#allocation8 + $0x7d8] sm:$0xff]
    %v2297 = vld [vmem:[#allocation8 + $0x7e0] sm:$0xff]
    %v2298 = vld [vmem:[#allocation8 + $0x7e8] sm:$0xff]
    %v2299 = vld [vmem:[#allocation8 + $0x7f0] sm:$0xff]
    %v2300 = vld [vmem:[#allocation8 + $0x7f8] sm:$0xff]
    %v2301 = vld [vmem:[#allocation10] sm:$0xf]
    %v2303 = vlaneseq
    %v2304 = vshrl.u32 %v2303, 7
    %v2305 = vsub.s32 0, %v2304
    %v2306 = vrot.slane %v2301, %v2305
    %v2307 = vlaneseq
    %v2308 = vshrl.u32 %v2307, 7
    %v2309 = vsub.s32 1, %v2308
    %v2310 = vrot.slane %v2301, %v2309
    %v2311 = vlaneseq
    %v2312 = vshrl.u32 %v2311, 7
    %v2313 = vsub.s32 2, %v2312
    %v2314 = vrot.slane %v2301, %v2313
    %v2315 = vlaneseq
    %v2316 = vshrl.u32 %v2315, 7
    %v2317 = vsub.s32 3, %v2316
    %v2318 = vrot.slane %v2301, %v2317
    %v2579 = vunpack.c.l.b16 %v2045
    %v2580 = vunpack.c.h.b16 %v2045
    %v2581 = vunpack.c.l.b16 %v2046
    %v2582 = vunpack.c.h.b16 %v2046
    %v2583 = vunpack.c.l.b16 %v2047
    %v2584 = vunpack.c.h.b16 %v2047
    %v2585 = vunpack.c.l.b16 %v2048
    %v2586 = vunpack.c.h.b16 %v2048
    %v2587 = vunpack.c.l.b16 %v2049
    %v2588 = vunpack.c.h.b16 %v2049
    %v2589 = vunpack.c.l.b16 %v2050
    %v2590 = vunpack.c.h.b16 %v2050
    %v2591 = vunpack.c.l.b16 %v2051
    %v2592 = vunpack.c.h.b16 %v2051
    %v2593 = vunpack.c.l.b16 %v2052
    %v2594 = vunpack.c.h.b16 %v2052
    %v2595 = vunpack.c.l.b16 %v2053
    %v2596 = vunpack.c.h.b16 %v2053
    %v2597 = vunpack.c.l.b16 %v2054
    %v2598 = vunpack.c.h.b16 %v2054
    %v2599 = vunpack.c.l.b16 %v2055
    %v2600 = vunpack.c.h.b16 %v2055
    %v2601 = vunpack.c.l.b16 %v2056
    %v2602 = vunpack.c.h.b16 %v2056
    %v2603 = vunpack.c.l.b16 %v2057
    %v2604 = vunpack.c.h.b16 %v2057
    %v2605 = vunpack.c.l.b16 %v2058
    %v2606 = vunpack.c.h.b16 %v2058
    %v2607 = vunpack.c.l.b16 %v2059
    %v2608 = vunpack.c.h.b16 %v2059
    %v2609 = vunpack.c.l.b16 %v2060
    %v2610 = vunpack.c.h.b16 %v2060
    %v2611 = vunpack.c.l.b16 %v2061
    %v2612 = vunpack.c.h.b16 %v2061
    %v2613 = vunpack.c.l.b16 %v2062
    %v2614 = vunpack.c.h.b16 %v2062
    %v2615 = vunpack.c.l.b16 %v2063
    %v2616 = vunpack.c.h.b16 %v2063
    %v2617 = vunpack.c.l.b16 %v2064
    %v2618 = vunpack.c.h.b16 %v2064
    %v2619 = vunpack.c.l.b16 %v2065
    %v2620 = vunpack.c.h.b16 %v2065
    %v2621 = vunpack.c.l.b16 %v2066
    %v2622 = vunpack.c.h.b16 %v2066
    %v2623 = vunpack.c.l.b16 %v2067
    %v2624 = vunpack.c.h.b16 %v2067
    %v2625 = vunpack.c.l.b16 %v2068
    %v2626 = vunpack.c.h.b16 %v2068
    %v2627 = vunpack.c.l.b16 %v2069
    %v2628 = vunpack.c.h.b16 %v2069
    %v2629 = vunpack.c.l.b16 %v2070
    %v2630 = vunpack.c.h.b16 %v2070
    %v2631 = vunpack.c.l.b16 %v2071
    %v2632 = vunpack.c.h.b16 %v2071
    %v2633 = vunpack.c.l.b16 %v2072
    %v2634 = vunpack.c.h.b16 %v2072
    %v2635 = vunpack.c.l.b16 %v2073
    %v2636 = vunpack.c.h.b16 %v2073
    %v2637 = vunpack.c.l.b16 %v2074
    %v2638 = vunpack.c.h.b16 %v2074
    %v2639 = vunpack.c.l.b16 %v2075
    %v2640 = vunpack.c.h.b16 %v2075
    %v2641 = vunpack.c.l.b16 %v2076
    %v2642 = vunpack.c.h.b16 %v2076
    %v2643 = vunpack.c.l.b16 %v2077
    %v2644 = vunpack.c.h.b16 %v2077
    %v2645 = vunpack.c.l.b16 %v2078
    %v2646 = vunpack.c.h.b16 %v2078
    %v2647 = vunpack.c.l.b16 %v2079
    %v2648 = vunpack.c.h.b16 %v2079
    %v2649 = vunpack.c.l.b16 %v2080
    %v2650 = vunpack.c.h.b16 %v2080
    %v2651 = vunpack.c.l.b16 %v2081
    %v2652 = vunpack.c.h.b16 %v2081
    %v2653 = vunpack.c.l.b16 %v2082
    %v2654 = vunpack.c.h.b16 %v2082
    %v2655 = vunpack.c.l.b16 %v2083
    %v2656 = vunpack.c.h.b16 %v2083
    %v2657 = vunpack.c.l.b16 %v2084
    %v2658 = vunpack.c.h.b16 %v2084
    %v2659 = vunpack.c.l.b16 %v2085
    %v2660 = vunpack.c.h.b16 %v2085
    %v2661 = vunpack.c.l.b16 %v2086
    %v2662 = vunpack.c.h.b16 %v2086
    %v2663 = vunpack.c.l.b16 %v2087
    %v2664 = vunpack.c.h.b16 %v2087
    %v2665 = vunpack.c.l.b16 %v2088
    %v2666 = vunpack.c.h.b16 %v2088
    %v2667 = vunpack.c.l.b16 %v2089
    %v2668 = vunpack.c.h.b16 %v2089
    %v2669 = vunpack.c.l.b16 %v2090
    %v2670 = vunpack.c.h.b16 %v2090
    %v2671 = vunpack.c.l.b16 %v2091
    %v2672 = vunpack.c.h.b16 %v2091
    %v2673 = vunpack.c.l.b16 %v2092
    %v2674 = vunpack.c.h.b16 %v2092
    %v2675 = vunpack.c.l.b16 %v2093
    %v2676 = vunpack.c.h.b16 %v2093
    %v2677 = vunpack.c.l.b16 %v2094
    %v2678 = vunpack.c.h.b16 %v2094
    %v2679 = vunpack.c.l.b16 %v2095
    %v2680 = vunpack.c.h.b16 %v2095
    %v2681 = vunpack.c.l.b16 %v2096
    %v2682 = vunpack.c.h.b16 %v2096
    %v2683 = vunpack.c.l.b16 %v2097
    %v2684 = vunpack.c.h.b16 %v2097
    %v2685 = vunpack.c.l.b16 %v2098
    %v2686 = vunpack.c.h.b16 %v2098
    %v2687 = vunpack.c.l.b16 %v2099
    %v2688 = vunpack.c.h.b16 %v2099
    %v2689 = vunpack.c.l.b16 %v2100
    %v2690 = vunpack.c.h.b16 %v2100
    %v2691 = vunpack.c.l.b16 %v2101
    %v2692 = vunpack.c.h.b16 %v2101
    %v2693 = vunpack.c.l.b16 %v2102
    %v2694 = vunpack.c.h.b16 %v2102
    %v2695 = vunpack.c.l.b16 %v2103
    %v2696 = vunpack.c.h.b16 %v2103
    %v2697 = vunpack.c.l.b16 %v2104
    %v2698 = vunpack.c.h.b16 %v2104
    %v2699 = vunpack.c.l.b16 %v2105
    %v2700 = vunpack.c.h.b16 %v2105
    %v2701 = vunpack.c.l.b16 %v2106
    %v2702 = vunpack.c.h.b16 %v2106
    %v2703 = vunpack.c.l.b16 %v2107
    %v2704 = vunpack.c.h.b16 %v2107
    %v2705 = vunpack.c.l.b16 %v2108
    %v2706 = vunpack.c.h.b16 %v2108
    %v2707 = vunpack.c.l.b16 %v2109
    %v2708 = vunpack.c.h.b16 %v2109
    %v2709 = vunpack.c.l.b16 %v2110
    %v2710 = vunpack.c.h.b16 %v2110
    %v2711 = vunpack.c.l.b16 %v2111
    %v2712 = vunpack.c.h.b16 %v2111
    %v2713 = vunpack.c.l.b16 %v2112
    %v2714 = vunpack.c.h.b16 %v2112
    %v2715 = vunpack.c.l.b16 %v2113
    %v2716 = vunpack.c.h.b16 %v2113
    %v2717 = vunpack.c.l.b16 %v2114
    %v2718 = vunpack.c.h.b16 %v2114
    %v2719 = vunpack.c.l.b16 %v2115
    %v2720 = vunpack.c.h.b16 %v2115
    %v2721 = vunpack.c.l.b16 %v2116
    %v2722 = vunpack.c.h.b16 %v2116
    %v2723 = vunpack.c.l.b16 %v2117
    %v2724 = vunpack.c.h.b16 %v2117
    %v2725 = vunpack.c.l.b16 %v2118
    %v2726 = vunpack.c.h.b16 %v2118
    %v2727 = vunpack.c.l.b16 %v2119
    %v2728 = vunpack.c.h.b16 %v2119
    %v2729 = vunpack.c.l.b16 %v2120
    %v2730 = vunpack.c.h.b16 %v2120
    %v2731 = vunpack.c.l.b16 %v2121
    %v2732 = vunpack.c.h.b16 %v2121
    %v2733 = vunpack.c.l.b16 %v2122
    %v2734 = vunpack.c.h.b16 %v2122
    %v2735 = vunpack.c.l.b16 %v2123
    %v2736 = vunpack.c.h.b16 %v2123
    %v2737 = vunpack.c.l.b16 %v2124
    %v2738 = vunpack.c.h.b16 %v2124
    %v2739 = vunpack.c.l.b16 %v2125
    %v2740 = vunpack.c.h.b16 %v2125
    %v2741 = vunpack.c.l.b16 %v2126
    %v2742 = vunpack.c.h.b16 %v2126
    %v2743 = vunpack.c.l.b16 %v2127
    %v2744 = vunpack.c.h.b16 %v2127
    %v2745 = vunpack.c.l.b16 %v2128
    %v2746 = vunpack.c.h.b16 %v2128
    %v2747 = vunpack.c.l.b16 %v2129
    %v2748 = vunpack.c.h.b16 %v2129
    %v2749 = vunpack.c.l.b16 %v2130
    %v2750 = vunpack.c.h.b16 %v2130
    %v2751 = vunpack.c.l.b16 %v2131
    %v2752 = vunpack.c.h.b16 %v2131
    %v2753 = vunpack.c.l.b16 %v2132
    %v2754 = vunpack.c.h.b16 %v2132
    %v2755 = vunpack.c.l.b16 %v2133
    %v2756 = vunpack.c.h.b16 %v2133
    %v2757 = vunpack.c.l.b16 %v2134
    %v2758 = vunpack.c.h.b16 %v2134
    %v2759 = vunpack.c.l.b16 %v2135
    %v2760 = vunpack.c.h.b16 %v2135
    %v2761 = vunpack.c.l.b16 %v2136
    %v2762 = vunpack.c.h.b16 %v2136
    %v2763 = vunpack.c.l.b16 %v2137
    %v2764 = vunpack.c.h.b16 %v2137
    %v2765 = vunpack.c.l.b16 %v2138
    %v2766 = vunpack.c.h.b16 %v2138
    %v2767 = vunpack.c.l.b16 %v2139
    %v2768 = vunpack.c.h.b16 %v2139
    %v2769 = vunpack.c.l.b16 %v2140
    %v2770 = vunpack.c.h.b16 %v2140
    %v2771 = vunpack.c.l.b16 %v2141
    %v2772 = vunpack.c.h.b16 %v2141
    %v2773 = vunpack.c.l.b16 %v2142
    %v2774 = vunpack.c.h.b16 %v2142
    %v2775 = vunpack.c.l.b16 %v2143
    %v2776 = vunpack.c.h.b16 %v2143
    %v2777 = vunpack.c.l.b16 %v2144
    %v2778 = vunpack.c.h.b16 %v2144
    %v2779 = vunpack.c.l.b16 %v2145
    %v2780 = vunpack.c.h.b16 %v2145
    %v2781 = vunpack.c.l.b16 %v2146
    %v2782 = vunpack.c.h.b16 %v2146
    %v2783 = vunpack.c.l.b16 %v2147
    %v2784 = vunpack.c.h.b16 %v2147
    %v2785 = vunpack.c.l.b16 %v2148
    %v2786 = vunpack.c.h.b16 %v2148
    %v2787 = vunpack.c.l.b16 %v2149
    %v2788 = vunpack.c.h.b16 %v2149
    %v2789 = vunpack.c.l.b16 %v2150
    %v2790 = vunpack.c.h.b16 %v2150
    %v2791 = vunpack.c.l.b16 %v2151
    %v2792 = vunpack.c.h.b16 %v2151
    %v2793 = vunpack.c.l.b16 %v2152
    %v2794 = vunpack.c.h.b16 %v2152
    %v2795 = vunpack.c.l.b16 %v2153
    %v2796 = vunpack.c.h.b16 %v2153
    %v2797 = vunpack.c.l.b16 %v2154
    %v2798 = vunpack.c.h.b16 %v2154
    %v2799 = vunpack.c.l.b16 %v2155
    %v2800 = vunpack.c.h.b16 %v2155
    %v2801 = vunpack.c.l.b16 %v2156
    %v2802 = vunpack.c.h.b16 %v2156
    %v2803 = vunpack.c.l.b16 %v2157
    %v2804 = vunpack.c.h.b16 %v2157
    %v2805 = vunpack.c.l.b16 %v2158
    %v2806 = vunpack.c.h.b16 %v2158
    %v2807 = vunpack.c.l.b16 %v2159
    %v2808 = vunpack.c.h.b16 %v2159
    %v2809 = vunpack.c.l.b16 %v2160
    %v2810 = vunpack.c.h.b16 %v2160
    %v2811 = vunpack.c.l.b16 %v2161
    %v2812 = vunpack.c.h.b16 %v2161
    %v2813 = vunpack.c.l.b16 %v2162
    %v2814 = vunpack.c.h.b16 %v2162
    %v2815 = vunpack.c.l.b16 %v2163
    %v2816 = vunpack.c.h.b16 %v2163
    %v2817 = vunpack.c.l.b16 %v2164
    %v2818 = vunpack.c.h.b16 %v2164
    %v2819 = vunpack.c.l.b16 %v2165
    %v2820 = vunpack.c.h.b16 %v2165
    %v2821 = vunpack.c.l.b16 %v2166
    %v2822 = vunpack.c.h.b16 %v2166
    %v2823 = vunpack.c.l.b16 %v2167
    %v2824 = vunpack.c.h.b16 %v2167
    %v2825 = vunpack.c.l.b16 %v2168
    %v2826 = vunpack.c.h.b16 %v2168
    %v2827 = vunpack.c.l.b16 %v2169
    %v2828 = vunpack.c.h.b16 %v2169
    %v2829 = vunpack.c.l.b16 %v2170
    %v2830 = vunpack.c.h.b16 %v2170
    %v2831 = vunpack.c.l.b16 %v2171
    %v2832 = vunpack.c.h.b16 %v2171
    %v2833 = vunpack.c.l.b16 %v2172
    %v2834 = vunpack.c.h.b16 %v2172
    %v2835 = vunpack.c.l.b16 %v2173
    %v2836 = vunpack.c.h.b16 %v2173
    %v2837 = vunpack.c.l.b16 %v2174
    %v2838 = vunpack.c.h.b16 %v2174
    %v2839 = vunpack.c.l.b16 %v2175
    %v2840 = vunpack.c.h.b16 %v2175
    %v2841 = vunpack.c.l.b16 %v2176
    %v2842 = vunpack.c.h.b16 %v2176
    %v2843 = vunpack.c.l.b16 %v2177
    %v2844 = vunpack.c.h.b16 %v2177
    %v2845 = vunpack.c.l.b16 %v2178
    %v2846 = vunpack.c.h.b16 %v2178
    %v2847 = vunpack.c.l.b16 %v2179
    %v2848 = vunpack.c.h.b16 %v2179
    %v2849 = vunpack.c.l.b16 %v2180
    %v2850 = vunpack.c.h.b16 %v2180
    %v2851 = vunpack.c.l.b16 %v2181
    %v2852 = vunpack.c.h.b16 %v2181
    %v2853 = vunpack.c.l.b16 %v2182
    %v2854 = vunpack.c.h.b16 %v2182
    %v2855 = vunpack.c.l.b16 %v2183
    %v2856 = vunpack.c.h.b16 %v2183
    %v2857 = vunpack.c.l.b16 %v2184
    %v2858 = vunpack.c.h.b16 %v2184
    %v2859 = vunpack.c.l.b16 %v2185
    %v2860 = vunpack.c.h.b16 %v2185
    %v2861 = vunpack.c.l.b16 %v2186
    %v2862 = vunpack.c.h.b16 %v2186
    %v2863 = vunpack.c.l.b16 %v2187
    %v2864 = vunpack.c.h.b16 %v2187
    %v2865 = vunpack.c.l.b16 %v2188
    %v2866 = vunpack.c.h.b16 %v2188
    %v2867 = vunpack.c.l.b16 %v2189
    %v2868 = vunpack.c.h.b16 %v2189
    %v2869 = vunpack.c.l.b16 %v2190
    %v2870 = vunpack.c.h.b16 %v2190
    %v2871 = vunpack.c.l.b16 %v2191
    %v2872 = vunpack.c.h.b16 %v2191
    %v2873 = vunpack.c.l.b16 %v2192
    %v2874 = vunpack.c.h.b16 %v2192
    %v2875 = vunpack.c.l.b16 %v2193
    %v2876 = vunpack.c.h.b16 %v2193
    %v2877 = vunpack.c.l.b16 %v2194
    %v2878 = vunpack.c.h.b16 %v2194
    %v2879 = vunpack.c.l.b16 %v2195
    %v2880 = vunpack.c.h.b16 %v2195
    %v2881 = vunpack.c.l.b16 %v2196
    %v2882 = vunpack.c.h.b16 %v2196
    %v2883 = vunpack.c.l.b16 %v2197
    %v2884 = vunpack.c.h.b16 %v2197
    %v2885 = vunpack.c.l.b16 %v2198
    %v2886 = vunpack.c.h.b16 %v2198
    %v2887 = vunpack.c.l.b16 %v2199
    %v2888 = vunpack.c.h.b16 %v2199
    %v2889 = vunpack.c.l.b16 %v2200
    %v2890 = vunpack.c.h.b16 %v2200
    %v2891 = vunpack.c.l.b16 %v2201
    %v2892 = vunpack.c.h.b16 %v2201
    %v2893 = vunpack.c.l.b16 %v2202
    %v2894 = vunpack.c.h.b16 %v2202
    %v2895 = vunpack.c.l.b16 %v2203
    %v2896 = vunpack.c.h.b16 %v2203
    %v2897 = vunpack.c.l.b16 %v2204
    %v2898 = vunpack.c.h.b16 %v2204
    %v2899 = vunpack.c.l.b16 %v2205
    %v2900 = vunpack.c.h.b16 %v2205
    %v2901 = vunpack.c.l.b16 %v2206
    %v2902 = vunpack.c.h.b16 %v2206
    %v2903 = vunpack.c.l.b16 %v2207
    %v2904 = vunpack.c.h.b16 %v2207
    %v2905 = vunpack.c.l.b16 %v2208
    %v2906 = vunpack.c.h.b16 %v2208
    %v2907 = vunpack.c.l.b16 %v2209
    %v2908 = vunpack.c.h.b16 %v2209
    %v2909 = vunpack.c.l.b16 %v2210
    %v2910 = vunpack.c.h.b16 %v2210
    %v2911 = vunpack.c.l.b16 %v2211
    %v2912 = vunpack.c.h.b16 %v2211
    %v2913 = vunpack.c.l.b16 %v2212
    %v2914 = vunpack.c.h.b16 %v2212
    %v2915 = vunpack.c.l.b16 %v2213
    %v2916 = vunpack.c.h.b16 %v2213
    %v2917 = vunpack.c.l.b16 %v2214
    %v2918 = vunpack.c.h.b16 %v2214
    %v2919 = vunpack.c.l.b16 %v2215
    %v2920 = vunpack.c.h.b16 %v2215
    %v2921 = vunpack.c.l.b16 %v2216
    %v2922 = vunpack.c.h.b16 %v2216
    %v2923 = vunpack.c.l.b16 %v2217
    %v2924 = vunpack.c.h.b16 %v2217
    %v2925 = vunpack.c.l.b16 %v2218
    %v2926 = vunpack.c.h.b16 %v2218
    %v2927 = vunpack.c.l.b16 %v2219
    %v2928 = vunpack.c.h.b16 %v2219
    %v2929 = vunpack.c.l.b16 %v2220
    %v2930 = vunpack.c.h.b16 %v2220
    %v2931 = vunpack.c.l.b16 %v2221
    %v2932 = vunpack.c.h.b16 %v2221
    %v2933 = vunpack.c.l.b16 %v2222
    %v2934 = vunpack.c.h.b16 %v2222
    %v2935 = vunpack.c.l.b16 %v2223
    %v2936 = vunpack.c.h.b16 %v2223
    %v2937 = vunpack.c.l.b16 %v2224
    %v2938 = vunpack.c.h.b16 %v2224
    %v2939 = vunpack.c.l.b16 %v2225
    %v2940 = vunpack.c.h.b16 %v2225
    %v2941 = vunpack.c.l.b16 %v2226
    %v2942 = vunpack.c.h.b16 %v2226
    %v2943 = vunpack.c.l.b16 %v2227
    %v2944 = vunpack.c.h.b16 %v2227
    %v2945 = vunpack.c.l.b16 %v2228
    %v2946 = vunpack.c.h.b16 %v2228
    %v2947 = vunpack.c.l.b16 %v2229
    %v2948 = vunpack.c.h.b16 %v2229
    %v2949 = vunpack.c.l.b16 %v2230
    %v2950 = vunpack.c.h.b16 %v2230
    %v2951 = vunpack.c.l.b16 %v2231
    %v2952 = vunpack.c.h.b16 %v2231
    %v2953 = vunpack.c.l.b16 %v2232
    %v2954 = vunpack.c.h.b16 %v2232
    %v2955 = vunpack.c.l.b16 %v2233
    %v2956 = vunpack.c.h.b16 %v2233
    %v2957 = vunpack.c.l.b16 %v2234
    %v2958 = vunpack.c.h.b16 %v2234
    %v2959 = vunpack.c.l.b16 %v2235
    %v2960 = vunpack.c.h.b16 %v2235
    %v2961 = vunpack.c.l.b16 %v2236
    %v2962 = vunpack.c.h.b16 %v2236
    %v2963 = vunpack.c.l.b16 %v2237
    %v2964 = vunpack.c.h.b16 %v2237
    %v2965 = vunpack.c.l.b16 %v2238
    %v2966 = vunpack.c.h.b16 %v2238
    %v2967 = vunpack.c.l.b16 %v2239
    %v2968 = vunpack.c.h.b16 %v2239
    %v2969 = vunpack.c.l.b16 %v2240
    %v2970 = vunpack.c.h.b16 %v2240
    %v2971 = vunpack.c.l.b16 %v2241
    %v2972 = vunpack.c.h.b16 %v2241
    %v2973 = vunpack.c.l.b16 %v2242
    %v2974 = vunpack.c.h.b16 %v2242
    %v2975 = vunpack.c.l.b16 %v2243
    %v2976 = vunpack.c.h.b16 %v2243
    %v2977 = vunpack.c.l.b16 %v2244
    %v2978 = vunpack.c.h.b16 %v2244
    %v2979 = vunpack.c.l.b16 %v2245
    %v2980 = vunpack.c.h.b16 %v2245
    %v2981 = vunpack.c.l.b16 %v2246
    %v2982 = vunpack.c.h.b16 %v2246
    %v2983 = vunpack.c.l.b16 %v2247
    %v2984 = vunpack.c.h.b16 %v2247
    %v2985 = vunpack.c.l.b16 %v2248
    %v2986 = vunpack.c.h.b16 %v2248
    %v2987 = vunpack.c.l.b16 %v2249
    %v2988 = vunpack.c.h.b16 %v2249
    %v2989 = vunpack.c.l.b16 %v2250
    %v2990 = vunpack.c.h.b16 %v2250
    %v2991 = vunpack.c.l.b16 %v2251
    %v2992 = vunpack.c.h.b16 %v2251
    %v2993 = vunpack.c.l.b16 %v2252
    %v2994 = vunpack.c.h.b16 %v2252
    %v2995 = vunpack.c.l.b16 %v2253
    %v2996 = vunpack.c.h.b16 %v2253
    %v2997 = vunpack.c.l.b16 %v2254
    %v2998 = vunpack.c.h.b16 %v2254
    %v2999 = vunpack.c.l.b16 %v2255
    %v3000 = vunpack.c.h.b16 %v2255
    %v3001 = vunpack.c.l.b16 %v2256
    %v3002 = vunpack.c.h.b16 %v2256
    %v3003 = vunpack.c.l.b16 %v2257
    %v3004 = vunpack.c.h.b16 %v2257
    %v3005 = vunpack.c.l.b16 %v2258
    %v3006 = vunpack.c.h.b16 %v2258
    %v3007 = vunpack.c.l.b16 %v2259
    %v3008 = vunpack.c.h.b16 %v2259
    %v3009 = vunpack.c.l.b16 %v2260
    %v3010 = vunpack.c.h.b16 %v2260
    %v3011 = vunpack.c.l.b16 %v2261
    %v3012 = vunpack.c.h.b16 %v2261
    %v3013 = vunpack.c.l.b16 %v2262
    %v3014 = vunpack.c.h.b16 %v2262
    %v3015 = vunpack.c.l.b16 %v2263
    %v3016 = vunpack.c.h.b16 %v2263
    %v3017 = vunpack.c.l.b16 %v2264
    %v3018 = vunpack.c.h.b16 %v2264
    %v3019 = vunpack.c.l.b16 %v2265
    %v3020 = vunpack.c.h.b16 %v2265
    %v3021 = vunpack.c.l.b16 %v2266
    %v3022 = vunpack.c.h.b16 %v2266
    %v3023 = vunpack.c.l.b16 %v2267
    %v3024 = vunpack.c.h.b16 %v2267
    %v3025 = vunpack.c.l.b16 %v2268
    %v3026 = vunpack.c.h.b16 %v2268
    %v3027 = vunpack.c.l.b16 %v2269
    %v3028 = vunpack.c.h.b16 %v2269
    %v3029 = vunpack.c.l.b16 %v2270
    %v3030 = vunpack.c.h.b16 %v2270
    %v3031 = vunpack.c.l.b16 %v2271
    %v3032 = vunpack.c.h.b16 %v2271
    %v3033 = vunpack.c.l.b16 %v2272
    %v3034 = vunpack.c.h.b16 %v2272
    %v3035 = vunpack.c.l.b16 %v2273
    %v3036 = vunpack.c.h.b16 %v2273
    %v3037 = vunpack.c.l.b16 %v2274
    %v3038 = vunpack.c.h.b16 %v2274
    %v3039 = vunpack.c.l.b16 %v2275
    %v3040 = vunpack.c.h.b16 %v2275
    %v3041 = vunpack.c.l.b16 %v2276
    %v3042 = vunpack.c.h.b16 %v2276
    %v3043 = vunpack.c.l.b16 %v2277
    %v3044 = vunpack.c.h.b16 %v2277
    %v3045 = vunpack.c.l.b16 %v2278
    %v3046 = vunpack.c.h.b16 %v2278
    %v3047 = vunpack.c.l.b16 %v2279
    %v3048 = vunpack.c.h.b16 %v2279
    %v3049 = vunpack.c.l.b16 %v2280
    %v3050 = vunpack.c.h.b16 %v2280
    %v3051 = vunpack.c.l.b16 %v2281
    %v3052 = vunpack.c.h.b16 %v2281
    %v3053 = vunpack.c.l.b16 %v2282
    %v3054 = vunpack.c.h.b16 %v2282
    %v3055 = vunpack.c.l.b16 %v2283
    %v3056 = vunpack.c.h.b16 %v2283
    %v3057 = vunpack.c.l.b16 %v2284
    %v3058 = vunpack.c.h.b16 %v2284
    %v3059 = vunpack.c.l.b16 %v2285
    %v3060 = vunpack.c.h.b16 %v2285
    %v3061 = vunpack.c.l.b16 %v2286
    %v3062 = vunpack.c.h.b16 %v2286
    %v3063 = vunpack.c.l.b16 %v2287
    %v3064 = vunpack.c.h.b16 %v2287
    %v3065 = vunpack.c.l.b16 %v2288
    %v3066 = vunpack.c.h.b16 %v2288
    %v3067 = vunpack.c.l.b16 %v2289
    %v3068 = vunpack.c.h.b16 %v2289
    %v3069 = vunpack.c.l.b16 %v2290
    %v3070 = vunpack.c.h.b16 %v2290
    %v3071 = vunpack.c.l.b16 %v2291
    %v3072 = vunpack.c.h.b16 %v2291
    %v3073 = vunpack.c.l.b16 %v2292
    %v3074 = vunpack.c.h.b16 %v2292
    %v3075 = vunpack.c.l.b16 %v2293
    %v3076 = vunpack.c.h.b16 %v2293
    %v3077 = vunpack.c.l.b16 %v2294
    %v3078 = vunpack.c.h.b16 %v2294
    %v3079 = vunpack.c.l.b16 %v2295
    %v3080 = vunpack.c.h.b16 %v2295
    %v3081 = vunpack.c.l.b16 %v2296
    %v3082 = vunpack.c.h.b16 %v2296
    %v3083 = vunpack.c.l.b16 %v2297
    %v3084 = vunpack.c.h.b16 %v2297
    %v3085 = vunpack.c.l.b16 %v2298
    %v3086 = vunpack.c.h.b16 %v2298
    %v3087 = vunpack.c.l.b16 %v2299
    %v3088 = vunpack.c.h.b16 %v2299
    %v3089 = vunpack.c.l.b16 %v2300
    %v3090 = vunpack.c.h.b16 %v2300
    %v3091 = vpack.c.b16 %v2583, %v2579
    %v3092 = vpack.c.b16 %v2584, %v2580
    %v3093 = vpack.c.b16 %v2585, %v2581
    %v3094 = vpack.c.b16 %v2586, %v2582
    %v3095 = vpack.c.b16 %v2591, %v2587
    %v3096 = vpack.c.b16 %v2592, %v2588
    %v3097 = vpack.c.b16 %v2593, %v2589
    %v3098 = vpack.c.b16 %v2594, %v2590
    %v3099 = vpack.c.b16 %v2599, %v2595
    %v3100 = vpack.c.b16 %v2600, %v2596
    %v3101 = vpack.c.b16 %v2601, %v2597
    %v3102 = vpack.c.b16 %v2602, %v2598
    %v3103 = vpack.c.b16 %v2607, %v2603
    %v3104 = vpack.c.b16 %v2608, %v2604
    %v3105 = vpack.c.b16 %v2609, %v2605
    %v3106 = vpack.c.b16 %v2610, %v2606
    %v3107 = vpack.c.b16 %v2615, %v2611
    %v3108 = vpack.c.b16 %v2616, %v2612
    %v3109 = vpack.c.b16 %v2617, %v2613
    %v3110 = vpack.c.b16 %v2618, %v2614
    %v3111 = vpack.c.b16 %v2623, %v2619
    %v3112 = vpack.c.b16 %v2624, %v2620
    %v3113 = vpack.c.b16 %v2625, %v2621
    %v3114 = vpack.c.b16 %v2626, %v2622
    %v3115 = vpack.c.b16 %v2631, %v2627
    %v3116 = vpack.c.b16 %v2632, %v2628
    %v3117 = vpack.c.b16 %v2633, %v2629
    %v3118 = vpack.c.b16 %v2634, %v2630
    %v3119 = vpack.c.b16 %v2639, %v2635
    %v3120 = vpack.c.b16 %v2640, %v2636
    %v3121 = vpack.c.b16 %v2641, %v2637
    %v3122 = vpack.c.b16 %v2642, %v2638
    %v3123 = vpack.c.b16 %v2647, %v2643
    %v3124 = vpack.c.b16 %v2648, %v2644
    %v3125 = vpack.c.b16 %v2649, %v2645
    %v3126 = vpack.c.b16 %v2650, %v2646
    %v3127 = vpack.c.b16 %v2655, %v2651
    %v3128 = vpack.c.b16 %v2656, %v2652
    %v3129 = vpack.c.b16 %v2657, %v2653
    %v3130 = vpack.c.b16 %v2658, %v2654
    %v3131 = vpack.c.b16 %v2663, %v2659
    %v3132 = vpack.c.b16 %v2664, %v2660
    %v3133 = vpack.c.b16 %v2665, %v2661
    %v3134 = vpack.c.b16 %v2666, %v2662
    %v3135 = vpack.c.b16 %v2671, %v2667
    %v3136 = vpack.c.b16 %v2672, %v2668
    %v3137 = vpack.c.b16 %v2673, %v2669
    %v3138 = vpack.c.b16 %v2674, %v2670
    %v3139 = vpack.c.b16 %v2679, %v2675
    %v3140 = vpack.c.b16 %v2680, %v2676
    %v3141 = vpack.c.b16 %v2681, %v2677
    %v3142 = vpack.c.b16 %v2682, %v2678
    %v3143 = vpack.c.b16 %v2687, %v2683
    %v3144 = vpack.c.b16 %v2688, %v2684
    %v3145 = vpack.c.b16 %v2689, %v2685
    %v3146 = vpack.c.b16 %v2690, %v2686
    %v3147 = vpack.c.b16 %v2695, %v2691
    %v3148 = vpack.c.b16 %v2696, %v2692
    %v3149 = vpack.c.b16 %v2697, %v2693
    %v3150 = vpack.c.b16 %v2698, %v2694
    %v3151 = vpack.c.b16 %v2703, %v2699
    %v3152 = vpack.c.b16 %v2704, %v2700
    %v3153 = vpack.c.b16 %v2705, %v2701
    %v3154 = vpack.c.b16 %v2706, %v2702
    %v3155 = vpack.c.b16 %v2711, %v2707
    %v3156 = vpack.c.b16 %v2712, %v2708
    %v3157 = vpack.c.b16 %v2713, %v2709
    %v3158 = vpack.c.b16 %v2714, %v2710
    %v3159 = vpack.c.b16 %v2719, %v2715
    %v3160 = vpack.c.b16 %v2720, %v2716
    %v3161 = vpack.c.b16 %v2721, %v2717
    %v3162 = vpack.c.b16 %v2722, %v2718
    %v3163 = vpack.c.b16 %v2727, %v2723
    %v3164 = vpack.c.b16 %v2728, %v2724
    %v3165 = vpack.c.b16 %v2729, %v2725
    %v3166 = vpack.c.b16 %v2730, %v2726
    %v3167 = vpack.c.b16 %v2735, %v2731
    %v3168 = vpack.c.b16 %v2736, %v2732
    %v3169 = vpack.c.b16 %v2737, %v2733
    %v3170 = vpack.c.b16 %v2738, %v2734
    %v3171 = vpack.c.b16 %v2743, %v2739
    %v3172 = vpack.c.b16 %v2744, %v2740
    %v3173 = vpack.c.b16 %v2745, %v2741
    %v3174 = vpack.c.b16 %v2746, %v2742
    %v3175 = vpack.c.b16 %v2751, %v2747
    %v3176 = vpack.c.b16 %v2752, %v2748
    %v3177 = vpack.c.b16 %v2753, %v2749
    %v3178 = vpack.c.b16 %v2754, %v2750
    %v3179 = vpack.c.b16 %v2759, %v2755
    %v3180 = vpack.c.b16 %v2760, %v2756
    %v3181 = vpack.c.b16 %v2761, %v2757
    %v3182 = vpack.c.b16 %v2762, %v2758
    %v3183 = vpack.c.b16 %v2767, %v2763
    %v3184 = vpack.c.b16 %v2768, %v2764
    %v3185 = vpack.c.b16 %v2769, %v2765
    %v3186 = vpack.c.b16 %v2770, %v2766
    %v3187 = vpack.c.b16 %v2775, %v2771
    %v3188 = vpack.c.b16 %v2776, %v2772
    %v3189 = vpack.c.b16 %v2777, %v2773
    %v3190 = vpack.c.b16 %v2778, %v2774
    %v3191 = vpack.c.b16 %v2783, %v2779
    %v3192 = vpack.c.b16 %v2784, %v2780
    %v3193 = vpack.c.b16 %v2785, %v2781
    %v3194 = vpack.c.b16 %v2786, %v2782
    %v3195 = vpack.c.b16 %v2791, %v2787
    %v3196 = vpack.c.b16 %v2792, %v2788
    %v3197 = vpack.c.b16 %v2793, %v2789
    %v3198 = vpack.c.b16 %v2794, %v2790
    %v3199 = vpack.c.b16 %v2799, %v2795
    %v3200 = vpack.c.b16 %v2800, %v2796
    %v3201 = vpack.c.b16 %v2801, %v2797
    %v3202 = vpack.c.b16 %v2802, %v2798
    %v3203 = vpack.c.b16 %v2807, %v2803
    %v3204 = vpack.c.b16 %v2808, %v2804
    %v3205 = vpack.c.b16 %v2809, %v2805
    %v3206 = vpack.c.b16 %v2810, %v2806
    %v3207 = vpack.c.b16 %v2815, %v2811
    %v3208 = vpack.c.b16 %v2816, %v2812
    %v3209 = vpack.c.b16 %v2817, %v2813
    %v3210 = vpack.c.b16 %v2818, %v2814
    %v3211 = vpack.c.b16 %v2823, %v2819
    %v3212 = vpack.c.b16 %v2824, %v2820
    %v3213 = vpack.c.b16 %v2825, %v2821
    %v3214 = vpack.c.b16 %v2826, %v2822
    %v3215 = vpack.c.b16 %v2831, %v2827
    %v3216 = vpack.c.b16 %v2832, %v2828
    %v3217 = vpack.c.b16 %v2833, %v2829
    %v3218 = vpack.c.b16 %v2834, %v2830
    %v3219 = vpack.c.b16 %v2839, %v2835
    %v3220 = vpack.c.b16 %v2840, %v2836
    %v3221 = vpack.c.b16 %v2841, %v2837
    %v3222 = vpack.c.b16 %v2842, %v2838
    %v3223 = vpack.c.b16 %v2847, %v2843
    %v3224 = vpack.c.b16 %v2848, %v2844
    %v3225 = vpack.c.b16 %v2849, %v2845
    %v3226 = vpack.c.b16 %v2850, %v2846
    %v3227 = vpack.c.b16 %v2855, %v2851
    %v3228 = vpack.c.b16 %v2856, %v2852
    %v3229 = vpack.c.b16 %v2857, %v2853
    %v3230 = vpack.c.b16 %v2858, %v2854
    %v3231 = vpack.c.b16 %v2863, %v2859
    %v3232 = vpack.c.b16 %v2864, %v2860
    %v3233 = vpack.c.b16 %v2865, %v2861
    %v3234 = vpack.c.b16 %v2866, %v2862
    %v3235 = vpack.c.b16 %v2871, %v2867
    %v3236 = vpack.c.b16 %v2872, %v2868
    %v3237 = vpack.c.b16 %v2873, %v2869
    %v3238 = vpack.c.b16 %v2874, %v2870
    %v3239 = vpack.c.b16 %v2879, %v2875
    %v3240 = vpack.c.b16 %v2880, %v2876
    %v3241 = vpack.c.b16 %v2881, %v2877
    %v3242 = vpack.c.b16 %v2882, %v2878
    %v3243 = vpack.c.b16 %v2887, %v2883
    %v3244 = vpack.c.b16 %v2888, %v2884
    %v3245 = vpack.c.b16 %v2889, %v2885
    %v3246 = vpack.c.b16 %v2890, %v2886
    %v3247 = vpack.c.b16 %v2895, %v2891
    %v3248 = vpack.c.b16 %v2896, %v2892
    %v3249 = vpack.c.b16 %v2897, %v2893
    %v3250 = vpack.c.b16 %v2898, %v2894
    %v3251 = vpack.c.b16 %v2903, %v2899
    %v3252 = vpack.c.b16 %v2904, %v2900
    %v3253 = vpack.c.b16 %v2905, %v2901
    %v3254 = vpack.c.b16 %v2906, %v2902
    %v3255 = vpack.c.b16 %v2911, %v2907
    %v3256 = vpack.c.b16 %v2912, %v2908
    %v3257 = vpack.c.b16 %v2913, %v2909
    %v3258 = vpack.c.b16 %v2914, %v2910
    %v3259 = vpack.c.b16 %v2919, %v2915
    %v3260 = vpack.c.b16 %v2920, %v2916
    %v3261 = vpack.c.b16 %v2921, %v2917
    %v3262 = vpack.c.b16 %v2922, %v2918
    %v3263 = vpack.c.b16 %v2927, %v2923
    %v3264 = vpack.c.b16 %v2928, %v2924
    %v3265 = vpack.c.b16 %v2929, %v2925
    %v3266 = vpack.c.b16 %v2930, %v2926
    %v3267 = vpack.c.b16 %v2935, %v2931
    %v3268 = vpack.c.b16 %v2936, %v2932
    %v3269 = vpack.c.b16 %v2937, %v2933
    %v3270 = vpack.c.b16 %v2938, %v2934
    %v3271 = vpack.c.b16 %v2943, %v2939
    %v3272 = vpack.c.b16 %v2944, %v2940
    %v3273 = vpack.c.b16 %v2945, %v2941
    %v3274 = vpack.c.b16 %v2946, %v2942
    %v3275 = vpack.c.b16 %v2951, %v2947
    %v3276 = vpack.c.b16 %v2952, %v2948
    %v3277 = vpack.c.b16 %v2953, %v2949
    %v3278 = vpack.c.b16 %v2954, %v2950
    %v3279 = vpack.c.b16 %v2959, %v2955
    %v3280 = vpack.c.b16 %v2960, %v2956
    %v3281 = vpack.c.b16 %v2961, %v2957
    %v3282 = vpack.c.b16 %v2962, %v2958
    %v3283 = vpack.c.b16 %v2967, %v2963
    %v3284 = vpack.c.b16 %v2968, %v2964
    %v3285 = vpack.c.b16 %v2969, %v2965
    %v3286 = vpack.c.b16 %v2970, %v2966
    %v3287 = vpack.c.b16 %v2975, %v2971
    %v3288 = vpack.c.b16 %v2976, %v2972
    %v3289 = vpack.c.b16 %v2977, %v2973
    %v3290 = vpack.c.b16 %v2978, %v2974
    %v3291 = vpack.c.b16 %v2983, %v2979
    %v3292 = vpack.c.b16 %v2984, %v2980
    %v3293 = vpack.c.b16 %v2985, %v2981
    %v3294 = vpack.c.b16 %v2986, %v2982
    %v3295 = vpack.c.b16 %v2991, %v2987
    %v3296 = vpack.c.b16 %v2992, %v2988
    %v3297 = vpack.c.b16 %v2993, %v2989
    %v3298 = vpack.c.b16 %v2994, %v2990
    %v3299 = vpack.c.b16 %v2999, %v2995
    %v3300 = vpack.c.b16 %v3000, %v2996
    %v3301 = vpack.c.b16 %v3001, %v2997
    %v3302 = vpack.c.b16 %v3002, %v2998
    %v3303 = vpack.c.b16 %v3007, %v3003
    %v3304 = vpack.c.b16 %v3008, %v3004
    %v3305 = vpack.c.b16 %v3009, %v3005
    %v3306 = vpack.c.b16 %v3010, %v3006
    %v3307 = vpack.c.b16 %v3015, %v3011
    %v3308 = vpack.c.b16 %v3016, %v3012
    %v3309 = vpack.c.b16 %v3017, %v3013
    %v3310 = vpack.c.b16 %v3018, %v3014
    %v3311 = vpack.c.b16 %v3023, %v3019
    %v3312 = vpack.c.b16 %v3024, %v3020
    %v3313 = vpack.c.b16 %v3025, %v3021
    %v3314 = vpack.c.b16 %v3026, %v3022
    %v3315 = vpack.c.b16 %v3031, %v3027
    %v3316 = vpack.c.b16 %v3032, %v3028
    %v3317 = vpack.c.b16 %v3033, %v3029
    %v3318 = vpack.c.b16 %v3034, %v3030
    %v3319 = vpack.c.b16 %v3039, %v3035
    %v3320 = vpack.c.b16 %v3040, %v3036
    %v3321 = vpack.c.b16 %v3041, %v3037
    %v3322 = vpack.c.b16 %v3042, %v3038
    %v3323 = vpack.c.b16 %v3047, %v3043
    %v3324 = vpack.c.b16 %v3048, %v3044
    %v3325 = vpack.c.b16 %v3049, %v3045
    %v3326 = vpack.c.b16 %v3050, %v3046
    %v3327 = vpack.c.b16 %v3055, %v3051
    %v3328 = vpack.c.b16 %v3056, %v3052
    %v3329 = vpack.c.b16 %v3057, %v3053
    %v3330 = vpack.c.b16 %v3058, %v3054
    %v3331 = vpack.c.b16 %v3063, %v3059
    %v3332 = vpack.c.b16 %v3064, %v3060
    %v3333 = vpack.c.b16 %v3065, %v3061
    %v3334 = vpack.c.b16 %v3066, %v3062
    %v3335 = vpack.c.b16 %v3071, %v3067
    %v3336 = vpack.c.b16 %v3072, %v3068
    %v3337 = vpack.c.b16 %v3073, %v3069
    %v3338 = vpack.c.b16 %v3074, %v3070
    %v3339 = vpack.c.b16 %v3079, %v3075
    %v3340 = vpack.c.b16 %v3080, %v3076
    %v3341 = vpack.c.b16 %v3081, %v3077
    %v3342 = vpack.c.b16 %v3082, %v3078
    %v3343 = vpack.c.b16 %v3087, %v3083
    %v3344 = vpack.c.b16 %v3088, %v3084
    %v3345 = vpack.c.b16 %v3089, %v3085
    %v3346 = vpack.c.b16 %v3090, %v3086
    %3603 = vmatprep.subr.bf16.mxu0 %v3092
    %3604 = vmatpush1.bf16.msra.mxu0 %v3091
    %3605 = vmatprep.subr.bf16.mxu0 %v3096
    %3606 = vmatpush1.bf16.msra.mxu0 %v3095
    %3607 = vmatprep.subr.bf16.mxu0 %v3100
    %3608 = vmatpush1.bf16.msra.mxu0 %v3099
    %3609 = vmatprep.subr.bf16.mxu0 %v3104
    %3610 = vmatpush1.bf16.msra.mxu0 %v3103
    %3611 = vmatprep.subr.bf16.mxu0 %v3108
    %3612 = vmatpush1.bf16.msra.mxu0 %v3107
    %3613 = vmatprep.subr.bf16.mxu0 %v3112
    %3614 = vmatpush1.bf16.msra.mxu0 %v3111
    %3615 = vmatprep.subr.bf16.mxu0 %v3116
    %3616 = vmatpush1.bf16.msra.mxu0 %v3115
    %3617 = vmatprep.subr.bf16.mxu0 %v3120
    %3618 = vmatpush1.bf16.msra.mxu0 %v3119
    %3619 = vmatprep.subr.bf16.mxu0 %v3124
    %3620 = vmatpush1.bf16.msra.mxu0 %v3123
    %3621 = vmatprep.subr.bf16.mxu0 %v3128
    %3622 = vmatpush1.bf16.msra.mxu0 %v3127
    %3623 = vmatprep.subr.bf16.mxu0 %v3132
    %3624 = vmatpush1.bf16.msra.mxu0 %v3131
    %3625 = vmatprep.subr.bf16.mxu0 %v3136
    %3626 = vmatpush1.bf16.msra.mxu0 %v3135
    %3627 = vmatprep.subr.bf16.mxu0 %v3140
    %3628 = vmatpush1.bf16.msra.mxu0 %v3139
    %3629 = vmatprep.subr.bf16.mxu0 %v3144
    %3630 = vmatpush1.bf16.msra.mxu0 %v3143
    %3631 = vmatprep.subr.bf16.mxu0 %v3148
    %3632 = vmatpush1.bf16.msra.mxu0 %v3147
    %3633 = vmatprep.subr.bf16.mxu0 %v3152
    %3634 = vmatpush1.bf16.msra.mxu0 %v3151
    %3635 = vmatprep.mubr.bf16.mxu0 %v2038
    %3636 = vmatmul.mubr.bf16.gmra.mrb[0].mxu0 %v2037
    %v3637 = vpop.f32.mrb[0].mxu0
    %v3638 = vadd.f32 %v2306, %v3637
    %v3639 = vpop.f32.mrb[0].mxu0
    %v3640 = vadd.f32 %v2310, %v3639
    %v3641 = vpop.f32.mrb[0].mxu0
    %v3642 = vpop.f32.mrb[0].mxu0
    %3643 = vdwg.mxu0
    %3644 = vmatprep.subr.bf16.mxu0 %v3156
    %3645 = vmatpush1.bf16.msra.mxu0 %v3155
    %3646 = vmatprep.subr.bf16.mxu0 %v3160
    %3647 = vmatpush1.bf16.msra.mxu0 %v3159
    %3648 = vmatprep.subr.bf16.mxu0 %v3164
    %3649 = vmatpush1.bf16.msra.mxu0 %v3163
    %3650 = vmatprep.subr.bf16.mxu0 %v3168
    %3651 = vmatpush1.bf16.msra.mxu0 %v3167
    %3652 = vmatprep.subr.bf16.mxu0 %v3172
    %3653 = vmatpush1.bf16.msra.mxu0 %v3171
    %3654 = vmatprep.subr.bf16.mxu0 %v3176
    %3655 = vmatpush1.bf16.msra.mxu0 %v3175
    %3656 = vmatprep.subr.bf16.mxu0 %v3180
    %3657 = vmatpush1.bf16.msra.mxu0 %v3179
    %3658 = vmatprep.subr.bf16.mxu0 %v3184
    %3659 = vmatpush1.bf16.msra.mxu0 %v3183
    %3660 = vmatprep.subr.bf16.mxu0 %v3188
    %3661 = vmatpush1.bf16.msra.mxu0 %v3187
    %3662 = vmatprep.subr.bf16.mxu0 %v3192
    %3663 = vmatpush1.bf16.msra.mxu0 %v3191
    %3664 = vmatprep.subr.bf16.mxu0 %v3196
    %3665 = vmatpush1.bf16.msra.mxu0 %v3195
    %3666 = vmatprep.subr.bf16.mxu0 %v3200
    %3667 = vmatpush1.bf16.msra.mxu0 %v3199
    %3668 = vmatprep.subr.bf16.mxu0 %v3204
    %3669 = vmatpush1.bf16.msra.mxu0 %v3203
    %3670 = vmatprep.subr.bf16.mxu0 %v3208
    %3671 = vmatpush1.bf16.msra.mxu0 %v3207
    %3672 = vmatprep.subr.bf16.mxu0 %v3212
    %3673 = vmatpush1.bf16.msra.mxu0 %v3211
    %3674 = vmatprep.subr.bf16.mxu0 %v3216
    %3675 = vmatpush1.bf16.msra.mxu0 %v3215
    %3676 = vmatprep.mubr.bf16.mxu0 %v2040
    %3677 = vmatmul.mubr.bf16.gmra.mrb[0].mxu0 %v2039
    %v3678 = vpop.f32.mrb[0].mxu0
    %v3679 = vadd.f32 %v3638, %v3678
    %v3680 = vpop.f32.mrb[0].mxu0
    %v3681 = vadd.f32 %v3640, %v3680
    %v3682 = vpop.f32.mrb[0].mxu0
    %v3683 = vpop.f32.mrb[0].mxu0
    %3684 = vdwg.mxu0
    %3685 = vmatprep.subr.bf16.mxu0 %v3220
    %3686 = vmatpush1.bf16.msra.mxu0 %v3219
    %3687 = vmatprep.subr.bf16.mxu0 %v3224
    %3688 = vmatpush1.bf16.msra.mxu0 %v3223
    %3689 = vmatprep.subr.bf16.mxu0 %v3228
    %3690 = vmatpush1.bf16.msra.mxu0 %v3227
    %3691 = vmatprep.subr.bf16.mxu0 %v3232
    %3692 = vmatpush1.bf16.msra.mxu0 %v3231
    %3693 = vmatprep.subr.bf16.mxu0 %v3236
    %3694 = vmatpush1.bf16.msra.mxu0 %v3235
    %3695 = vmatprep.subr.bf16.mxu0 %v3240
    %3696 = vmatpush1.bf16.msra.mxu0 %v3239
    %3697 = vmatprep.subr.bf16.mxu0 %v3244
    %3698 = vmatpush1.bf16.msra.mxu0 %v3243
    %3699 = vmatprep.subr.bf16.mxu0 %v3248
    %3700 = vmatpush1.bf16.msra.mxu0 %v3247
    %3701 = vmatprep.subr.bf16.mxu0 %v3252
    %3702 = vmatpush1.bf16.msra.mxu0 %v3251
    %3703 = vmatprep.subr.bf16.mxu0 %v3256
    %3704 = vmatpush1.bf16.msra.mxu0 %v3255
    %3705 = vmatprep.subr.bf16.mxu0 %v3260
    %3706 = vmatpush1.bf16.msra.mxu0 %v3259
    %3707 = vmatprep.subr.bf16.mxu0 %v3264
    %3708 = vmatpush1.bf16.msra.mxu0 %v3263
    %3709 = vmatprep.subr.bf16.mxu0 %v3268
    %3710 = vmatpush1.bf16.msra.mxu0 %v3267
    %3711 = vmatprep.subr.bf16.mxu0 %v3272
    %3712 = vmatpush1.bf16.msra.mxu0 %v3271
    %3713 = vmatprep.subr.bf16.mxu0 %v3276
    %3714 = vmatpush1.bf16.msra.mxu0 %v3275
    %3715 = vmatprep.subr.bf16.mxu0 %v3280
    %3716 = vmatpush1.bf16.msra.mxu0 %v3279
    %3717 = vmatprep.mubr.bf16.mxu0 %v2042
    %3718 = vmatmul.mubr.bf16.gmra.mrb[0].mxu0 %v2041
    %v3719 = vpop.f32.mrb[0].mxu0
    %v3720 = vadd.f32 %v3679, %v3719
    %v3721 = vpop.f32.mrb[0].mxu0
    %v3722 = vadd.f32 %v3681, %v3721
    %v3723 = vpop.f32.mrb[0].mxu0
    %v3724 = vpop.f32.mrb[0].mxu0
    %3725 = vdwg.mxu0
    %3726 = vmatprep.subr.bf16.mxu0 %v3284
    %3727 = vmatpush1.bf16.msra.mxu0 %v3283
    %3728 = vmatprep.subr.bf16.mxu0 %v3288
    %3729 = vmatpush1.bf16.msra.mxu0 %v3287
    %3730 = vmatprep.subr.bf16.mxu0 %v3292
    %3731 = vmatpush1.bf16.msra.mxu0 %v3291
    %3732 = vmatprep.subr.bf16.mxu0 %v3296
    %3733 = vmatpush1.bf16.msra.mxu0 %v3295
    %3734 = vmatprep.subr.bf16.mxu0 %v3300
    %3735 = vmatpush1.bf16.msra.mxu0 %v3299
    %3736 = vmatprep.subr.bf16.mxu0 %v3304
    %3737 = vmatpush1.bf16.msra.mxu0 %v3303
    %3738 = vmatprep.subr.bf16.mxu0 %v3308
    %3739 = vmatpush1.bf16.msra.mxu0 %v3307
    %3740 = vmatprep.subr.bf16.mxu0 %v3312
    %3741 = vmatpush1.bf16.msra.mxu0 %v3311
    %3742 = vmatprep.subr.bf16.mxu0 %v3316
    %3743 = vmatpush1.bf16.msra.mxu0 %v3315
    %3744 = vmatprep.subr.bf16.mxu0 %v3320
    %3745 = vmatpush1.bf16.msra.mxu0 %v3319
    %3746 = vmatprep.subr.bf16.mxu0 %v3324
    %3747 = vmatpush1.bf16.msra.mxu0 %v3323
    %3748 = vmatprep.subr.bf16.mxu0 %v3328
    %3749 = vmatpush1.bf16.msra.mxu0 %v3327
    %3750 = vmatprep.subr.bf16.mxu0 %v3332
    %3751 = vmatpush1.bf16.msra.mxu0 %v3331
    %3752 = vmatprep.subr.bf16.mxu0 %v3336
    %3753 = vmatpush1.bf16.msra.mxu0 %v3335
    %3754 = vmatprep.subr.bf16.mxu0 %v3340
    %3755 = vmatpush1.bf16.msra.mxu0 %v3339
    %3756 = vmatprep.subr.bf16.mxu0 %v3344
    %3757 = vmatpush1.bf16.msra.mxu0 %v3343
    %3758 = vmatprep.mubr.bf16.mxu0 %v2044
    %3759 = vmatmul.mubr.bf16.gmra.mrb[0].mxu0 %v2043
    %v3760 = vpop.f32.mrb[0].mxu0
    %v3761 = vadd.f32 %v3720, %v3760
    %v3762 = vpop.f32.mrb[0].mxu0
    %v3763 = vadd.f32 %v3722, %v3762
    %v3764 = vpop.f32.mrb[0].mxu0
    %v3765 = vpop.f32.mrb[0].mxu0
    %3766 = vdwg.mxu0
    %3767 = vmatprep.subr.bf16.mxu0 %v3094
    %3768 = vmatpush1.bf16.msra.mxu0 %v3093
    %3769 = vmatprep.subr.bf16.mxu0 %v3098
    %3770 = vmatpush1.bf16.msra.mxu0 %v3097
    %3771 = vmatprep.subr.bf16.mxu0 %v3102
    %3772 = vmatpush1.bf16.msra.mxu0 %v3101
    %3773 = vmatprep.subr.bf16.mxu0 %v3106
    %3774 = vmatpush1.bf16.msra.mxu0 %v3105
    %3775 = vmatprep.subr.bf16.mxu0 %v3110
    %3776 = vmatpush1.bf16.msra.mxu0 %v3109
    %3777 = vmatprep.subr.bf16.mxu0 %v3114
    %3778 = vmatpush1.bf16.msra.mxu0 %v3113
    %3779 = vmatprep.subr.bf16.mxu0 %v3118
    %3780 = vmatpush1.bf16.msra.mxu0 %v3117
    %3781 = vmatprep.subr.bf16.mxu0 %v3122
    %3782 = vmatpush1.bf16.msra.mxu0 %v3121
    %3783 = vmatprep.subr.bf16.mxu0 %v3126
    %3784 = vmatpush1.bf16.msra.mxu0 %v3125
    %3785 = vmatprep.subr.bf16.mxu0 %v3130
    %3786 = vmatpush1.bf16.msra.mxu0 %v3129
    %3787 = vmatprep.subr.bf16.mxu0 %v3134
    %3788 = vmatpush1.bf16.msra.mxu0 %v3133
    %3789 = vmatprep.subr.bf16.mxu0 %v3138
    %3790 = vmatpush1.bf16.msra.mxu0 %v3137
    %3791 = vmatprep.subr.bf16.mxu0 %v3142
    %3792 = vmatpush1.bf16.msra.mxu0 %v3141
    %3793 = vmatprep.subr.bf16.mxu0 %v3146
    %3794 = vmatpush1.bf16.msra.mxu0 %v3145
    %3795 = vmatprep.subr.bf16.mxu0 %v3150
    %3796 = vmatpush1.bf16.msra.mxu0 %v3149
    %3797 = vmatprep.subr.bf16.mxu0 %v3154
    %3798 = vmatpush1.bf16.msra.mxu0 %v3153
    %3799 = vmatprep.mubr.bf16.mxu0 %v2038
    %3800 = vmatmul.mubr.bf16.gmra.mrb[0].mxu0 %v2037
    %v3801 = vpop.f32.mrb[0].mxu0
    %v3802 = vadd.f32 %v2314, %v3801
    %v3803 = vpop.f32.mrb[0].mxu0
    %v3804 = vadd.f32 %v2318, %v3803
    %v3805 = vpop.f32.mrb[0].mxu0
    %v3806 = vpop.f32.mrb[0].mxu0
    %3807 = vdwg.mxu0
    %3808 = vmatprep.subr.bf16.mxu0 %v3158
    %3809 = vmatpush1.bf16.msra.mxu0 %v3157
    %3810 = vmatprep.subr.bf16.mxu0 %v3162
    %3811 = vmatpush1.bf16.msra.mxu0 %v3161
    %3812 = vmatprep.subr.bf16.mxu0 %v3166
    %3813 = vmatpush1.bf16.msra.mxu0 %v3165
    %3814 = vmatprep.subr.bf16.mxu0 %v3170
    %3815 = vmatpush1.bf16.msra.mxu0 %v3169
    %3816 = vmatprep.subr.bf16.mxu0 %v3174
    %3817 = vmatpush1.bf16.msra.mxu0 %v3173
    %3818 = vmatprep.subr.bf16.mxu0 %v3178
    %3819 = vmatpush1.bf16.msra.mxu0 %v3177
    %3820 = vmatprep.subr.bf16.mxu0 %v3182
    %3821 = vmatpush1.bf16.msra.mxu0 %v3181
    %3822 = vmatprep.subr.bf16.mxu0 %v3186
    %3823 = vmatpush1.bf16.msra.mxu0 %v3185
    %3824 = vmatprep.subr.bf16.mxu0 %v3190
    %3825 = vmatpush1.bf16.msra.mxu0 %v3189
    %3826 = vmatprep.subr.bf16.mxu0 %v3194
    %3827 = vmatpush1.bf16.msra.mxu0 %v3193
    %3828 = vmatprep.subr.bf16.mxu0 %v3198
    %3829 = vmatpush1.bf16.msra.mxu0 %v3197
    %3830 = vmatprep.subr.bf16.mxu0 %v3202
    %3831 = vmatpush1.bf16.msra.mxu0 %v3201
    %3832 = vmatprep.subr.bf16.mxu0 %v3206
    %3833 = vmatpush1.bf16.msra.mxu0 %v3205
    %3834 = vmatprep.subr.bf16.mxu0 %v3210
    %3835 = vmatpush1.bf16.msra.mxu0 %v3209
    %3836 = vmatprep.subr.bf16.mxu0 %v3214
    %3837 = vmatpush1.bf16.msra.mxu0 %v3213
    %3838 = vmatprep.subr.bf16.mxu0 %v3218
    %3839 = vmatpush1.bf16.msra.mxu0 %v3217
    %3840 = vmatprep.mubr.bf16.mxu0 %v2040
    %3841 = vmatmul.mubr.bf16.gmra.mrb[0].mxu0 %v2039
    %v3842 = vpop.f32.mrb[0].mxu0
    %v3843 = vadd.f32 %v3802, %v3842
    %v3844 = vpop.f32.mrb[0].mxu0
    %v3845 = vadd.f32 %v3804, %v3844
    %v3846 = vpop.f32.mrb[0].mxu0
    %v3847 = vpop.f32.mrb[0].mxu0
    %3848 = vdwg.mxu0
    %3849 = vmatprep.subr.bf16.mxu0 %v3222
    %3850 = vmatpush1.bf16.msra.mxu0 %v3221
    %3851 = vmatprep.subr.bf16.mxu0 %v3226
    %3852 = vmatpush1.bf16.msra.mxu0 %v3225
    %3853 = vmatprep.subr.bf16.mxu0 %v3230
    %3854 = vmatpush1.bf16.msra.mxu0 %v3229
    %3855 = vmatprep.subr.bf16.mxu0 %v3234
    %3856 = vmatpush1.bf16.msra.mxu0 %v3233
    %3857 = vmatprep.subr.bf16.mxu0 %v3238
    %3858 = vmatpush1.bf16.msra.mxu0 %v3237
    %3859 = vmatprep.subr.bf16.mxu0 %v3242
    %3860 = vmatpush1.bf16.msra.mxu0 %v3241
    %3861 = vmatprep.subr.bf16.mxu0 %v3246
    %3862 = vmatpush1.bf16.msra.mxu0 %v3245
    %3863 = vmatprep.subr.bf16.mxu0 %v3250
    %3864 = vmatpush1.bf16.msra.mxu0 %v3249
    %3865 = vmatprep.subr.bf16.mxu0 %v3254
    %3866 = vmatpush1.bf16.msra.mxu0 %v3253
    %3867 = vmatprep.subr.bf16.mxu0 %v3258
    %3868 = vmatpush1.bf16.msra.mxu0 %v3257
    %3869 = vmatprep.subr.bf16.mxu0 %v3262
    %3870 = vmatpush1.bf16.msra.mxu0 %v3261
    %3871 = vmatprep.subr.bf16.mxu0 %v3266
    %3872 = vmatpush1.bf16.msra.mxu0 %v3265
    %3873 = vmatprep.subr.bf16.mxu0 %v3270
    %3874 = vmatpush1.bf16.msra.mxu0 %v3269
    %3875 = vmatprep.subr.bf16.mxu0 %v3274
    %3876 = vmatpush1.bf16.msra.mxu0 %v3273
    %3877 = vmatprep.subr.bf16.mxu0 %v3278
    %3878 = vmatpush1.bf16.msra.mxu0 %v3277
    %3879 = vmatprep.subr.bf16.mxu0 %v3282
    %3880 = vmatpush1.bf16.msra.mxu0 %v3281
    %3881 = vmatprep.mubr.bf16.mxu0 %v2042
    %3882 = vmatmul.mubr.bf16.gmra.mrb[0].mxu0 %v2041
    %v3883 = vpop.f32.mrb[0].mxu0
    %v3884 = vadd.f32 %v3843, %v3883
    %v3885 = vpop.f32.mrb[0].mxu0
    %v3886 = vadd.f32 %v3845, %v3885
    %v3887 = vpop.f32.mrb[0].mxu0
    %v3888 = vpop.f32.mrb[0].mxu0
    %3889 = vdwg.mxu0
    %3890 = vmatprep.subr.bf16.mxu0 %v3286
    %3891 = vmatpush1.bf16.msra.mxu0 %v3285
    %3892 = vmatprep.subr.bf16.mxu0 %v3290
    %3893 = vmatpush1.bf16.msra.mxu0 %v3289
    %3894 = vmatprep.subr.bf16.mxu0 %v3294
    %3895 = vmatpush1.bf16.msra.mxu0 %v3293
    %3896 = vmatprep.subr.bf16.mxu0 %v3298
    %3897 = vmatpush1.bf16.msra.mxu0 %v3297
    %3898 = vmatprep.subr.bf16.mxu0 %v3302
    %3899 = vmatpush1.bf16.msra.mxu0 %v3301
    %3900 = vmatprep.subr.bf16.mxu0 %v3306
    %3901 = vmatpush1.bf16.msra.mxu0 %v3305
    %3902 = vmatprep.subr.bf16.mxu0 %v3310
    %3903 = vmatpush1.bf16.msra.mxu0 %v3309
    %3904 = vmatprep.subr.bf16.mxu0 %v3314
    %3905 = vmatpush1.bf16.msra.mxu0 %v3313
    %3906 = vmatprep.subr.bf16.mxu0 %v3318
    %3907 = vmatpush1.bf16.msra.mxu0 %v3317
    %3908 = vmatprep.subr.bf16.mxu0 %v3322
    %3909 = vmatpush1.bf16.msra.mxu0 %v3321
    %3910 = vmatprep.subr.bf16.mxu0 %v3326
    %3911 = vmatpush1.bf16.msra.mxu0 %v3325
    %3912 = vmatprep.subr.bf16.mxu0 %v3330
    %3913 = vmatpush1.bf16.msra.mxu0 %v3329
    %3914 = vmatprep.subr.bf16.mxu0 %v3334
    %3915 = vmatpush1.bf16.msra.mxu0 %v3333
    %3916 = vmatprep.subr.bf16.mxu0 %v3338
    %3917 = vmatpush1.bf16.msra.mxu0 %v3337
    %3918 = vmatprep.subr.bf16.mxu0 %v3342
    %3919 = vmatpush1.bf16.msra.mxu0 %v3341
    %3920 = vmatprep.subr.bf16.mxu0 %v3346
    %3921 = vmatpush1.bf16.msra.mxu0 %v3345
    %3922 = vmatprep.mubr.bf16.mxu0 %v2044
    %3923 = vmatmul.mubr.bf16.gmra.mrb[0].mxu0 %v2043
    %v3924 = vpop.f32.mrb[0].mxu0
    %v3925 = vadd.f32 %v3884, %v3924
    %v3926 = vpop.f32.mrb[0].mxu0
    %v3927 = vadd.f32 %v3886, %v3926
    %v3928 = vpop.f32.mrb[0].mxu0
    %v3929 = vpop.f32.mrb[0].mxu0
    %3930 = vdwg.mxu0
    %v3931 = vmax.f32 %v3761, 0.0
    %v3932 = vmax.f32 %v3763, 0.0
    %v3933 = vmax.f32 %v3925, 0.0
    %v3934 = vmax.f32 %v3927, 0.0
    %v3935 = vpack.c.bf16 %v3931, %v3931
    %v3936 = vpack.c.bf16 %v3932, %v3932
    %v3937 = vpack.c.bf16 %v3933, %v3933
    %v3938 = vpack.c.bf16 %v3934, %v3934
    %v3939 = vld [vmem:[#allocation11] sm:$0xf]
    %v3940 = vld [vmem:[#allocation11 + $0x4] sm:$0xf]
    %v3941 = vld [vmem:[#allocation11 + $0x8] sm:$0xf]
    %v3942 = vld [vmem:[#allocation11 + $0xc] sm:$0xf]
    %v3943 = vld [vmem:[#allocation11 + $0x10] sm:$0xf]
    %v3944 = vld [vmem:[#allocation11 + $0x14] sm:$0xf]
    %v3945 = vld [vmem:[#allocation11 + $0x18] sm:$0xf]
    %v3946 = vld [vmem:[#allocation11 + $0x1c] sm:$0xf]
    %v3947 = vld [vmem:[#allocation11 + $0x20] sm:$0xf]
    %v3948 = vld [vmem:[#allocation11 + $0x24] sm:$0xf]
    %v3949 = vld [vmem:[#allocation11 + $0x28] sm:$0xf]
    %v3950 = vld [vmem:[#allocation11 + $0x2c] sm:$0xf]
    %v3951 = vld [vmem:[#allocation11 + $0x30] sm:$0xf]
    %v3952 = vld [vmem:[#allocation11 + $0x34] sm:$0xf]
    %v3953 = vld [vmem:[#allocation11 + $0x38] sm:$0xf]
    %v3954 = vld [vmem:[#allocation11 + $0x3c] sm:$0xf]
    %v3955 = vld [vmem:[#allocation11 + $0x40] sm:$0xf]
    %v3956 = vld [vmem:[#allocation11 + $0x44] sm:$0xf]
    %v3957 = vld [vmem:[#allocation11 + $0x48] sm:$0xf]
    %v3958 = vld [vmem:[#allocation11 + $0x4c] sm:$0xf]
    %v3959 = vld [vmem:[#allocation11 + $0x50] sm:$0xf]
    %v3960 = vld [vmem:[#allocation11 + $0x54] sm:$0xf]
    %v3961 = vld [vmem:[#allocation11 + $0x58] sm:$0xf]
    %v3962 = vld [vmem:[#allocation11 + $0x5c] sm:$0xf]
    %v3963 = vld [vmem:[#allocation11 + $0x60] sm:$0xf]
    %v3964 = vld [vmem:[#allocation11 + $0x64] sm:$0xf]
    %v3965 = vld [vmem:[#allocation11 + $0x68] sm:$0xf]
    %v3966 = vld [vmem:[#allocation11 + $0x6c] sm:$0xf]
    %v3967 = vld [vmem:[#allocation11 + $0x70] sm:$0xf]
    %v3968 = vld [vmem:[#allocation11 + $0x74] sm:$0xf]
    %v3969 = vld [vmem:[#allocation11 + $0x78] sm:$0xf]
    %v3970 = vld [vmem:[#allocation11 + $0x7c] sm:$0xf]
    %v3971 = vld [vmem:[#allocation11 + $0x80] sm:$0xf]
    %v3972 = vld [vmem:[#allocation11 + $0x84] sm:$0xf]
    %v3973 = vld [vmem:[#allocation11 + $0x88] sm:$0xf]
    %v3974 = vld [vmem:[#allocation11 + $0x8c] sm:$0xf]
    %v3975 = vld [vmem:[#allocation11 + $0x90] sm:$0xf]
    %v3976 = vld [vmem:[#allocation11 + $0x94] sm:$0xf]
    %v3977 = vld [vmem:[#allocation11 + $0x98] sm:$0xf]
    %v3978 = vld [vmem:[#allocation11 + $0x9c] sm:$0xf]
    %v3979 = vld [vmem:[#allocation11 + $0xa0] sm:$0xf]
    %v3980 = vld [vmem:[#allocation11 + $0xa4] sm:$0xf]
    %v3981 = vld [vmem:[#allocation11 + $0xa8] sm:$0xf]
    %v3982 = vld [vmem:[#allocation11 + $0xac] sm:$0xf]
    %v3983 = vld [vmem:[#allocation11 + $0xb0] sm:$0xf]
    %v3984 = vld [vmem:[#allocation11 + $0xb4] sm:$0xf]
    %v3985 = vld [vmem:[#allocation11 + $0xb8] sm:$0xf]
    %v3986 = vld [vmem:[#allocation11 + $0xbc] sm:$0xf]
    %v3987 = vld [vmem:[#allocation11 + $0xc0] sm:$0xf]
    %v3988 = vld [vmem:[#allocation11 + $0xc4] sm:$0xf]
    %v3989 = vld [vmem:[#allocation11 + $0xc8] sm:$0xf]
    %v3990 = vld [vmem:[#allocation11 + $0xcc] sm:$0xf]
    %v3991 = vld [vmem:[#allocation11 + $0xd0] sm:$0xf]
    %v3992 = vld [vmem:[#allocation11 + $0xd4] sm:$0xf]
    %v3993 = vld [vmem:[#allocation11 + $0xd8] sm:$0xf]
    %v3994 = vld [vmem:[#allocation11 + $0xdc] sm:$0xf]
    %v3995 = vld [vmem:[#allocation11 + $0xe0] sm:$0xf]
    %v3996 = vld [vmem:[#allocation11 + $0xe4] sm:$0xf]
    %v3997 = vld [vmem:[#allocation11 + $0xe8] sm:$0xf]
    %v3998 = vld [vmem:[#allocation11 + $0xec] sm:$0xf]
    %v3999 = vld [vmem:[#allocation11 + $0xf0] sm:$0xf]
    %v4000 = vld [vmem:[#allocation11 + $0xf4] sm:$0xf]
    %v4001 = vld [vmem:[#allocation11 + $0xf8] sm:$0xf]
    %v4002 = vld [vmem:[#allocation11 + $0xfc] sm:$0xf]
    %v4003 = vld [vmem:[#allocation13] sm:$0x1]
    %v4005 = vlaneseq
    %v4006 = vshrl.u32 %v4005, 7
    %v4007 = vsub.s32 0, %v4006
    %v4008 = vrot.slane %v4003, %v4007
    %v4074 = vunpack.c.l.b16 %v3939
    %v4075 = vunpack.c.l.b16 %v3940
    %v4076 = vunpack.c.l.b16 %v3941
    %v4077 = vunpack.c.l.b16 %v3942
    %v4078 = vunpack.c.l.b16 %v3943
    %v4079 = vunpack.c.l.b16 %v3944
    %v4080 = vunpack.c.l.b16 %v3945
    %v4081 = vunpack.c.l.b16 %v3946
    %v4082 = vunpack.c.l.b16 %v3947
    %v4083 = vunpack.c.l.b16 %v3948
    %v4084 = vunpack.c.l.b16 %v3949
    %v4085 = vunpack.c.l.b16 %v3950
    %v4086 = vunpack.c.l.b16 %v3951
    %v4087 = vunpack.c.l.b16 %v3952
    %v4088 = vunpack.c.l.b16 %v3953
    %v4089 = vunpack.c.l.b16 %v3954
    %v4090 = vunpack.c.l.b16 %v3955
    %v4091 = vunpack.c.l.b16 %v3956
    %v4092 = vunpack.c.l.b16 %v3957
    %v4093 = vunpack.c.l.b16 %v3958
    %v4094 = vunpack.c.l.b16 %v3959
    %v4095 = vunpack.c.l.b16 %v3960
    %v4096 = vunpack.c.l.b16 %v3961
    %v4097 = vunpack.c.l.b16 %v3962
    %v4098 = vunpack.c.l.b16 %v3963
    %v4099 = vunpack.c.l.b16 %v3964
    %v4100 = vunpack.c.l.b16 %v3965
    %v4101 = vunpack.c.l.b16 %v3966
    %v4102 = vunpack.c.l.b16 %v3967
    %v4103 = vunpack.c.l.b16 %v3968
    %v4104 = vunpack.c.l.b16 %v3969
    %v4105 = vunpack.c.l.b16 %v3970
    %v4106 = vunpack.c.l.b16 %v3971
    %v4107 = vunpack.c.l.b16 %v3972
    %v4108 = vunpack.c.l.b16 %v3973
    %v4109 = vunpack.c.l.b16 %v3974
    %v4110 = vunpack.c.l.b16 %v3975
    %v4111 = vunpack.c.l.b16 %v3976
    %v4112 = vunpack.c.l.b16 %v3977
    %v4113 = vunpack.c.l.b16 %v3978
    %v4114 = vunpack.c.l.b16 %v3979
    %v4115 = vunpack.c.l.b16 %v3980
    %v4116 = vunpack.c.l.b16 %v3981
    %v4117 = vunpack.c.l.b16 %v3982
    %v4118 = vunpack.c.l.b16 %v3983
    %v4119 = vunpack.c.l.b16 %v3984
    %v4120 = vunpack.c.l.b16 %v3985
    %v4121 = vunpack.c.l.b16 %v3986
    %v4122 = vunpack.c.l.b16 %v3987
    %v4123 = vunpack.c.l.b16 %v3988
    %v4124 = vunpack.c.l.b16 %v3989
    %v4125 = vunpack.c.l.b16 %v3990
    %v4126 = vunpack.c.l.b16 %v3991
    %v4127 = vunpack.c.l.b16 %v3992
    %v4128 = vunpack.c.l.b16 %v3993
    %v4129 = vunpack.c.l.b16 %v3994
    %v4130 = vunpack.c.l.b16 %v3995
    %v4131 = vunpack.c.l.b16 %v3996
    %v4132 = vunpack.c.l.b16 %v3997
    %v4133 = vunpack.c.l.b16 %v3998
    %v4134 = vunpack.c.l.b16 %v3999
    %v4135 = vunpack.c.l.b16 %v4000
    %v4136 = vunpack.c.l.b16 %v4001
    %v4137 = vunpack.c.l.b16 %v4002
    %v4138 = vpack.c.b16 %v4075, %v4074
    %v4139 = vpack.c.b16 %v4077, %v4076
    %v4140 = vpack.c.b16 %v4079, %v4078
    %v4141 = vpack.c.b16 %v4081, %v4080
    %v4142 = vpack.c.b16 %v4083, %v4082
    %v4143 = vpack.c.b16 %v4085, %v4084
    %v4144 = vpack.c.b16 %v4087, %v4086
    %v4145 = vpack.c.b16 %v4089, %v4088
    %v4146 = vpack.c.b16 %v4091, %v4090
    %v4147 = vpack.c.b16 %v4093, %v4092
    %v4148 = vpack.c.b16 %v4095, %v4094
    %v4149 = vpack.c.b16 %v4097, %v4096
    %v4150 = vpack.c.b16 %v4099, %v4098
    %v4151 = vpack.c.b16 %v4101, %v4100
    %v4152 = vpack.c.b16 %v4103, %v4102
    %v4153 = vpack.c.b16 %v4105, %v4104
    %v4154 = vpack.c.b16 %v4107, %v4106
    %v4155 = vpack.c.b16 %v4109, %v4108
    %v4156 = vpack.c.b16 %v4111, %v4110
    %v4157 = vpack.c.b16 %v4113, %v4112
    %v4158 = vpack.c.b16 %v4115, %v4114
    %v4159 = vpack.c.b16 %v4117, %v4116
    %v4160 = vpack.c.b16 %v4119, %v4118
    %v4161 = vpack.c.b16 %v4121, %v4120
    %v4162 = vpack.c.b16 %v4123, %v4122
    %v4163 = vpack.c.b16 %v4125, %v4124
    %v4164 = vpack.c.b16 %v4127, %v4126
    %v4165 = vpack.c.b16 %v4129, %v4128
    %v4166 = vpack.c.b16 %v4131, %v4130
    %v4167 = vpack.c.b16 %v4133, %v4132
    %v4168 = vpack.c.b16 %v4135, %v4134
    %v4169 = vpack.c.b16 %v4137, %v4136
    %4202 = vmatprep.subr.bf16.mxu0 0
    %4203 = vmatpush1.bf16.msra.mxu0 %v4138
    %4204 = vmatprep.subr.bf16.mxu0 0
    %4205 = vmatpush1.bf16.msra.mxu0 %v4139
    %4206 = vmatprep.subr.bf16.mxu0 0
    %4207 = vmatpush1.bf16.msra.mxu0 %v4140
    %4208 = vmatprep.subr.bf16.mxu0 0
    %4209 = vmatpush1.bf16.msra.mxu0 %v4141
    %4210 = vmatprep.subr.bf16.mxu0 0
    %4211 = vmatpush1.bf16.msra.mxu0 %v4142
    %4212 = vmatprep.subr.bf16.mxu0 0
    %4213 = vmatpush1.bf16.msra.mxu0 %v4143
    %4214 = vmatprep.subr.bf16.mxu0 0
    %4215 = vmatpush1.bf16.msra.mxu0 %v4144
    %4216 = vmatprep.subr.bf16.mxu0 0
    %4217 = vmatpush1.bf16.msra.mxu0 %v4145
    %4218 = vmatprep.subr.bf16.mxu0 0
    %4219 = vmatpush1.bf16.msra.mxu0 %v4146
    %4220 = vmatprep.subr.bf16.mxu0 0
    %4221 = vmatpush1.bf16.msra.mxu0 %v4147
    %4222 = vmatprep.subr.bf16.mxu0 0
    %4223 = vmatpush1.bf16.msra.mxu0 %v4148
    %4224 = vmatprep.subr.bf16.mxu0 0
    %4225 = vmatpush1.bf16.msra.mxu0 %v4149
    %4226 = vmatprep.subr.bf16.mxu0 0
    %4227 = vmatpush1.bf16.msra.mxu0 %v4150
    %4228 = vmatprep.subr.bf16.mxu0 0
    %4229 = vmatpush1.bf16.msra.mxu0 %v4151
    %4230 = vmatprep.subr.bf16.mxu0 0
    %4231 = vmatpush1.bf16.msra.mxu0 %v4152
    %4232 = vmatprep.subr.bf16.mxu0 0
    %4233 = vmatpush1.bf16.msra.mxu0 %v4153
    %4234 = vmatprep.mubr.bf16.mxu0 %v3936
    %4235 = vmatmul.mubr.bf16.gmra.mrb[0].mxu0 %v3935
    %v4236 = vpop.f32.mrb[0].mxu0
    %v4237 = vadd.f32 %v4008, %v4236
    %v4238 = vpop.f32.mrb[0].mxu0
    %v4239 = vpop.f32.mrb[0].mxu0
    %v4240 = vpop.f32.mrb[0].mxu0
    %4241 = vdwg.mxu0
    %4242 = vmatprep.subr.bf16.mxu0 0
    %4243 = vmatpush1.bf16.msra.mxu0 %v4154
    %4244 = vmatprep.subr.bf16.mxu0 0
    %4245 = vmatpush1.bf16.msra.mxu0 %v4155
    %4246 = vmatprep.subr.bf16.mxu0 0
    %4247 = vmatpush1.bf16.msra.mxu0 %v4156
    %4248 = vmatprep.subr.bf16.mxu0 0
    %4249 = vmatpush1.bf16.msra.mxu0 %v4157
    %4250 = vmatprep.subr.bf16.mxu0 0
    %4251 = vmatpush1.bf16.msra.mxu0 %v4158
    %4252 = vmatprep.subr.bf16.mxu0 0
    %4253 = vmatpush1.bf16.msra.mxu0 %v4159
    %4254 = vmatprep.subr.bf16.mxu0 0
    %4255 = vmatpush1.bf16.msra.mxu0 %v4160
    %4256 = vmatprep.subr.bf16.mxu0 0
    %4257 = vmatpush1.bf16.msra.mxu0 %v4161
    %4258 = vmatprep.subr.bf16.mxu0 0
    %4259 = vmatpush1.bf16.msra.mxu0 %v4162
    %4260 = vmatprep.subr.bf16.mxu0 0
    %4261 = vmatpush1.bf16.msra.mxu0 %v4163
    %4262 = vmatprep.subr.bf16.mxu0 0
    %4263 = vmatpush1.bf16.msra.mxu0 %v4164
    %4264 = vmatprep.subr.bf16.mxu0 0
    %4265 = vmatpush1.bf16.msra.mxu0 %v4165
    %4266 = vmatprep.subr.bf16.mxu0 0
    %4267 = vmatpush1.bf16.msra.mxu0 %v4166
    %4268 = vmatprep.subr.bf16.mxu0 0
    %4269 = vmatpush1.bf16.msra.mxu0 %v4167
    %4270 = vmatprep.subr.bf16.mxu0 0
    %4271 = vmatpush1.bf16.msra.mxu0 %v4168
    %4272 = vmatprep.subr.bf16.mxu0 0
    %4273 = vmatpush1.bf16.msra.mxu0 %v4169
    %4274 = vmatprep.mubr.bf16.mxu0 %v3938
    %4275 = vmatmul.mubr.bf16.gmra.mrb[0].mxu0 %v3937
    %v4276 = vpop.f32.mrb[0].mxu0
    %v4277 = vadd.f32 %v4237, %v4276
    %v4278 = vpop.f32.mrb[0].mxu0
    %v4279 = vpop.f32.mrb[0].mxu0
    %v4280 = vpop.f32.mrb[0].mxu0
    %4281 = vdwg.mxu0
    %4282 = vst [vmem:[#allocation14] sm:$0xff] %v4277
    // Predicated region
    $region58: #{tpu_custom_call.1} parent=1 // pred_check
      _
    $region59: #{tpu_custom_call.1} parent=1 // pred_check_branch
      %4284 = sbr.rel (0) target = $region61
    $region60: #{tpu_custom_call.1} parent=1 // pred_region
      %s4286 = ssub.s32 128, 128
      %4287 = vsyncadd [#allocation4], %s4286
      %s4289 = sshll.u32 [#allocation14], 4
      %s4290 = int_to_ptr.vmem [resolvable:$true] %s4289
      %4292 = dma.vmem_to_hbm [thread:$0]  %s4290, 128, %s7, [#allocation4]
    $region61: #{tpu_custom_call.1} parent=1 // pred_fallthru
      _
    // Predicated region
    $region62: #{tpu_custom_call.1} parent=1 // pred_check
      _
    $region63: #{tpu_custom_call.1} parent=1 // pred_check_branch
      %4294 = sbr.rel (0) target = $region65
    $region64: #{tpu_custom_call.1} parent=1 // pred_region
      %4295 = dma.done [#allocation4], 128
    $region65: #{tpu_custom_call.1} parent=1 // pred_fallthru
      _
    %4296 = vsyncpa [#allocation3], 1
    %4297 = vsyncpa [#allocation6], 1
    %4298 = vsyncpa [#allocation9], 1
    %4299 = vsyncpa [#allocation12], 1
    %4300 = vsyncpa [#allocation4], 1

</llo_original>
